<compile_context>
chip_gen: v7x
topology: tpu7x:2x2x1
jax: 0.10.0
libtpu: 0.0.40
codegen_flags: <defaults>
</compile_context>

<pallas_src>
import functools
import math

import jax
import jax.numpy as jnp
from jax.experimental import pallas as pl
from jax.experimental.pallas import tpu as pltpu

H = 768            # RoBERTa hidden dim (hardcoded in the module)
D = 32             # question/head embedding dim (ComplEx: 16 real + 16 imag)
HALF = D // 2
N = 128            # number of tail entities (num answer classes)
LABEL_SMOOTHING = 0.1


def kgqa_kernel(cls_ref, w1_ref, w2_ref, w3_ref, w4_ref, bias_ref,
                head_ref, tails_ref, target_ref, out_ref,
                *, label_smoothing, one_hot_targets):
    f32 = jnp.float32
    bf16 = jnp.bfloat16
    ls = label_smoothing

    # --- biases, packed into one buffer (one DMA descriptor instead of five) ---
    b1 = bias_ref[0:1, :256]
    b2 = bias_ref[1:2, :128]
    b3 = bias_ref[2:3, :64]
    b4 = bias_ref[3:4, :2 * D]

    # --- linear stack 768 -> 256 -> 128 -> 64 -> [32 | 32] (bf16 MXU, f32 acc) ---
    x = cls_ref[...]                                                          # bf16 [TB, H]
    h = jnp.maximum(jnp.dot(x, w1_ref[...], preferred_element_type=f32) + b1, 0.0)
    h = jnp.maximum(jnp.dot(h.astype(bf16), w2_ref[...], preferred_element_type=f32) + b2, 0.0)
    h = jnp.maximum(jnp.dot(h.astype(bf16), w3_ref[...], preferred_element_type=f32) + b3, 0.0)
    # qq = [q | q_swap] = [re_r | im_r | im_r | re_r] via the column-permuted w4 copy
    qq = jnp.dot(h.astype(bf16), w4_ref[...], preferred_element_type=f32) + b4  # f32 [TB, 64]

    # --- ComplEx scoring: one elementwise mul + one [TB,64]x[64,N] matmul ------
    # head_ref = [head | head] (pre-duplicated upstream), tails folded so that
    # uv @ T == (re_h*re_r - im_h*im_r)@re_t.T + (re_h*im_r + im_h*re_r)@im_t.T
    uv = (head_ref[...] * qq).astype(bf16)                                    # [TB, 64]
    scores = jnp.dot(uv, tails_ref[...], preferred_element_type=f32)          # f32 [TB, N]

    # --- log_softmax pieces --------------------------------------------------
    m = jnp.max(scores, axis=1, keepdims=True)
    z = scores - m
    lse = jnp.log(jnp.sum(jnp.exp(z), axis=1, keepdims=True))                 # [TB, 1]

    tgt = target_ref[...]
    n_cls = tgt.shape[1]

    if one_hot_targets:
        # Smoothing affine + L1 normalization folded into constants:
        # rows of (1-ls)*onehot + 1/n sum to (2-ls), so p = a*t + b exactly.
        if ls > 0:
            a = (1.0 - ls) / (2.0 - ls)
            b = (1.0 / n_cls) / (2.0 - ls)
        else:
            a, b = 1.0, 0.0
        p = a * tgt + b
        # per-row KL minus the constant entropy term (added once in the wrapper):
        # sum_j p_j*(log p_j - log_softmax_j) = const + lse - sum_j p_j*z_j
        out_ref[...] = lse - jnp.sum(p * z, axis=1, keepdims=True)            # [TB, 1]
    else:
        # General-distribution fallback (exact module semantics for any target).
        if ls > 0:
            tgt = (1.0 - ls) * tgt + 1.0 / n_cls
        denom = jnp.maximum(jnp.sum(jnp.abs(tgt), axis=1, keepdims=True), 1e-12)
        p = tgt * pl.reciprocal(denom, approx=False)                          # 1 divide/row
        log_sm = z - lse
        plogp = jnp.where(p > 0.0, p * jnp.log(jnp.maximum(p, 1e-30)), 0.0)
        out_ref[...] = jnp.sum(plogp - p * log_sm, axis=1, keepdims=True)     # [TB, 1]


def prepare_params(w1, b1, w2, b2, w3, b3, w4, b4, tail_weight):
    """One-time (init) packing of the frozen parameters for the kernel."""
    bf16 = jnp.bfloat16
    perm = jnp.concatenate([jnp.arange(HALF, D), jnp.arange(0, HALF)])
    # w4 and a column-permuted copy concatenated -> one [64, 64] matmul produces
    # qq = [re_r | im_r | im_r | re_r] with no in-kernel lane relayout.
    w4cat = jnp.concatenate([w4, w4[:, perm]], axis=1).astype(bf16)           # [64, 64]
    bcat = jnp.concatenate([b4.reshape(-1), b4.reshape(-1)[perm]])            # [64]
    # Pack the bias vectors into one buffer -> one DMA descriptor.
    bias = jnp.zeros((4, 256), jnp.float32)
    bias = bias.at[0, :256].set(b1.reshape(-1))
    bias = bias.at[1, :128].set(b2.reshape(-1))
    bias = bias.at[2, :64].set(b3.reshape(-1))
    bias = bias.at[3, :2 * D].set(bcat)
    # Fold the frozen tail table (hoisted transpose + ComplEx re/im structure).
    re_t = tail_weight[:, :HALF]
    im_t = tail_weight[:, HALF:]
    tails = jnp.concatenate([re_t.T, -re_t.T, im_t.T, im_t.T], axis=0).astype(bf16)  # [2D, N]
    return {"w1": w1.astype(bf16), "w2": w2.astype(bf16), "w3": w3.astype(bf16),
            "w4cat": w4cat, "bias": bias, "tails": tails}


def _pick_tb(batch):
    # Batch-adaptive tile (perf review): TB=256 fills the 256-row MXU on v6e/v7x
    # and amortizes the ~0.35us/step overhead, but keep grid >= 2 so a v7x chip
    # can split the "parallel" batch axis across both TensorCores.  Cap at 256
    # for v5e friendliness (single vector-store slot).
    for tb in (256, 128):
        if batch % tb == 0 and batch // tb >= 2:
            return tb
    for tb in (256, 128):
        if batch % tb == 0:
            return tb
    return batch  # ragged batch: one full-batch tile (block == full array)


@functools.partial(jax.jit, static_argnames=("label_smoothing", "one_hot_targets"))
def kgqa_forward(cls_emb, prep, actors, year, target,
                 label_smoothing=LABEL_SMOOTHING, one_hot_targets=True):
    """Scalar KL-divergence training loss (reduction='batchmean')."""
    batch, n_cls = target.shape
    assert prep["tails"].shape[1] == n_cls
    TB = _pick_tb(batch)
    grid = batch // TB

    # head = actors + year, lane-duplicated upstream so the merged scoring
    # matmul needs no in-kernel concat.  (Tiny [B,64] XLA op.)
    head = (actors + year).astype(jnp.float32)
    head2 = jnp.concatenate([head, head], axis=1)                             # [B, 2D]

    kern = functools.partial(kgqa_kernel, label_smoothing=label_smoothing,
                             one_hot_targets=one_hot_targets)
    grid_spec = pltpu.PrefetchScalarGridSpec(
        num_scalar_prefetch=0,
        grid=(grid,),
        in_specs=[
            pl.BlockSpec((TB, H), lambda i: (i, 0)),            # cls embedding (bf16)
            pl.BlockSpec((H, 256), lambda i: (0, 0)),           # w1 (bf16), VMEM-resident
            pl.BlockSpec((256, 128), lambda i: (0, 0)),         # w2 (bf16)
            pl.BlockSpec((128, 64), lambda i: (0, 0)),          # w3 (bf16)
            pl.BlockSpec((2 * D, 2 * D), lambda i: (0, 0)),     # [w4 | w4 col-permuted] (bf16)
            pl.BlockSpec((4, 256), lambda i: (0, 0)),           # packed biases (f32)
            pl.BlockSpec((TB, 2 * D), lambda i: (i, 0)),        # duplicated head (f32)
            pl.BlockSpec((2 * D, n_cls), lambda i: (0, 0)),     # folded tail table (bf16)
            pl.BlockSpec((TB, n_cls), lambda i: (i, 0)),        # target (f32)
        ],
        out_specs=pl.BlockSpec((TB, 1), lambda i: (i, 0)),
    )
    per_row = pl.pallas_call(
        kern,
        out_shape=jax.ShapeDtypeStruct((batch, 1), jnp.float32),
        grid_spec=grid_spec,
        compiler_params=pltpu.CompilerParams(
            dimension_semantics=("parallel",)),
    )(cls_emb, prep["w1"], prep["w2"], prep["w3"], prep["w4cat"],
      prep["bias"], head2, prep["tails"], target)

    loss = jnp.sum(per_row) / batch
    if one_hot_targets:
        # Hoisted constant entropy term sum_j p_j*log p_j (identical per row for
        # one-hot + smoothing targets).
        ls = label_smoothing
        if ls > 0:
            hi = (1.0 - ls + 1.0 / n_cls) / (2.0 - ls)
            lo = (1.0 / n_cls) / (2.0 - ls)
            loss = loss + (hi * math.log(hi) + (n_cls - 1) * lo * math.log(lo))
        # ls == 0: exact one-hot rows have zero entropy -> nothing to add.
    return loss


def kgqa_reference(cls_emb, params, actors, year, tail_weight, target,
                   label_smoothing=LABEL_SMOOTHING):
    """Pure-JAX reference mirroring the original module math (same bf16 params)."""
    f32 = jnp.float32
    bf16 = jnp.bfloat16
    w1, b1, w2, b2, w3, b3, w4, b4 = params
    h = jnp.maximum(jnp.dot(cls_emb, w1, preferred_element_type=f32) + b1, 0.0)
    h = jnp.maximum(jnp.dot(h.astype(bf16), w2, preferred_element_type=f32) + b2, 0.0)
    h = jnp.maximum(jnp.dot(h.astype(bf16), w3, preferred_element_type=f32) + b3, 0.0)
    q = jnp.dot(h.astype(bf16), w4, preferred_element_type=f32) + b4
    head = actors + year
    re_h, im_h = head[:, :HALF], head[:, HALF:]
    re_r, im_r = q[:, :HALF], q[:, HALF:]
    re_s = re_h * re_r - im_h * im_r
    im_s = re_h * im_r + im_h * re_r
    re_t, im_t = tail_weight[:, :HALF], tail_weight[:, HALF:]
    scores = re_s @ re_t.T + im_s @ im_t.T
    n_cls = target.shape[1]
    tgt = (1.0 - label_smoothing) * target + 1.0 / n_cls if label_smoothing > 0 else target
    p = tgt / jnp.maximum(jnp.sum(jnp.abs(tgt), axis=1, keepdims=True), 1e-12)
    log_sm = jax.nn.log_softmax(scores, axis=1)
    plogp = jnp.where(p > 0.0, p * jnp.log(jnp.maximum(p, 1e-30)), 0.0)
    return jnp.sum(plogp - p * log_sm) / cls_emb.shape[0]


if __name__ == "__main__":
    key = jax.random.PRNGKey(0)
    keys = jax.random.split(key, 16)

    def init_linear(kw, kb, fan_in, fan_out):
        w = jax.random.normal(kw, (fan_in, fan_out), jnp.float32) * 0.02
        b = jax.random.normal(kb, (1, fan_out), jnp.float32) * 0.02
        return w, b

    w1, b1 = init_linear(keys[0], keys[1], H, 256)
    w2, b2 = init_linear(keys[2], keys[3], 256, 128)
    w3, b3 = init_linear(keys[4], keys[5], 128, 64)
    w4, b4 = init_linear(keys[6], keys[7], 64, D)

    tail_weight = jax.random.normal(keys[8], (N, D), jnp.float32) * 0.1   # frozen KGE table

    # Parameters stored in bf16 once at init (halves the dominant w1 HBM->VMEM DMA).
    w1b, w2b, w3b, w4b = (w.astype(jnp.bfloat16) for w in (w1, w2, w3, w4))
    prep = prepare_params(w1b, b1, w2b, b2, w3b, b3, w4b, b4, tail_weight)

    BATCH = 512   # -> batch-adaptive TB=256, grid=2 (both v7x TCs busy)
    cls_emb = jax.random.normal(keys[9], (BATCH, H), jnp.float32).astype(jnp.bfloat16)
    actors = jax.random.normal(keys[10], (BATCH, D), jnp.float32) * 0.1
    year = jax.random.normal(keys[11], (BATCH, D), jnp.float32) * 0.1
    answer_ids = jax.random.randint(keys[12], (BATCH,), 0, N)
    target = jax.nn.one_hot(answer_ids, N, dtype=jnp.float32)             # batch['answer']

    ref = kgqa_reference(cls_emb, (w1b, b1, w2b, b2, w3b, b3, w4b, b4),
                         actors, year, tail_weight, target,
                         label_smoothing=LABEL_SMOOTHING)
    ref = jax.block_until_ready(ref)

    # Optimized one-hot training path (constant-folded target math).
    loss_fast = jax.block_until_ready(
        kgqa_forward(cls_emb, prep, actors, year, target,
                     label_smoothing=LABEL_SMOOTHING, one_hot_targets=True))
    # General-distribution fallback path (exact module semantics for any target).
    loss_gen = jax.block_until_ready(
        kgqa_forward(cls_emb, prep, actors, year, target,
                     label_smoothing=LABEL_SMOOTHING, one_hot_targets=False))

    for name, val in (("one_hot", loss_fast), ("general", loss_gen)):
        assert jnp.isfinite(val), f"non-finite {name} loss: {val}"
        assert jnp.allclose(val, ref, rtol=2e-3, atol=5e-4), \
            f"{name} mismatch: {val} vs {ref}"
    print("KERNEL_OK")
</pallas_src>

<mosaic_0001>
module attributes {stable_mosaic.version = 11 : i64} {
  func.func @kgqa_kernel(%arg0: i32, %arg1: memref<256x768xbf16, #tpu.memory_space<vmem>>, %arg2: memref<768x256xbf16, #tpu.memory_space<vmem>>, %arg3: memref<256x128xbf16, #tpu.memory_space<vmem>>, %arg4: memref<128x64xbf16, #tpu.memory_space<vmem>>, %arg5: memref<64x64xbf16, #tpu.memory_space<vmem>>, %arg6: memref<4x256xf32, #tpu.memory_space<vmem>>, %arg7: memref<256x64xf32, #tpu.memory_space<vmem>>, %arg8: memref<64x128xbf16, #tpu.memory_space<vmem>>, %arg9: memref<256x128xf32, #tpu.memory_space<vmem>>, %arg10: memref<256x1xf32, #tpu.memory_space<vmem>>) attributes {dimension_semantics = [#tpu.dimension_semantics<parallel>], iteration_bounds = array<i64: 2>, scalar_prefetch = 0 : i64, scratch_operands = 0 : i64, tpu.core_type = #tpu.core_type<tc>, window_params = [{transform_indices = @transform_0, window_bounds = array<i64: 256, 768>}, {pipeline_mode = #tpu.pipeline_mode<synchronous>, transform_indices = @transform_1, window_bounds = array<i64: 768, 256>}, {pipeline_mode = #tpu.pipeline_mode<synchronous>, transform_indices = @transform_2, window_bounds = array<i64: 256, 128>}, {pipeline_mode = #tpu.pipeline_mode<synchronous>, transform_indices = @transform_3, window_bounds = array<i64: 128, 64>}, {pipeline_mode = #tpu.pipeline_mode<synchronous>, transform_indices = @transform_4, window_bounds = array<i64: 64, 64>}, {pipeline_mode = #tpu.pipeline_mode<synchronous>, transform_indices = @transform_5, window_bounds = array<i64: 4, 256>}, {transform_indices = @transform_6, window_bounds = array<i64: 256, 64>}, {pipeline_mode = #tpu.pipeline_mode<synchronous>, transform_indices = @transform_7, window_bounds = array<i64: 64, 128>}, {transform_indices = @transform_8, window_bounds = array<i64: 256, 128>}, {transform_indices = @transform_9, window_bounds = array<i64: 256, 1>}]} {
    %c0 = arith.constant 0 : index
    %c0_0 = arith.constant 0 : index
    %0 = vector.load %arg6[%c0, %c0_0] : memref<4x256xf32, #tpu.memory_space<vmem>>, vector<1x256xf32>
    %c1 = arith.constant 1 : index
    %c0_1 = arith.constant 0 : index
    %1 = vector.load %arg6[%c1, %c0_1] : memref<4x256xf32, #tpu.memory_space<vmem>>, vector<1x128xf32>
    %c2 = arith.constant 2 : index
    %c0_2 = arith.constant 0 : index
    %2 = vector.load %arg6[%c2, %c0_2] : memref<4x256xf32, #tpu.memory_space<vmem>>, vector<1x64xf32>
    %c3 = arith.constant 3 : index
    %c0_3 = arith.constant 0 : index
    %3 = vector.load %arg6[%c3, %c0_3] : memref<4x256xf32, #tpu.memory_space<vmem>>, vector<1x64xf32>
    %c0_4 = arith.constant 0 : index
    %c0_5 = arith.constant 0 : index
    %4 = vector.load %arg1[%c0_4, %c0_5] : memref<256x768xbf16, #tpu.memory_space<vmem>>, vector<256x768xbf16>
    %c0_6 = arith.constant 0 : index
    %c0_7 = arith.constant 0 : index
    %5 = vector.load %arg2[%c0_6, %c0_7] : memref<768x256xbf16, #tpu.memory_space<vmem>>, vector<768x256xbf16>
    %cst = arith.constant dense<0.000000e+00> : vector<256x256xf32>
    %6 = tpu.matmul %4, %5, %cst {dimension_numbers = #tpu.dot_dimension_numbers<[1], [0], [0], [1], [0, 0, 1, 1], [], []>} : vector<256x768xbf16>, vector<768x256xbf16>, vector<256x256xf32> -> vector<256x256xf32>
    %7 = vector.broadcast %0 : vector<1x256xf32> to vector<256x256xf32>
    %8 = arith.addf %6, %7 : vector<256x256xf32>
    %cst_8 = arith.constant 0.000000e+00 : f32
    %9 = vector.broadcast %cst_8 : f32 to vector<256x256xf32>
    %10 = arith.maximumf %8, %9 : vector<256x256xf32>
    %11 = arith.truncf %10 : vector<256x256xf32> to vector<256x256xbf16>
    %c0_9 = arith.constant 0 : index
    %c0_10 = arith.constant 0 : index
    %12 = vector.load %arg3[%c0_9, %c0_10] : memref<256x128xbf16, #tpu.memory_space<vmem>>, vector<256x128xbf16>
    %cst_11 = arith.constant dense<0.000000e+00> : vector<256x128xf32>
    %13 = tpu.matmul %11, %12, %cst_11 {dimension_numbers = #tpu.dot_dimension_numbers<[1], [0], [0], [1], [0, 0, 1, 1], [], []>} : vector<256x256xbf16>, vector<256x128xbf16>, vector<256x128xf32> -> vector<256x128xf32>
    %14 = vector.broadcast %1 : vector<1x128xf32> to vector<256x128xf32>
    %15 = arith.addf %13, %14 : vector<256x128xf32>
    %cst_12 = arith.constant 0.000000e+00 : f32
    %16 = vector.broadcast %cst_12 : f32 to vector<256x128xf32>
    %17 = arith.maximumf %15, %16 : vector<256x128xf32>
    %18 = arith.truncf %17 : vector<256x128xf32> to vector<256x128xbf16>
    %c0_13 = arith.constant 0 : index
    %c0_14 = arith.constant 0 : index
    %19 = vector.load %arg4[%c0_13, %c0_14] : memref<128x64xbf16, #tpu.memory_space<vmem>>, vector<128x64xbf16>
    %cst_15 = arith.constant dense<0.000000e+00> : vector<256x64xf32>
    %20 = tpu.matmul %18, %19, %cst_15 {dimension_numbers = #tpu.dot_dimension_numbers<[1], [0], [0], [1], [0, 0, 1, 1], [], []>} : vector<256x128xbf16>, vector<128x64xbf16>, vector<256x64xf32> -> vector<256x64xf32>
    %21 = vector.broadcast %2 : vector<1x64xf32> to vector<256x64xf32>
    %22 = arith.addf %20, %21 : vector<256x64xf32>
    %cst_16 = arith.constant 0.000000e+00 : f32
    %23 = vector.broadcast %cst_16 : f32 to vector<256x64xf32>
    %24 = arith.maximumf %22, %23 : vector<256x64xf32>
    %25 = arith.truncf %24 : vector<256x64xf32> to vector<256x64xbf16>
    %c0_17 = arith.constant 0 : index
    %c0_18 = arith.constant 0 : index
    %26 = vector.load %arg5[%c0_17, %c0_18] : memref<64x64xbf16, #tpu.memory_space<vmem>>, vector<64x64xbf16>
    %cst_19 = arith.constant dense<0.000000e+00> : vector<256x64xf32>
    %27 = tpu.matmul %25, %26, %cst_19 {dimension_numbers = #tpu.dot_dimension_numbers<[1], [0], [0], [1], [0, 0, 1, 1], [], []>} : vector<256x64xbf16>, vector<64x64xbf16>, vector<256x64xf32> -> vector<256x64xf32>
    %28 = vector.broadcast %3 : vector<1x64xf32> to vector<256x64xf32>
    %29 = arith.addf %27, %28 : vector<256x64xf32>
    %c0_20 = arith.constant 0 : index
    %c0_21 = arith.constant 0 : index
    %30 = vector.load %arg7[%c0_20, %c0_21] : memref<256x64xf32, #tpu.memory_space<vmem>>, vector<256x64xf32>
    %31 = arith.mulf %30, %29 : vector<256x64xf32>
    %32 = arith.truncf %31 : vector<256x64xf32> to vector<256x64xbf16>
    %c0_22 = arith.constant 0 : index
    %c0_23 = arith.constant 0 : index
    %33 = vector.load %arg8[%c0_22, %c0_23] : memref<64x128xbf16, #tpu.memory_space<vmem>>, vector<64x128xbf16>
    %cst_24 = arith.constant dense<0.000000e+00> : vector<256x128xf32>
    %34 = tpu.matmul %32, %33, %cst_24 {dimension_numbers = #tpu.dot_dimension_numbers<[1], [0], [0], [1], [0, 0, 1, 1], [], []>} : vector<256x64xbf16>, vector<64x128xbf16>, vector<256x128xf32> -> vector<256x128xf32>
    %cst_25 = arith.constant dense<0xFF800000> : vector<256xf32>
    %35 = vector.multi_reduction <maximumf>, %34, %cst_25 [1] : vector<256x128xf32> to vector<256xf32>
    %36 = vector.shape_cast %35 : vector<256xf32> to vector<256x1xf32>
    %37 = vector.broadcast %36 : vector<256x1xf32> to vector<256x128xf32>
    %38 = arith.subf %34, %37 : vector<256x128xf32>
    %39 = math.exp %38 : vector<256x128xf32>
    %cst_26 = arith.constant dense<0.000000e+00> : vector<256xf32>
    %40 = vector.multi_reduction <add>, %39, %cst_26 [1] : vector<256x128xf32> to vector<256xf32>
    %41 = vector.shape_cast %40 : vector<256xf32> to vector<256x1xf32>
    %42 = math.log %41 : vector<256x1xf32>
    %c0_27 = arith.constant 0 : index
    %c0_28 = arith.constant 0 : index
    %43 = vector.load %arg9[%c0_27, %c0_28] : memref<256x128xf32, #tpu.memory_space<vmem>>, vector<256x128xf32>
    %cst_29 = arith.constant 0.473684222 : f32
    %44 = vector.broadcast %cst_29 : f32 to vector<256x128xf32>
    %45 = arith.mulf %44, %43 : vector<256x128xf32>
    %cst_30 = arith.constant 0.00411184225 : f32
    %46 = vector.broadcast %cst_30 : f32 to vector<256x128xf32>
    %47 = arith.addf %45, %46 : vector<256x128xf32>
    %48 = arith.mulf %47, %38 : vector<256x128xf32>
    %cst_31 = arith.constant dense<0.000000e+00> : vector<256xf32>
    %49 = vector.multi_reduction <add>, %48, %cst_31 [1] : vector<256x128xf32> to vector<256xf32>
    %50 = vector.shape_cast %49 : vector<256xf32> to vector<256x1xf32>
    %51 = arith.subf %42, %50 : vector<256x1xf32>
    %c0_32 = arith.constant 0 : index
    %c0_33 = arith.constant 0 : index
    %52 = vector.load %arg10[%c0_32, %c0_33] : memref<256x1xf32, #tpu.memory_space<vmem>>, vector<256x1xf32>
    tpu.vector_store %arg10[%c0_32, %c0_33], %51 {strides = array<i32>} : memref<256x1xf32, #tpu.memory_space<vmem>>, vector<256x1xf32>,
    return
  }
  func.func @transform_0(%arg0: i32) -> (i32, i32) {
    %c0_i32 = arith.constant 0 : i32
    %c0_i32_0 = arith.constant 0 : i32
    return %arg0, %c0_i32 : i32, i32
  }
  func.func @transform_1(%arg0: i32) -> (i32, i32) {
    %c0_i32 = arith.constant 0 : i32
    %c0_i32_0 = arith.constant 0 : i32
    %c0_i32_1 = arith.constant 0 : i32
    return %c0_i32, %c0_i32_0 : i32, i32
  }
  func.func @transform_2(%arg0: i32) -> (i32, i32) {
    %c0_i32 = arith.constant 0 : i32
    %c0_i32_0 = arith.constant 0 : i32
    %c0_i32_1 = arith.constant 0 : i32
    return %c0_i32, %c0_i32_0 : i32, i32
  }
  func.func @transform_3(%arg0: i32) -> (i32, i32) {
    %c0_i32 = arith.constant 0 : i32
    %c0_i32_0 = arith.constant 0 : i32
    %c0_i32_1 = arith.constant 0 : i32
    return %c0_i32, %c0_i32_0 : i32, i32
  }
  func.func @transform_4(%arg0: i32) -> (i32, i32) {
    %c0_i32 = arith.constant 0 : i32
    %c0_i32_0 = arith.constant 0 : i32
    %c0_i32_1 = arith.constant 0 : i32
    return %c0_i32, %c0_i32_0 : i32, i32
  }
  func.func @transform_5(%arg0: i32) -> (i32, i32) {
    %c0_i32 = arith.constant 0 : i32
    %c0_i32_0 = arith.constant 0 : i32
    %c0_i32_1 = arith.constant 0 : i32
    return %c0_i32, %c0_i32_0 : i32, i32
  }
  func.func @transform_6(%arg0: i32) -> (i32, i32) {
    %c0_i32 = arith.constant 0 : i32
    %c0_i32_0 = arith.constant 0 : i32
    return %arg0, %c0_i32 : i32, i32
  }
  func.func @transform_7(%arg0: i32) -> (i32, i32) {
    %c0_i32 = arith.constant 0 : i32
    %c0_i32_0 = arith.constant 0 : i32
    %c0_i32_1 = arith.constant 0 : i32
    return %c0_i32, %c0_i32_0 : i32, i32
  }
  func.func @transform_8(%arg0: i32) -> (i32, i32) {
    %c0_i32 = arith.constant 0 : i32
    %c0_i32_0 = arith.constant 0 : i32
    return %arg0, %c0_i32 : i32, i32
  }
  func.func @transform_9(%arg0: i32) -> (i32, i32) {
    %c0_i32 = arith.constant 0 : i32
    %c0_i32_0 = arith.constant 0 : i32
    return %arg0, %c0_i32 : i32, i32
  }
}

</mosaic_0001>

<llo_original>
// kernel: kgqa_forward.1
$region0: #{kgqa_forward.1}
  #allocation0 [shape = 'u32[]', space=smem, size = 0x4, offset = 0x4, fixed_abs, tag = 'smem constant byte address 0x4 - core index']
  #allocation1 [shape = 'u32[144,128]{1,0:T(1,128)}', space=vmem, size = 0x12000, scoped, tag = 'internal scratch']
  %s0 = inlined_call_operand.vmem [shape: bf16[512,768], index: 0, kind: input, shape index: {}]
  %s1 = inlined_call_operand.hbm [shape: bf16[768,256], index: 1, kind: input, shape index: {}]
  %s2 = inlined_call_operand.hbm [shape: bf16[256,128], index: 2, kind: input, shape index: {}]
  %s3 = inlined_call_operand.vmem [shape: bf16[128,64], index: 3, kind: input, shape index: {}]
  %s4 = inlined_call_operand.vmem [shape: bf16[64,64], index: 4, kind: input, shape index: {}]
  %s5 = inlined_call_operand.vmem [shape: f32[4,256], index: 5, kind: input, shape index: {}]
  %s6 = inlined_call_operand.vmem [shape: f32[512,64], index: 6, kind: input, shape index: {}]
  %s7 = inlined_call_operand.vmem [shape: bf16[64,128], index: 7, kind: input, shape index: {}]
  %s8 = inlined_call_operand.vmem [shape: f32[512,128], index: 8, kind: input, shape index: {}]
  %s9 = inlined_call_operand.vmem [shape: f32[512,1], index: 9, kind: output, shape index: {}]
  %s10 = sld [smem:[#allocation0]]
  $region77: #{kgqa_forward.1} parent=0
    _
  %s12 = ssub.s32 1, %s10
  %s13 = scalar_select 0, %s12, %s10
  $region1: #{kgqa_forward.1} parent=0
    #allocation2 [shape = 'u8[393216]{0}', space=vmem, size = 0x60000, scoped, tag = 'input window, operand 1, single buffered']
    #allocation3 [shape = 's32[2]{0}', space=sflag, size = 0x8, scoped, tag = 'scoped memory for kgqa_forward.1']
    #allocation4 [shape = 'u8[65536]{0}', space=vmem, size = 0x10000, scoped, tag = 'input window, operand 2, single buffered']
    #allocation5 [shape = 's32[1]{0}', space=sflag, size = 0x4, scoped, tag = 'scoped memory for kgqa_forward.1']
    %14 = vsyncpa [#allocation3], 0
    %15 = vsyncpa [#allocation5], 0
    loop: start=0, step=1, limit=4
    $region2: #{kgqa_forward.1} parent=1 // loop_pre_header
      _
    $region3: #{kgqa_forward.1} parent=1 // loop_header
      %s17 = sphi 0, %s21
      %p18 = scmp.ge.s32.totalorder %s17, 4
      %s27 = sphi 0, %s29
      %s30 = sphi 0, %s27
      %s31 = sphi 0, %s30
      %s47 = sphi 0, %s31
      %s51 = sphi 0, %s51
      %s53 = sphi 0, %s51
      %s54 = sphi 0, %s53
      %s68 = sphi 0, %s54
      %s72 = sphi 0, %s72
      %s74 = sphi 0, %s72
      %s75 = sphi 0, %s74
      %s89 = sphi 0, %s75
      %s93 = sphi 0, %s93
      %s95 = sphi 0, %s93
      %s96 = sphi 0, %s95
      %s110 = sphi 0, %s96
      %s114 = sphi 0, %s114
      %s116 = sphi 0, %s114
      %s117 = sphi 0, %s116
      %s131 = sphi 0, %s117
      %s135 = sphi 0, %s135
      %s137 = sphi 0, %s135
      %s138 = sphi 0, %s137
      %s152 = sphi 0, %s138
      %s158 = sphi 0, %s160
      %s161 = sphi 0, %s158
      %s162 = sphi 0, %s161
      %s178 = sphi 0, %s162
      %s182 = sphi 0, %s182
      %s184 = sphi 0, %s182
      %s185 = sphi 0, %s184
      %s199 = sphi 0, %s185
      %s205 = sphi 0, %s207
      %s208 = sphi 0, %s205
      %s209 = sphi 0, %s208
      %s225 = sphi 0, %s209
      %s231 = sphi 0, %s233
      %s234 = sphi 0, %s231
      %s235 = sphi 0, %s234
      %s251 = sphi 0, %s235
    $region4: #{kgqa_forward.1} parent=1 // loop_header_branch
      %20 = sbr.rel (%p18) target = $region8
    $region5: #{kgqa_forward.1} parent=1 // loop_body
      %s22 = ssub.s32 %s17, 1
      %s23 = ssub.s32 %s17, 2
      %s24 = sadd.s32 %s17, 1
      %s25 = ssub.s32 %s17, %s24
      %p26 = scmp.eq.s32.totalorder %s25, 0
      %s28 = sadd.s32 %s27, 1
      %s29 = scalar_select %p26, %s27, %s28
      %p32 = pneg %p26
      %p33 = scmp.eq.s32.totalorder %s17, 1
      %p34 = por %p32, %p33
      %p35 = scmp.ne.s32.totalorder %s27, %s30
      %p36 = scmp.eq.s32.totalorder %s17, 0
      %p37 = por %p35, %p36
      %p38 = scmp.ne.s32.totalorder %s27, %s30
      %p39 = scmp.eq.s32.totalorder %s22, 1
      %p40 = por %p38, %p39
      %p41 = scmp.ne.s32.totalorder %s30, %s31
      %p42 = scmp.eq.s32.totalorder %s22, 0
      %p43 = por %p41, %p42
      %p44 = scmp.ne.s32.totalorder %s30, %s31
      %p45 = scmp.eq.s32.totalorder %s23, 1
      %p46 = por %p44, %p45
      %p48 = scmp.ne.s32.totalorder %s31, %s47
      %p49 = scmp.eq.s32.totalorder %s23, 0
      %p50 = por %p48, %p49
      %s52 = sadd.s32 %s51, 1
      %p55 = scmp.eq.s32.totalorder %s17, 1
      %p56 = scmp.ne.s32.totalorder %s51, %s53
      %p57 = scmp.eq.s32.totalorder %s17, 0
      %p58 = por %p56, %p57
      %p59 = scmp.ne.s32.totalorder %s51, %s53
      %p60 = scmp.eq.s32.totalorder %s22, 1
      %p61 = por %p59, %p60
      %p62 = scmp.ne.s32.totalorder %s53, %s54
      %p63 = scmp.eq.s32.totalorder %s22, 0
      %p64 = por %p62, %p63
      %p65 = scmp.ne.s32.totalorder %s53, %s54
      %p66 = scmp.eq.s32.totalorder %s23, 1
      %p67 = por %p65, %p66
      %p69 = scmp.ne.s32.totalorder %s54, %s68
      %p70 = scmp.eq.s32.totalorder %s23, 0
      %p71 = por %p69, %p70
      %s73 = sadd.s32 %s72, 1
      %p76 = scmp.eq.s32.totalorder %s17, 1
      %p77 = scmp.ne.s32.totalorder %s72, %s74
      %p78 = scmp.eq.s32.totalorder %s17, 0
      %p79 = por %p77, %p78
      %p80 = scmp.ne.s32.totalorder %s72, %s74
      %p81 = scmp.eq.s32.totalorder %s22, 1
      %p82 = por %p80, %p81
      %p83 = scmp.ne.s32.totalorder %s74, %s75
      %p84 = scmp.eq.s32.totalorder %s22, 0
      %p85 = por %p83, %p84
      %p86 = scmp.ne.s32.totalorder %s74, %s75
      %p87 = scmp.eq.s32.totalorder %s23, 1
      %p88 = por %p86, %p87
      %p90 = scmp.ne.s32.totalorder %s75, %s89
      %p91 = scmp.eq.s32.totalorder %s23, 0
      %p92 = por %p90, %p91
      %s94 = sadd.s32 %s93, 1
      %p97 = scmp.eq.s32.totalorder %s17, 1
      %p98 = scmp.ne.s32.totalorder %s93, %s95
      %p99 = scmp.eq.s32.totalorder %s17, 0
      %p100 = por %p98, %p99
      %p101 = scmp.ne.s32.totalorder %s93, %s95
      %p102 = scmp.eq.s32.totalorder %s22, 1
      %p103 = por %p101, %p102
      %p104 = scmp.ne.s32.totalorder %s95, %s96
      %p105 = scmp.eq.s32.totalorder %s22, 0
      %p106 = por %p104, %p105
      %p107 = scmp.ne.s32.totalorder %s95, %s96
      %p108 = scmp.eq.s32.totalorder %s23, 1
      %p109 = por %p107, %p108
      %p111 = scmp.ne.s32.totalorder %s96, %s110
      %p112 = scmp.eq.s32.totalorder %s23, 0
      %p113 = por %p111, %p112
      %s115 = sadd.s32 %s114, 1
      %p118 = scmp.eq.s32.totalorder %s17, 1
      %p119 = scmp.ne.s32.totalorder %s114, %s116
      %p120 = scmp.eq.s32.totalorder %s17, 0
      %p121 = por %p119, %p120
      %p122 = scmp.ne.s32.totalorder %s114, %s116
      %p123 = scmp.eq.s32.totalorder %s22, 1
      %p124 = por %p122, %p123
      %p125 = scmp.ne.s32.totalorder %s116, %s117
      %p126 = scmp.eq.s32.totalorder %s22, 0
      %p127 = por %p125, %p126
      %p128 = scmp.ne.s32.totalorder %s116, %s117
      %p129 = scmp.eq.s32.totalorder %s23, 1
      %p130 = por %p128, %p129
      %p132 = scmp.ne.s32.totalorder %s117, %s131
      %p133 = scmp.eq.s32.totalorder %s23, 0
      %p134 = por %p132, %p133
      %s136 = sadd.s32 %s135, 1
      %p139 = scmp.eq.s32.totalorder %s17, 1
      %p140 = scmp.ne.s32.totalorder %s135, %s137
      %p141 = scmp.eq.s32.totalorder %s17, 0
      %p142 = por %p140, %p141
      %p143 = scmp.ne.s32.totalorder %s135, %s137
      %p144 = scmp.eq.s32.totalorder %s22, 1
      %p145 = por %p143, %p144
      %p146 = scmp.ne.s32.totalorder %s137, %s138
      %p147 = scmp.eq.s32.totalorder %s22, 0
      %p148 = por %p146, %p147
      %p149 = scmp.ne.s32.totalorder %s137, %s138
      %p150 = scmp.eq.s32.totalorder %s23, 1
      %p151 = por %p149, %p150
      %p153 = scmp.ne.s32.totalorder %s138, %s152
      %p154 = scmp.eq.s32.totalorder %s23, 0
      %p155 = por %p153, %p154
      %s156 = ssub.s32 %s17, %s24
      %p157 = scmp.eq.s32.totalorder %s156, 0
      %s159 = sadd.s32 %s158, 1
      %s160 = scalar_select %p157, %s158, %s159
      %p163 = pneg %p157
      %p164 = scmp.eq.s32.totalorder %s17, 1
      %p165 = por %p163, %p164
      %p166 = scmp.ne.s32.totalorder %s158, %s161
      %p167 = scmp.eq.s32.totalorder %s17, 0
      %p168 = por %p166, %p167
      %p169 = scmp.ne.s32.totalorder %s158, %s161
      %p170 = scmp.eq.s32.totalorder %s22, 1
      %p171 = por %p169, %p170
      %p172 = scmp.ne.s32.totalorder %s161, %s162
      %p173 = scmp.eq.s32.totalorder %s22, 0
      %p174 = por %p172, %p173
      %p175 = scmp.ne.s32.totalorder %s161, %s162
      %p176 = scmp.eq.s32.totalorder %s23, 1
      %p177 = por %p175, %p176
      %p179 = scmp.ne.s32.totalorder %s162, %s178
      %p180 = scmp.eq.s32.totalorder %s23, 0
      %p181 = por %p179, %p180
      %s183 = sadd.s32 %s182, 1
      %p186 = scmp.eq.s32.totalorder %s17, 1
      %p187 = scmp.ne.s32.totalorder %s182, %s184
      %p188 = scmp.eq.s32.totalorder %s17, 0
      %p189 = por %p187, %p188
      %p190 = scmp.ne.s32.totalorder %s182, %s184
      %p191 = scmp.eq.s32.totalorder %s22, 1
      %p192 = por %p190, %p191
      %p193 = scmp.ne.s32.totalorder %s184, %s185
      %p194 = scmp.eq.s32.totalorder %s22, 0
      %p195 = por %p193, %p194
      %p196 = scmp.ne.s32.totalorder %s184, %s185
      %p197 = scmp.eq.s32.totalorder %s23, 1
      %p198 = por %p196, %p197
      %p200 = scmp.ne.s32.totalorder %s185, %s199
      %p201 = scmp.eq.s32.totalorder %s23, 0
      %p202 = por %p200, %p201
      %s203 = ssub.s32 %s17, %s24
      %p204 = scmp.eq.s32.totalorder %s203, 0
      %s206 = sadd.s32 %s205, 1
      %s207 = scalar_select %p204, %s205, %s206
      %p210 = pneg %p204
      %p211 = scmp.eq.s32.totalorder %s17, 1
      %p212 = por %p210, %p211
      %p213 = scmp.ne.s32.totalorder %s205, %s208
      %p214 = scmp.eq.s32.totalorder %s17, 0
      %p215 = por %p213, %p214
      %p216 = scmp.ne.s32.totalorder %s205, %s208
      %p217 = scmp.eq.s32.totalorder %s22, 1
      %p218 = por %p216, %p217
      %p219 = scmp.ne.s32.totalorder %s208, %s209
      %p220 = scmp.eq.s32.totalorder %s22, 0
      %p221 = por %p219, %p220
      %p222 = scmp.ne.s32.totalorder %s208, %s209
      %p223 = scmp.eq.s32.totalorder %s23, 1
      %p224 = por %p222, %p223
      %p226 = scmp.ne.s32.totalorder %s209, %s225
      %p227 = scmp.eq.s32.totalorder %s23, 0
      %p228 = por %p226, %p227
      %s229 = ssub.s32 %s17, %s24
      %p230 = scmp.eq.s32.totalorder %s229, 0
      %s232 = sadd.s32 %s231, 1
      %s233 = scalar_select %p230, %s231, %s232
      %p236 = pneg %p230
      %p237 = scmp.eq.s32.totalorder %s17, 1
      %p238 = por %p236, %p237
      %p239 = scmp.ne.s32.totalorder %s231, %s234
      %p240 = scmp.eq.s32.totalorder %s17, 0
      %p241 = por %p239, %p240
      %p242 = scmp.ne.s32.totalorder %s231, %s234
      %p243 = scmp.eq.s32.totalorder %s22, 1
      %p244 = por %p242, %p243
      %p245 = scmp.ne.s32.totalorder %s234, %s235
      %p246 = scmp.eq.s32.totalorder %s22, 0
      %p247 = por %p245, %p246
      %p248 = scmp.ne.s32.totalorder %s234, %s235
      %p249 = scmp.eq.s32.totalorder %s23, 1
      %p250 = por %p248, %p249
      %p252 = scmp.ne.s32.totalorder %s235, %s251
      %p253 = scmp.eq.s32.totalorder %s23, 0
      %p254 = por %p252, %p253
      %p255 = scmp.le.s32.totalorder 1, %s17
      %p256 = scmp.lt.s32.totalorder %s17, 3
      %p257 = pnand %p255, %p256
      %p258 = pneg %p257
      // Predicated region
      $region9: #{kgqa_forward.1} parent=5 // pred_check
        _
      $region10: #{kgqa_forward.1} parent=5 // pred_check_branch
        %260 = sbr.rel (%p257) target = $region12
      $region11: #{kgqa_forward.1} parent=5 // pred_region
        %s261 = ssub.s32 %s17, 1
        // Predicated region
        $region13: #{kgqa_forward.1} parent=11 // pred_check
          %p262 = pneg %p64
        $region14: #{kgqa_forward.1} parent=11 // pred_check_branch
          %264 = sbr.rel (%p262) target = $region16
        $region15: #{kgqa_forward.1} parent=11 // pred_region
          %s266 = ssub.s32 12288, 12288
          %267 = vsyncadd [#allocation3], %s266
          %s268 = sshll.u32 [#allocation2], 4
          %s269 = int_to_ptr.vmem [resolvable:$true] %s268
          %274 = dma.hbm_to_vmem [thread:$0]  %s1, 12288, %s269, [#allocation3], 128, 128, 8
        $region16: #{kgqa_forward.1} parent=11 // pred_fallthru
          _
        // Predicated region
        $region17: #{kgqa_forward.1} parent=11 // pred_check
          %p275 = pneg %p85
        $region18: #{kgqa_forward.1} parent=11 // pred_check_branch
          %277 = sbr.rel (%p275) target = $region20
        $region19: #{kgqa_forward.1} parent=11 // pred_region
          %s279 = ssub.s32 2048, 2048
          %280 = vsyncadd [#allocation5], %s279
          %s281 = sshll.u32 [#allocation4], 4
          %s282 = int_to_ptr.vmem [resolvable:$true] %s281
          %287 = dma.hbm_to_vmem [thread:$0]  %s2, 2048, %s282, [#allocation5], 64, 64, 4
        $region20: #{kgqa_forward.1} parent=11 // pred_fallthru
          _
        // Predicated region
        $region21: #{kgqa_forward.1} parent=11 // pred_check
          %p288 = pneg %p106
        $region22: #{kgqa_forward.1} parent=11 // pred_check_branch
          %290 = sbr.rel (%p288) target = $region24
        $region23: #{kgqa_forward.1} parent=11 // pred_region
          _
        $region24: #{kgqa_forward.1} parent=11 // pred_fallthru
          _
        // Predicated region
        $region25: #{kgqa_forward.1} parent=11 // pred_check
          %p291 = pneg %p127
        $region26: #{kgqa_forward.1} parent=11 // pred_check_branch
          %293 = sbr.rel (%p291) target = $region28
        $region27: #{kgqa_forward.1} parent=11 // pred_region
          _
        $region28: #{kgqa_forward.1} parent=11 // pred_fallthru
          _
        // Predicated region
        $region29: #{kgqa_forward.1} parent=11 // pred_check
          %p294 = pneg %p148
        $region30: #{kgqa_forward.1} parent=11 // pred_check_branch
          %296 = sbr.rel (%p294) target = $region32
        $region31: #{kgqa_forward.1} parent=11 // pred_region
          _
        $region32: #{kgqa_forward.1} parent=11 // pred_fallthru
          _
        // Predicated region
        $region33: #{kgqa_forward.1} parent=11 // pred_check
          %p297 = pneg %p195
        $region34: #{kgqa_forward.1} parent=11 // pred_check_branch
          %299 = sbr.rel (%p297) target = $region36
        $region35: #{kgqa_forward.1} parent=11 // pred_region
          _
        $region36: #{kgqa_forward.1} parent=11 // pred_fallthru
          _
      $region12: #{kgqa_forward.1} parent=5 // pred_fallthru
        _
      %p300 = scmp.lt.s32.totalorder %s17, 2
      // Predicated region
      $region37: #{kgqa_forward.1} parent=5 // pred_check
        %p301 = pneg %p300
      $region38: #{kgqa_forward.1} parent=5 // pred_check_branch
        %303 = sbr.rel (%p301) target = $region40
      $region39: #{kgqa_forward.1} parent=5 // pred_region
        // Predicated region
        $region41: #{kgqa_forward.1} parent=39 // pred_check
          %p304 = pneg %p37
        $region42: #{kgqa_forward.1} parent=39 // pred_check_branch
          %306 = sbr.rel (%p304) target = $region44
        $region43: #{kgqa_forward.1} parent=39 // pred_region
          %s307 = smul.u32 32, %s17
          %p308 = scmp.lt.s32.totalorder %s307, 63
          %s309 = scalar_select %p308, %s307, 63
          %s310 = smul.addr %s309, 6
          %s311 = smul.addr %s310, 4
          %s312 = scalar_lea.vmem %s0, %s311
          %s313 = smul.u32 32, %s17
        $region44: #{kgqa_forward.1} parent=39 // pred_fallthru
          _
        // Predicated region
        $region45: #{kgqa_forward.1} parent=39 // pred_check
          %p314 = pneg %p168
        $region46: #{kgqa_forward.1} parent=39 // pred_check_branch
          %316 = sbr.rel (%p314) target = $region48
        $region47: #{kgqa_forward.1} parent=39 // pred_region
          %s317 = smul.u32 32, %s17
          %p318 = scmp.lt.s32.totalorder %s317, 63
          %s319 = scalar_select %p318, %s317, 63
          %s320 = smul.addr %s319, 8
          %s321 = scalar_lea.vmem %s6, %s320
          %s322 = smul.u32 32, %s17
        $region48: #{kgqa_forward.1} parent=39 // pred_fallthru
          _
        // Predicated region
        $region49: #{kgqa_forward.1} parent=39 // pred_check
          %p323 = pneg %p215
        $region50: #{kgqa_forward.1} parent=39 // pred_check_branch
          %325 = sbr.rel (%p323) target = $region52
        $region51: #{kgqa_forward.1} parent=39 // pred_region
          %s326 = smul.u32 32, %s17
          %p327 = scmp.lt.s32.totalorder %s326, 63
          %s328 = scalar_select %p327, %s326, 63
          %s329 = smul.addr %s328, 8
          %s330 = scalar_lea.vmem %s8, %s329
          %s331 = smul.u32 32, %s17
        $region52: #{kgqa_forward.1} parent=39 // pred_fallthru
          _
      $region40: #{kgqa_forward.1} parent=5 // pred_fallthru
        _
      %p332 = scmp.le.s32.totalorder 1, %s17
      %p333 = scmp.lt.s32.totalorder %s17, 3
      %p334 = pnand %p332, %p333
      %p335 = pneg %p334
      // Predicated region
      $region53: #{kgqa_forward.1} parent=5 // pred_check
        _
      $region54: #{kgqa_forward.1} parent=5 // pred_check_branch
        %337 = sbr.rel (%p334) target = $region56
      $region55: #{kgqa_forward.1} parent=5 // pred_region
        %s338 = ssub.s32 %s17, 1
        // Predicated region
        $region57: #{kgqa_forward.1} parent=55 // pred_check
          %p339 = pneg %p64
        $region58: #{kgqa_forward.1} parent=55 // pred_check_branch
          %341 = sbr.rel (%p339) target = $region60
        $region59: #{kgqa_forward.1} parent=55 // pred_region
          %342 = dma.done [#allocation3], 12288
        $region60: #{kgqa_forward.1} parent=55 // pred_fallthru
          _
        // Predicated region
        $region61: #{kgqa_forward.1} parent=55 // pred_check
          %p343 = pneg %p85
        $region62: #{kgqa_forward.1} parent=55 // pred_check_branch
          %345 = sbr.rel (%p343) target = $region64
        $region63: #{kgqa_forward.1} parent=55 // pred_region
          %346 = dma.done [#allocation5], 2048
        $region64: #{kgqa_forward.1} parent=55 // pred_fallthru
          _
        %s347 = smul.u32 32, %s22
        %p348 = scmp.lt.s32.totalorder %s347, 63
        %s349 = scalar_select %p348, %s347, 63
        %s350 = smul.addr %s349, 6
        %s351 = smul.addr %s350, 4
        %s352 = scalar_lea.vmem %s0, %s351
        %p353 = pneg %p43
        %p354 = pneg %p40
        %p355 = pneg %p64
        %p356 = pneg %p61
        %p357 = pneg %p85
        %p358 = pneg %p82
        %p359 = pneg %p106
        %p360 = pneg %p103
        %p361 = pneg %p127
        %p362 = pneg %p124
        %p363 = pneg %p148
        %p364 = pneg %p145
        %s365 = smul.u32 32, %s22
        %p366 = scmp.lt.s32.totalorder %s365, 63
        %s367 = scalar_select %p366, %s365, 63
        %s368 = smul.addr %s367, 8
        %s369 = scalar_lea.vmem %s6, %s368
        %p370 = pneg %p174
        %p371 = pneg %p171
        %p372 = pneg %p195
        %p373 = pneg %p192
        %s374 = smul.u32 32, %s22
        %p375 = scmp.lt.s32.totalorder %s374, 63
        %s376 = scalar_select %p375, %s374, 63
        %s377 = smul.addr %s376, 8
        %s378 = scalar_lea.vmem %s8, %s377
        %p379 = pneg %p221
        %p380 = pneg %p218
        %p381 = pneg %p247
        %p382 = pneg %p244
        %s383 = smul.u32 32, %s22
        %p384 = scmp.lt.s32.totalorder %s383, 63
        %s385 = scalar_select %p384, %s383, 63
        %s386 = smul.addr %s385, 8
        %s387 = scalar_lea.vmem %s9, %s386
        %s388 = smul.u32 32, %s22
        %p389 = scmp.lt.s32.totalorder %s388, 63
        %s390 = scalar_select %p389, %s388, 63
        %s391 = smul.addr %s390, 6
        %s392 = smul.addr %s391, 4
        %s393 = scalar_lea.vmem %s0, %s392
        %s394 = smul.u32 32, %s22
        %s395 = smul.u32 32, %s22
        %p396 = scmp.lt.s32.totalorder %s395, 63
        %s397 = scalar_select %p396, %s395, 63
        %s398 = smul.addr %s397, 8
        %s399 = scalar_lea.vmem %s6, %s398
        %s400 = smul.u32 32, %s22
        %s401 = smul.u32 32, %s22
        %p402 = scmp.lt.s32.totalorder %s401, 63
        %s403 = scalar_select %p402, %s401, 63
        %s404 = smul.addr %s403, 8
        %s405 = scalar_lea.vmem %s8, %s404
        %s406 = smul.u32 32, %s22
        %s407 = smul.u32 32, %s22
        %p408 = scmp.lt.s32.totalorder %s407, 63
        %s409 = scalar_select %p408, %s407, 63
        %s410 = smul.addr %s409, 8
        %s411 = scalar_lea.vmem %s9, %s410
        %s412 = smul.u32 32, %s22
        %v414 = vld [vmem:[%s5] ss:$4 sm:$0x3]
        %v415 = vld [vmem:[%s5 + $0x1] sm:$0x1]
        %v416 = vld [vmem:[%s5 + $0x2] sm:$0x1]
        %v417 = vld [vmem:[%s5 + $0x3] sm:$0x1]
        %v418 = vld [vmem:[%s393] sm:$0xff]
        %v419 = vld [vmem:[%s393 + $0x8] sm:$0xff]
        %v420 = vld [vmem:[%s393 + $0x10] sm:$0xff]
        %v421 = vld [vmem:[%s393 + $0x18] sm:$0xff]
        %v422 = vld [vmem:[%s393 + $0x20] sm:$0xff]
        %v423 = vld [vmem:[%s393 + $0x28] sm:$0xff]
        %v424 = vld [vmem:[%s393 + $0x30] sm:$0xff]
        %v425 = vld [vmem:[%s393 + $0x38] sm:$0xff]
        %v426 = vld [vmem:[%s393 + $0x40] sm:$0xff]
        %v427 = vld [vmem:[%s393 + $0x48] sm:$0xff]
        %v428 = vld [vmem:[%s393 + $0x50] sm:$0xff]
        %v429 = vld [vmem:[%s393 + $0x58] sm:$0xff]
        %v430 = vld [vmem:[%s393 + $0x60] sm:$0xff]
        %v431 = vld [vmem:[%s393 + $0x68] sm:$0xff]
        %v432 = vld [vmem:[%s393 + $0x70] sm:$0xff]
        %v433 = vld [vmem:[%s393 + $0x78] sm:$0xff]
        %v434 = vld [vmem:[%s393 + $0x80] sm:$0xff]
        %v435 = vld [vmem:[%s393 + $0x88] sm:$0xff]
        %v436 = vld [vmem:[%s393 + $0x90] sm:$0xff]
        %v437 = vld [vmem:[%s393 + $0x98] sm:$0xff]
        %v438 = vld [vmem:[%s393 + $0xa0] sm:$0xff]
        %v439 = vld [vmem:[%s393 + $0xa8] sm:$0xff]
        %v440 = vld [vmem:[%s393 + $0xb0] sm:$0xff]
        %v441 = vld [vmem:[%s393 + $0xb8] sm:$0xff]
        %v442 = vld [vmem:[%s393 + $0xc0] sm:$0xff]
        %v443 = vld [vmem:[%s393 + $0xc8] sm:$0xff]
        %v444 = vld [vmem:[%s393 + $0xd0] sm:$0xff]
        %v445 = vld [vmem:[%s393 + $0xd8] sm:$0xff]
        %v446 = vld [vmem:[%s393 + $0xe0] sm:$0xff]
        %v447 = vld [vmem:[%s393 + $0xe8] sm:$0xff]
        %v448 = vld [vmem:[%s393 + $0xf0] sm:$0xff]
        %v449 = vld [vmem:[%s393 + $0xf8] sm:$0xff]
        %v450 = vld [vmem:[%s393 + $0x100] sm:$0xff]
        %v451 = vld [vmem:[%s393 + $0x108] sm:$0xff]
        %v452 = vld [vmem:[%s393 + $0x110] sm:$0xff]
        %v453 = vld [vmem:[%s393 + $0x118] sm:$0xff]
        %v454 = vld [vmem:[%s393 + $0x120] sm:$0xff]
        %v455 = vld [vmem:[%s393 + $0x128] sm:$0xff]
        %v456 = vld [vmem:[%s393 + $0x130] sm:$0xff]
        %v457 = vld [vmem:[%s393 + $0x138] sm:$0xff]
        %v458 = vld [vmem:[%s393 + $0x140] sm:$0xff]
        %v459 = vld [vmem:[%s393 + $0x148] sm:$0xff]
        %v460 = vld [vmem:[%s393 + $0x150] sm:$0xff]
        %v461 = vld [vmem:[%s393 + $0x158] sm:$0xff]
        %v462 = vld [vmem:[%s393 + $0x160] sm:$0xff]
        %v463 = vld [vmem:[%s393 + $0x168] sm:$0xff]
        %v464 = vld [vmem:[%s393 + $0x170] sm:$0xff]
        %v465 = vld [vmem:[%s393 + $0x178] sm:$0xff]
        %v466 = vld [vmem:[%s393 + $0x180] sm:$0xff]
        %v467 = vld [vmem:[%s393 + $0x188] sm:$0xff]
        %v468 = vld [vmem:[%s393 + $0x190] sm:$0xff]
        %v469 = vld [vmem:[%s393 + $0x198] sm:$0xff]
        %v470 = vld [vmem:[%s393 + $0x1a0] sm:$0xff]
        %v471 = vld [vmem:[%s393 + $0x1a8] sm:$0xff]
        %v472 = vld [vmem:[%s393 + $0x1b0] sm:$0xff]
        %v473 = vld [vmem:[%s393 + $0x1b8] sm:$0xff]
        %v474 = vld [vmem:[%s393 + $0x1c0] sm:$0xff]
        %v475 = vld [vmem:[%s393 + $0x1c8] sm:$0xff]
        %v476 = vld [vmem:[%s393 + $0x1d0] sm:$0xff]
        %v477 = vld [vmem:[%s393 + $0x1d8] sm:$0xff]
        %v478 = vld [vmem:[%s393 + $0x1e0] sm:$0xff]
        %v479 = vld [vmem:[%s393 + $0x1e8] sm:$0xff]
        %v480 = vld [vmem:[%s393 + $0x1f0] sm:$0xff]
        %v481 = vld [vmem:[%s393 + $0x1f8] sm:$0xff]
        %v482 = vld [vmem:[%s393 + $0x200] sm:$0xff]
        %v483 = vld [vmem:[%s393 + $0x208] sm:$0xff]
        %v484 = vld [vmem:[%s393 + $0x210] sm:$0xff]
        %v485 = vld [vmem:[%s393 + $0x218] sm:$0xff]
        %v486 = vld [vmem:[%s393 + $0x220] sm:$0xff]
        %v487 = vld [vmem:[%s393 + $0x228] sm:$0xff]
        %v488 = vld [vmem:[%s393 + $0x230] sm:$0xff]
        %v489 = vld [vmem:[%s393 + $0x238] sm:$0xff]
        %v490 = vld [vmem:[%s393 + $0x240] sm:$0xff]
        %v491 = vld [vmem:[%s393 + $0x248] sm:$0xff]
        %v492 = vld [vmem:[%s393 + $0x250] sm:$0xff]
        %v493 = vld [vmem:[%s393 + $0x258] sm:$0xff]
        %v494 = vld [vmem:[%s393 + $0x260] sm:$0xff]
        %v495 = vld [vmem:[%s393 + $0x268] sm:$0xff]
        %v496 = vld [vmem:[%s393 + $0x270] sm:$0xff]
        %v497 = vld [vmem:[%s393 + $0x278] sm:$0xff]
        %v498 = vld [vmem:[%s393 + $0x280] sm:$0xff]
        %v499 = vld [vmem:[%s393 + $0x288] sm:$0xff]
        %v500 = vld [vmem:[%s393 + $0x290] sm:$0xff]
        %v501 = vld [vmem:[%s393 + $0x298] sm:$0xff]
        %v502 = vld [vmem:[%s393 + $0x2a0] sm:$0xff]
        %v503 = vld [vmem:[%s393 + $0x2a8] sm:$0xff]
        %v504 = vld [vmem:[%s393 + $0x2b0] sm:$0xff]
        %v505 = vld [vmem:[%s393 + $0x2b8] sm:$0xff]
        %v506 = vld [vmem:[%s393 + $0x2c0] sm:$0xff]
        %v507 = vld [vmem:[%s393 + $0x2c8] sm:$0xff]
        %v508 = vld [vmem:[%s393 + $0x2d0] sm:$0xff]
        %v509 = vld [vmem:[%s393 + $0x2d8] sm:$0xff]
        %v510 = vld [vmem:[%s393 + $0x2e0] sm:$0xff]
        %v511 = vld [vmem:[%s393 + $0x2e8] sm:$0xff]
        %v512 = vld [vmem:[%s393 + $0x2f0] sm:$0xff]
        %v513 = vld [vmem:[%s393 + $0x2f8] sm:$0xff]
        %v514 = vld [vmem:[#allocation2] sm:$0xff]
        %v515 = vld [vmem:[#allocation2 + $0x8] sm:$0xff]
        %v516 = vld [vmem:[#allocation2 + $0x10] sm:$0xff]
        %v517 = vld [vmem:[#allocation2 + $0x18] sm:$0xff]
        %v518 = vld [vmem:[#allocation2 + $0x20] sm:$0xff]
        %v519 = vld [vmem:[#allocation2 + $0x28] sm:$0xff]
        %v520 = vld [vmem:[#allocation2 + $0x30] sm:$0xff]
        %v521 = vld [vmem:[#allocation2 + $0x38] sm:$0xff]
        %v522 = vld [vmem:[#allocation2 + $0x40] sm:$0xff]
        %v523 = vld [vmem:[#allocation2 + $0x48] sm:$0xff]
        %v524 = vld [vmem:[#allocation2 + $0x50] sm:$0xff]
        %v525 = vld [vmem:[#allocation2 + $0x58] sm:$0xff]
        %v526 = vld [vmem:[#allocation2 + $0x60] sm:$0xff]
        %v527 = vld [vmem:[#allocation2 + $0x68] sm:$0xff]
        %v528 = vld [vmem:[#allocation2 + $0x70] sm:$0xff]
        %v529 = vld [vmem:[#allocation2 + $0x78] sm:$0xff]
        %v530 = vld [vmem:[#allocation2 + $0x80] sm:$0xff]
        %v531 = vld [vmem:[#allocation2 + $0x88] sm:$0xff]
        %v532 = vld [vmem:[#allocation2 + $0x90] sm:$0xff]
        %v533 = vld [vmem:[#allocation2 + $0x98] sm:$0xff]
        %v534 = vld [vmem:[#allocation2 + $0xa0] sm:$0xff]
        %v535 = vld [vmem:[#allocation2 + $0xa8] sm:$0xff]
        %v536 = vld [vmem:[#allocation2 + $0xb0] sm:$0xff]
        %v537 = vld [vmem:[#allocation2 + $0xb8] sm:$0xff]
        %v538 = vld [vmem:[#allocation2 + $0xc0] sm:$0xff]
        %v539 = vld [vmem:[#allocation2 + $0xc8] sm:$0xff]
        %v540 = vld [vmem:[#allocation2 + $0xd0] sm:$0xff]
        %v541 = vld [vmem:[#allocation2 + $0xd8] sm:$0xff]
        %v542 = vld [vmem:[#allocation2 + $0xe0] sm:$0xff]
        %v543 = vld [vmem:[#allocation2 + $0xe8] sm:$0xff]
        %v544 = vld [vmem:[#allocation2 + $0xf0] sm:$0xff]
        %v545 = vld [vmem:[#allocation2 + $0xf8] sm:$0xff]
        %v546 = vld [vmem:[#allocation2 + $0x100] sm:$0xff]
        %v547 = vld [vmem:[#allocation2 + $0x108] sm:$0xff]
        %v548 = vld [vmem:[#allocation2 + $0x110] sm:$0xff]
        %v549 = vld [vmem:[#allocation2 + $0x118] sm:$0xff]
        %v550 = vld [vmem:[#allocation2 + $0x120] sm:$0xff]
        %v551 = vld [vmem:[#allocation2 + $0x128] sm:$0xff]
        %v552 = vld [vmem:[#allocation2 + $0x130] sm:$0xff]
        %v553 = vld [vmem:[#allocation2 + $0x138] sm:$0xff]
        %v554 = vld [vmem:[#allocation2 + $0x140] sm:$0xff]
        %v555 = vld [vmem:[#allocation2 + $0x148] sm:$0xff]
        %v556 = vld [vmem:[#allocation2 + $0x150] sm:$0xff]
        %v557 = vld [vmem:[#allocation2 + $0x158] sm:$0xff]
        %v558 = vld [vmem:[#allocation2 + $0x160] sm:$0xff]
        %v559 = vld [vmem:[#allocation2 + $0x168] sm:$0xff]
        %v560 = vld [vmem:[#allocation2 + $0x170] sm:$0xff]
        %v561 = vld [vmem:[#allocation2 + $0x178] sm:$0xff]
        %v562 = vld [vmem:[#allocation2 + $0x180] sm:$0xff]
        %v563 = vld [vmem:[#allocation2 + $0x188] sm:$0xff]
        %v564 = vld [vmem:[#allocation2 + $0x190] sm:$0xff]
        %v565 = vld [vmem:[#allocation2 + $0x198] sm:$0xff]
        %v566 = vld [vmem:[#allocation2 + $0x1a0] sm:$0xff]
        %v567 = vld [vmem:[#allocation2 + $0x1a8] sm:$0xff]
        %v568 = vld [vmem:[#allocation2 + $0x1b0] sm:$0xff]
        %v569 = vld [vmem:[#allocation2 + $0x1b8] sm:$0xff]
        %v570 = vld [vmem:[#allocation2 + $0x1c0] sm:$0xff]
        %v571 = vld [vmem:[#allocation2 + $0x1c8] sm:$0xff]
        %v572 = vld [vmem:[#allocation2 + $0x1d0] sm:$0xff]
        %v573 = vld [vmem:[#allocation2 + $0x1d8] sm:$0xff]
        %v574 = vld [vmem:[#allocation2 + $0x1e0] sm:$0xff]
        %v575 = vld [vmem:[#allocation2 + $0x1e8] sm:$0xff]
        %v576 = vld [vmem:[#allocation2 + $0x1f0] sm:$0xff]
        %v577 = vld [vmem:[#allocation2 + $0x1f8] sm:$0xff]
        %v578 = vld [vmem:[#allocation2 + $0x200] sm:$0xff]
        %v579 = vld [vmem:[#allocation2 + $0x208] sm:$0xff]
        %v580 = vld [vmem:[#allocation2 + $0x210] sm:$0xff]
        %v581 = vld [vmem:[#allocation2 + $0x218] sm:$0xff]
        %v582 = vld [vmem:[#allocation2 + $0x220] sm:$0xff]
        %v583 = vld [vmem:[#allocation2 + $0x228] sm:$0xff]
        %v584 = vld [vmem:[#allocation2 + $0x230] sm:$0xff]
        %v585 = vld [vmem:[#allocation2 + $0x238] sm:$0xff]
        %v586 = vld [vmem:[#allocation2 + $0x240] sm:$0xff]
        %v587 = vld [vmem:[#allocation2 + $0x248] sm:$0xff]
        %v588 = vld [vmem:[#allocation2 + $0x250] sm:$0xff]
        %v589 = vld [vmem:[#allocation2 + $0x258] sm:$0xff]
        %v590 = vld [vmem:[#allocation2 + $0x260] sm:$0xff]
        %v591 = vld [vmem:[#allocation2 + $0x268] sm:$0xff]
        %v592 = vld [vmem:[#allocation2 + $0x270] sm:$0xff]
        %v593 = vld [vmem:[#allocation2 + $0x278] sm:$0xff]
        %v594 = vld [vmem:[#allocation2 + $0x280] sm:$0xff]
        %v595 = vld [vmem:[#allocation2 + $0x288] sm:$0xff]
        %v596 = vld [vmem:[#allocation2 + $0x290] sm:$0xff]
        %v597 = vld [vmem:[#allocation2 + $0x298] sm:$0xff]
        %v598 = vld [vmem:[#allocation2 + $0x2a0] sm:$0xff]
        %v599 = vld [vmem:[#allocation2 + $0x2a8] sm:$0xff]
        %v600 = vld [vmem:[#allocation2 + $0x2b0] sm:$0xff]
        %v601 = vld [vmem:[#allocation2 + $0x2b8] sm:$0xff]
        %v602 = vld [vmem:[#allocation2 + $0x2c0] sm:$0xff]
        %v603 = vld [vmem:[#allocation2 + $0x2c8] sm:$0xff]
        %v604 = vld [vmem:[#allocation2 + $0x2d0] sm:$0xff]
        %v605 = vld [vmem:[#allocation2 + $0x2d8] sm:$0xff]
        %v606 = vld [vmem:[#allocation2 + $0x2e0] sm:$0xff]
        %v607 = vld [vmem:[#allocation2 + $0x2e8] sm:$0xff]
        %v608 = vld [vmem:[#allocation2 + $0x2f0] sm:$0xff]
        %v609 = vld [vmem:[#allocation2 + $0x2f8] sm:$0xff]
        %v611 = vlaneseq
        %v612 = vshrl.u32 %v611, 7
        %v613 = vsub.s32 0, %v612
        %v614 = vrot.slane %v414, %v613
        %v615 = vlaneseq
        %v616 = vshrl.u32 %v615, 7
        %v617 = vsub.s32 1, %v616
        %v618 = vrot.slane %v414, %v617
        %v717 = vunpack.c.l.b16 %v418
        %v718 = vunpack.c.h.b16 %v418
        %v719 = vunpack.c.l.b16 %v419
        %v720 = vunpack.c.h.b16 %v419
        %v721 = vunpack.c.l.b16 %v420
        %v722 = vunpack.c.h.b16 %v420
        %v723 = vunpack.c.l.b16 %v421
        %v724 = vunpack.c.h.b16 %v421
        %v725 = vunpack.c.l.b16 %v422
        %v726 = vunpack.c.h.b16 %v422
        %v727 = vunpack.c.l.b16 %v423
        %v728 = vunpack.c.h.b16 %v423
        %v729 = vunpack.c.l.b16 %v424
        %v730 = vunpack.c.h.b16 %v424
        %v731 = vunpack.c.l.b16 %v425
        %v732 = vunpack.c.h.b16 %v425
        %v733 = vunpack.c.l.b16 %v426
        %v734 = vunpack.c.h.b16 %v426
        %v735 = vunpack.c.l.b16 %v427
        %v736 = vunpack.c.h.b16 %v427
        %v737 = vunpack.c.l.b16 %v428
        %v738 = vunpack.c.h.b16 %v428
        %v739 = vunpack.c.l.b16 %v429
        %v740 = vunpack.c.h.b16 %v429
        %v741 = vunpack.c.l.b16 %v430
        %v742 = vunpack.c.h.b16 %v430
        %v743 = vunpack.c.l.b16 %v431
        %v744 = vunpack.c.h.b16 %v431
        %v745 = vunpack.c.l.b16 %v432
        %v746 = vunpack.c.h.b16 %v432
        %v747 = vunpack.c.l.b16 %v433
        %v748 = vunpack.c.h.b16 %v433
        %v749 = vunpack.c.l.b16 %v434
        %v750 = vunpack.c.h.b16 %v434
        %v751 = vunpack.c.l.b16 %v435
        %v752 = vunpack.c.h.b16 %v435
        %v753 = vunpack.c.l.b16 %v436
        %v754 = vunpack.c.h.b16 %v436
        %v755 = vunpack.c.l.b16 %v437
        %v756 = vunpack.c.h.b16 %v437
        %v757 = vunpack.c.l.b16 %v438
        %v758 = vunpack.c.h.b16 %v438
        %v759 = vunpack.c.l.b16 %v439
        %v760 = vunpack.c.h.b16 %v439
        %v761 = vunpack.c.l.b16 %v440
        %v762 = vunpack.c.h.b16 %v440
        %v763 = vunpack.c.l.b16 %v441
        %v764 = vunpack.c.h.b16 %v441
        %v765 = vunpack.c.l.b16 %v442
        %v766 = vunpack.c.h.b16 %v442
        %v767 = vunpack.c.l.b16 %v443
        %v768 = vunpack.c.h.b16 %v443
        %v769 = vunpack.c.l.b16 %v444
        %v770 = vunpack.c.h.b16 %v444
        %v771 = vunpack.c.l.b16 %v445
        %v772 = vunpack.c.h.b16 %v445
        %v773 = vunpack.c.l.b16 %v446
        %v774 = vunpack.c.h.b16 %v446
        %v775 = vunpack.c.l.b16 %v447
        %v776 = vunpack.c.h.b16 %v447
        %v777 = vunpack.c.l.b16 %v448
        %v778 = vunpack.c.h.b16 %v448
        %v779 = vunpack.c.l.b16 %v449
        %v780 = vunpack.c.h.b16 %v449
        %v781 = vunpack.c.l.b16 %v450
        %v782 = vunpack.c.h.b16 %v450
        %v783 = vunpack.c.l.b16 %v451
        %v784 = vunpack.c.h.b16 %v451
        %v785 = vunpack.c.l.b16 %v452
        %v786 = vunpack.c.h.b16 %v452
        %v787 = vunpack.c.l.b16 %v453
        %v788 = vunpack.c.h.b16 %v453
        %v789 = vunpack.c.l.b16 %v454
        %v790 = vunpack.c.h.b16 %v454
        %v791 = vunpack.c.l.b16 %v455
        %v792 = vunpack.c.h.b16 %v455
        %v793 = vunpack.c.l.b16 %v456
        %v794 = vunpack.c.h.b16 %v456
        %v795 = vunpack.c.l.b16 %v457
        %v796 = vunpack.c.h.b16 %v457
        %v797 = vunpack.c.l.b16 %v458
        %v798 = vunpack.c.h.b16 %v458
        %v799 = vunpack.c.l.b16 %v459
        %v800 = vunpack.c.h.b16 %v459
        %v801 = vunpack.c.l.b16 %v460
        %v802 = vunpack.c.h.b16 %v460
        %v803 = vunpack.c.l.b16 %v461
        %v804 = vunpack.c.h.b16 %v461
        %v805 = vunpack.c.l.b16 %v462
        %v806 = vunpack.c.h.b16 %v462
        %v807 = vunpack.c.l.b16 %v463
        %v808 = vunpack.c.h.b16 %v463
        %v809 = vunpack.c.l.b16 %v464
        %v810 = vunpack.c.h.b16 %v464
        %v811 = vunpack.c.l.b16 %v465
        %v812 = vunpack.c.h.b16 %v465
        %v813 = vunpack.c.l.b16 %v466
        %v814 = vunpack.c.h.b16 %v466
        %v815 = vunpack.c.l.b16 %v467
        %v816 = vunpack.c.h.b16 %v467
        %v817 = vunpack.c.l.b16 %v468
        %v818 = vunpack.c.h.b16 %v468
        %v819 = vunpack.c.l.b16 %v469
        %v820 = vunpack.c.h.b16 %v469
        %v821 = vunpack.c.l.b16 %v470
        %v822 = vunpack.c.h.b16 %v470
        %v823 = vunpack.c.l.b16 %v471
        %v824 = vunpack.c.h.b16 %v471
        %v825 = vunpack.c.l.b16 %v472
        %v826 = vunpack.c.h.b16 %v472
        %v827 = vunpack.c.l.b16 %v473
        %v828 = vunpack.c.h.b16 %v473
        %v829 = vunpack.c.l.b16 %v474
        %v830 = vunpack.c.h.b16 %v474
        %v831 = vunpack.c.l.b16 %v475
        %v832 = vunpack.c.h.b16 %v475
        %v833 = vunpack.c.l.b16 %v476
        %v834 = vunpack.c.h.b16 %v476
        %v835 = vunpack.c.l.b16 %v477
        %v836 = vunpack.c.h.b16 %v477
        %v837 = vunpack.c.l.b16 %v478
        %v838 = vunpack.c.h.b16 %v478
        %v839 = vunpack.c.l.b16 %v479
        %v840 = vunpack.c.h.b16 %v479
        %v841 = vunpack.c.l.b16 %v480
        %v842 = vunpack.c.h.b16 %v480
        %v843 = vunpack.c.l.b16 %v481
        %v844 = vunpack.c.h.b16 %v481
        %v845 = vunpack.c.l.b16 %v482
        %v846 = vunpack.c.h.b16 %v482
        %v847 = vunpack.c.l.b16 %v483
        %v848 = vunpack.c.h.b16 %v483
        %v849 = vunpack.c.l.b16 %v484
        %v850 = vunpack.c.h.b16 %v484
        %v851 = vunpack.c.l.b16 %v485
        %v852 = vunpack.c.h.b16 %v485
        %v853 = vunpack.c.l.b16 %v486
        %v854 = vunpack.c.h.b16 %v486
        %v855 = vunpack.c.l.b16 %v487
        %v856 = vunpack.c.h.b16 %v487
        %v857 = vunpack.c.l.b16 %v488
        %v858 = vunpack.c.h.b16 %v488
        %v859 = vunpack.c.l.b16 %v489
        %v860 = vunpack.c.h.b16 %v489
        %v861 = vunpack.c.l.b16 %v490
        %v862 = vunpack.c.h.b16 %v490
        %v863 = vunpack.c.l.b16 %v491
        %v864 = vunpack.c.h.b16 %v491
        %v865 = vunpack.c.l.b16 %v492
        %v866 = vunpack.c.h.b16 %v492
        %v867 = vunpack.c.l.b16 %v493
        %v868 = vunpack.c.h.b16 %v493
        %v869 = vunpack.c.l.b16 %v494
        %v870 = vunpack.c.h.b16 %v494
        %v871 = vunpack.c.l.b16 %v495
        %v872 = vunpack.c.h.b16 %v495
        %v873 = vunpack.c.l.b16 %v496
        %v874 = vunpack.c.h.b16 %v496
        %v875 = vunpack.c.l.b16 %v497
        %v876 = vunpack.c.h.b16 %v497
        %v877 = vunpack.c.l.b16 %v498
        %v878 = vunpack.c.h.b16 %v498
        %v879 = vunpack.c.l.b16 %v499
        %v880 = vunpack.c.h.b16 %v499
        %v881 = vunpack.c.l.b16 %v500
        %v882 = vunpack.c.h.b16 %v500
        %v883 = vunpack.c.l.b16 %v501
        %v884 = vunpack.c.h.b16 %v501
        %v885 = vunpack.c.l.b16 %v502
        %v886 = vunpack.c.h.b16 %v502
        %v887 = vunpack.c.l.b16 %v503
        %v888 = vunpack.c.h.b16 %v503
        %v889 = vunpack.c.l.b16 %v504
        %v890 = vunpack.c.h.b16 %v504
        %v891 = vunpack.c.l.b16 %v505
        %v892 = vunpack.c.h.b16 %v505
        %v893 = vunpack.c.l.b16 %v506
        %v894 = vunpack.c.h.b16 %v506
        %v895 = vunpack.c.l.b16 %v507
        %v896 = vunpack.c.h.b16 %v507
        %v897 = vunpack.c.l.b16 %v508
        %v898 = vunpack.c.h.b16 %v508
        %v899 = vunpack.c.l.b16 %v509
        %v900 = vunpack.c.h.b16 %v509
        %v901 = vunpack.c.l.b16 %v510
        %v902 = vunpack.c.h.b16 %v510
        %v903 = vunpack.c.l.b16 %v511
        %v904 = vunpack.c.h.b16 %v511
        %v905 = vunpack.c.l.b16 %v512
        %v906 = vunpack.c.h.b16 %v512
        %v907 = vunpack.c.l.b16 %v513
        %v908 = vunpack.c.h.b16 %v513
        %v909 = vpack.c.b16 %v723, %v717
        %v910 = vpack.c.b16 %v724, %v718
        %v911 = vpack.c.b16 %v725, %v719
        %v912 = vpack.c.b16 %v726, %v720
        %v913 = vpack.c.b16 %v727, %v721
        %v914 = vpack.c.b16 %v728, %v722
        %v915 = vpack.c.b16 %v735, %v729
        %v916 = vpack.c.b16 %v736, %v730
        %v917 = vpack.c.b16 %v737, %v731
        %v918 = vpack.c.b16 %v738, %v732
        %v919 = vpack.c.b16 %v739, %v733
        %v920 = vpack.c.b16 %v740, %v734
        %v921 = vpack.c.b16 %v747, %v741
        %v922 = vpack.c.b16 %v748, %v742
        %v923 = vpack.c.b16 %v749, %v743
        %v924 = vpack.c.b16 %v750, %v744
        %v925 = vpack.c.b16 %v751, %v745
        %v926 = vpack.c.b16 %v752, %v746
        %v927 = vpack.c.b16 %v759, %v753
        %v928 = vpack.c.b16 %v760, %v754
        %v929 = vpack.c.b16 %v761, %v755
        %v930 = vpack.c.b16 %v762, %v756
        %v931 = vpack.c.b16 %v763, %v757
        %v932 = vpack.c.b16 %v764, %v758
        %v933 = vpack.c.b16 %v771, %v765
        %v934 = vpack.c.b16 %v772, %v766
        %v935 = vpack.c.b16 %v773, %v767
        %v936 = vpack.c.b16 %v774, %v768
        %v937 = vpack.c.b16 %v775, %v769
        %v938 = vpack.c.b16 %v776, %v770
        %v939 = vpack.c.b16 %v783, %v777
        %v940 = vpack.c.b16 %v784, %v778
        %v941 = vpack.c.b16 %v785, %v779
        %v942 = vpack.c.b16 %v786, %v780
        %v943 = vpack.c.b16 %v787, %v781
        %v944 = vpack.c.b16 %v788, %v782
        %v945 = vpack.c.b16 %v795, %v789
        %v946 = vpack.c.b16 %v796, %v790
        %v947 = vpack.c.b16 %v797, %v791
        %v948 = vpack.c.b16 %v798, %v792
        %v949 = vpack.c.b16 %v799, %v793
        %v950 = vpack.c.b16 %v800, %v794
        %v951 = vpack.c.b16 %v807, %v801
        %v952 = vpack.c.b16 %v808, %v802
        %v953 = vpack.c.b16 %v809, %v803
        %v954 = vpack.c.b16 %v810, %v804
        %v955 = vpack.c.b16 %v811, %v805
        %v956 = vpack.c.b16 %v812, %v806
        %v957 = vpack.c.b16 %v819, %v813
        %v958 = vpack.c.b16 %v820, %v814
        %v959 = vpack.c.b16 %v821, %v815
        %v960 = vpack.c.b16 %v822, %v816
        %v961 = vpack.c.b16 %v823, %v817
        %v962 = vpack.c.b16 %v824, %v818
        %v963 = vpack.c.b16 %v831, %v825
        %v964 = vpack.c.b16 %v832, %v826
        %v965 = vpack.c.b16 %v833, %v827
        %v966 = vpack.c.b16 %v834, %v828
        %v967 = vpack.c.b16 %v835, %v829
        %v968 = vpack.c.b16 %v836, %v830
        %v969 = vpack.c.b16 %v843, %v837
        %v970 = vpack.c.b16 %v844, %v838
        %v971 = vpack.c.b16 %v845, %v839
        %v972 = vpack.c.b16 %v846, %v840
        %v973 = vpack.c.b16 %v847, %v841
        %v974 = vpack.c.b16 %v848, %v842
        %v975 = vpack.c.b16 %v855, %v849
        %v976 = vpack.c.b16 %v856, %v850
        %v977 = vpack.c.b16 %v857, %v851
        %v978 = vpack.c.b16 %v858, %v852
        %v979 = vpack.c.b16 %v859, %v853
        %v980 = vpack.c.b16 %v860, %v854
        %v981 = vpack.c.b16 %v867, %v861
        %v982 = vpack.c.b16 %v868, %v862
        %v983 = vpack.c.b16 %v869, %v863
        %v984 = vpack.c.b16 %v870, %v864
        %v985 = vpack.c.b16 %v871, %v865
        %v986 = vpack.c.b16 %v872, %v866
        %v987 = vpack.c.b16 %v879, %v873
        %v988 = vpack.c.b16 %v880, %v874
        %v989 = vpack.c.b16 %v881, %v875
        %v990 = vpack.c.b16 %v882, %v876
        %v991 = vpack.c.b16 %v883, %v877
        %v992 = vpack.c.b16 %v884, %v878
        %v993 = vpack.c.b16 %v891, %v885
        %v994 = vpack.c.b16 %v892, %v886
        %v995 = vpack.c.b16 %v893, %v887
        %v996 = vpack.c.b16 %v894, %v888
        %v997 = vpack.c.b16 %v895, %v889
        %v998 = vpack.c.b16 %v896, %v890
        %v999 = vpack.c.b16 %v903, %v897
        %v1000 = vpack.c.b16 %v904, %v898
        %v1001 = vpack.c.b16 %v905, %v899
        %v1002 = vpack.c.b16 %v906, %v900
        %v1003 = vpack.c.b16 %v907, %v901
        %v1004 = vpack.c.b16 %v908, %v902
        %v1197 = vunpack.c.l.b16 %v514
        %v1198 = vunpack.c.h.b16 %v514
        %v1199 = vunpack.c.l.b16 %v515
        %v1200 = vunpack.c.h.b16 %v515
        %v1201 = vunpack.c.l.b16 %v516
        %v1202 = vunpack.c.h.b16 %v516
        %v1203 = vunpack.c.l.b16 %v517
        %v1204 = vunpack.c.h.b16 %v517
        %v1205 = vunpack.c.l.b16 %v518
        %v1206 = vunpack.c.h.b16 %v518
        %v1207 = vunpack.c.l.b16 %v519
        %v1208 = vunpack.c.h.b16 %v519
        %v1209 = vunpack.c.l.b16 %v520
        %v1210 = vunpack.c.h.b16 %v520
        %v1211 = vunpack.c.l.b16 %v521
        %v1212 = vunpack.c.h.b16 %v521
        %v1213 = vunpack.c.l.b16 %v522
        %v1214 = vunpack.c.h.b16 %v522
        %v1215 = vunpack.c.l.b16 %v523
        %v1216 = vunpack.c.h.b16 %v523
        %v1217 = vunpack.c.l.b16 %v524
        %v1218 = vunpack.c.h.b16 %v524
        %v1219 = vunpack.c.l.b16 %v525
        %v1220 = vunpack.c.h.b16 %v525
        %v1221 = vunpack.c.l.b16 %v526
        %v1222 = vunpack.c.h.b16 %v526
        %v1223 = vunpack.c.l.b16 %v527
        %v1224 = vunpack.c.h.b16 %v527
        %v1225 = vunpack.c.l.b16 %v528
        %v1226 = vunpack.c.h.b16 %v528
        %v1227 = vunpack.c.l.b16 %v529
        %v1228 = vunpack.c.h.b16 %v529
        %v1229 = vunpack.c.l.b16 %v530
        %v1230 = vunpack.c.h.b16 %v530
        %v1231 = vunpack.c.l.b16 %v531
        %v1232 = vunpack.c.h.b16 %v531
        %v1233 = vunpack.c.l.b16 %v532
        %v1234 = vunpack.c.h.b16 %v532
        %v1235 = vunpack.c.l.b16 %v533
        %v1236 = vunpack.c.h.b16 %v533
        %v1237 = vunpack.c.l.b16 %v534
        %v1238 = vunpack.c.h.b16 %v534
        %v1239 = vunpack.c.l.b16 %v535
        %v1240 = vunpack.c.h.b16 %v535
        %v1241 = vunpack.c.l.b16 %v536
        %v1242 = vunpack.c.h.b16 %v536
        %v1243 = vunpack.c.l.b16 %v537
        %v1244 = vunpack.c.h.b16 %v537
        %v1245 = vunpack.c.l.b16 %v538
        %v1246 = vunpack.c.h.b16 %v538
        %v1247 = vunpack.c.l.b16 %v539
        %v1248 = vunpack.c.h.b16 %v539
        %v1249 = vunpack.c.l.b16 %v540
        %v1250 = vunpack.c.h.b16 %v540
        %v1251 = vunpack.c.l.b16 %v541
        %v1252 = vunpack.c.h.b16 %v541
        %v1253 = vunpack.c.l.b16 %v542
        %v1254 = vunpack.c.h.b16 %v542
        %v1255 = vunpack.c.l.b16 %v543
        %v1256 = vunpack.c.h.b16 %v543
        %v1257 = vunpack.c.l.b16 %v544
        %v1258 = vunpack.c.h.b16 %v544
        %v1259 = vunpack.c.l.b16 %v545
        %v1260 = vunpack.c.h.b16 %v545
        %v1261 = vunpack.c.l.b16 %v546
        %v1262 = vunpack.c.h.b16 %v546
        %v1263 = vunpack.c.l.b16 %v547
        %v1264 = vunpack.c.h.b16 %v547
        %v1265 = vunpack.c.l.b16 %v548
        %v1266 = vunpack.c.h.b16 %v548
        %v1267 = vunpack.c.l.b16 %v549
        %v1268 = vunpack.c.h.b16 %v549
        %v1269 = vunpack.c.l.b16 %v550
        %v1270 = vunpack.c.h.b16 %v550
        %v1271 = vunpack.c.l.b16 %v551
        %v1272 = vunpack.c.h.b16 %v551
        %v1273 = vunpack.c.l.b16 %v552
        %v1274 = vunpack.c.h.b16 %v552
        %v1275 = vunpack.c.l.b16 %v553
        %v1276 = vunpack.c.h.b16 %v553
        %v1277 = vunpack.c.l.b16 %v554
        %v1278 = vunpack.c.h.b16 %v554
        %v1279 = vunpack.c.l.b16 %v555
        %v1280 = vunpack.c.h.b16 %v555
        %v1281 = vunpack.c.l.b16 %v556
        %v1282 = vunpack.c.h.b16 %v556
        %v1283 = vunpack.c.l.b16 %v557
        %v1284 = vunpack.c.h.b16 %v557
        %v1285 = vunpack.c.l.b16 %v558
        %v1286 = vunpack.c.h.b16 %v558
        %v1287 = vunpack.c.l.b16 %v559
        %v1288 = vunpack.c.h.b16 %v559
        %v1289 = vunpack.c.l.b16 %v560
        %v1290 = vunpack.c.h.b16 %v560
        %v1291 = vunpack.c.l.b16 %v561
        %v1292 = vunpack.c.h.b16 %v561
        %v1293 = vunpack.c.l.b16 %v562
        %v1294 = vunpack.c.h.b16 %v562
        %v1295 = vunpack.c.l.b16 %v563
        %v1296 = vunpack.c.h.b16 %v563
        %v1297 = vunpack.c.l.b16 %v564
        %v1298 = vunpack.c.h.b16 %v564
        %v1299 = vunpack.c.l.b16 %v565
        %v1300 = vunpack.c.h.b16 %v565
        %v1301 = vunpack.c.l.b16 %v566
        %v1302 = vunpack.c.h.b16 %v566
        %v1303 = vunpack.c.l.b16 %v567
        %v1304 = vunpack.c.h.b16 %v567
        %v1305 = vunpack.c.l.b16 %v568
        %v1306 = vunpack.c.h.b16 %v568
        %v1307 = vunpack.c.l.b16 %v569
        %v1308 = vunpack.c.h.b16 %v569
        %v1309 = vunpack.c.l.b16 %v570
        %v1310 = vunpack.c.h.b16 %v570
        %v1311 = vunpack.c.l.b16 %v571
        %v1312 = vunpack.c.h.b16 %v571
        %v1313 = vunpack.c.l.b16 %v572
        %v1314 = vunpack.c.h.b16 %v572
        %v1315 = vunpack.c.l.b16 %v573
        %v1316 = vunpack.c.h.b16 %v573
        %v1317 = vunpack.c.l.b16 %v574
        %v1318 = vunpack.c.h.b16 %v574
        %v1319 = vunpack.c.l.b16 %v575
        %v1320 = vunpack.c.h.b16 %v575
        %v1321 = vunpack.c.l.b16 %v576
        %v1322 = vunpack.c.h.b16 %v576
        %v1323 = vunpack.c.l.b16 %v577
        %v1324 = vunpack.c.h.b16 %v577
        %v1325 = vunpack.c.l.b16 %v578
        %v1326 = vunpack.c.h.b16 %v578
        %v1327 = vunpack.c.l.b16 %v579
        %v1328 = vunpack.c.h.b16 %v579
        %v1329 = vunpack.c.l.b16 %v580
        %v1330 = vunpack.c.h.b16 %v580
        %v1331 = vunpack.c.l.b16 %v581
        %v1332 = vunpack.c.h.b16 %v581
        %v1333 = vunpack.c.l.b16 %v582
        %v1334 = vunpack.c.h.b16 %v582
        %v1335 = vunpack.c.l.b16 %v583
        %v1336 = vunpack.c.h.b16 %v583
        %v1337 = vunpack.c.l.b16 %v584
        %v1338 = vunpack.c.h.b16 %v584
        %v1339 = vunpack.c.l.b16 %v585
        %v1340 = vunpack.c.h.b16 %v585
        %v1341 = vunpack.c.l.b16 %v586
        %v1342 = vunpack.c.h.b16 %v586
        %v1343 = vunpack.c.l.b16 %v587
        %v1344 = vunpack.c.h.b16 %v587
        %v1345 = vunpack.c.l.b16 %v588
        %v1346 = vunpack.c.h.b16 %v588
        %v1347 = vunpack.c.l.b16 %v589
        %v1348 = vunpack.c.h.b16 %v589
        %v1349 = vunpack.c.l.b16 %v590
        %v1350 = vunpack.c.h.b16 %v590
        %v1351 = vunpack.c.l.b16 %v591
        %v1352 = vunpack.c.h.b16 %v591
        %v1353 = vunpack.c.l.b16 %v592
        %v1354 = vunpack.c.h.b16 %v592
        %v1355 = vunpack.c.l.b16 %v593
        %v1356 = vunpack.c.h.b16 %v593
        %v1357 = vunpack.c.l.b16 %v594
        %v1358 = vunpack.c.h.b16 %v594
        %v1359 = vunpack.c.l.b16 %v595
        %v1360 = vunpack.c.h.b16 %v595
        %v1361 = vunpack.c.l.b16 %v596
        %v1362 = vunpack.c.h.b16 %v596
        %v1363 = vunpack.c.l.b16 %v597
        %v1364 = vunpack.c.h.b16 %v597
        %v1365 = vunpack.c.l.b16 %v598
        %v1366 = vunpack.c.h.b16 %v598
        %v1367 = vunpack.c.l.b16 %v599
        %v1368 = vunpack.c.h.b16 %v599
        %v1369 = vunpack.c.l.b16 %v600
        %v1370 = vunpack.c.h.b16 %v600
        %v1371 = vunpack.c.l.b16 %v601
        %v1372 = vunpack.c.h.b16 %v601
        %v1373 = vunpack.c.l.b16 %v602
        %v1374 = vunpack.c.h.b16 %v602
        %v1375 = vunpack.c.l.b16 %v603
        %v1376 = vunpack.c.h.b16 %v603
        %v1377 = vunpack.c.l.b16 %v604
        %v1378 = vunpack.c.h.b16 %v604
        %v1379 = vunpack.c.l.b16 %v605
        %v1380 = vunpack.c.h.b16 %v605
        %v1381 = vunpack.c.l.b16 %v606
        %v1382 = vunpack.c.h.b16 %v606
        %v1383 = vunpack.c.l.b16 %v607
        %v1384 = vunpack.c.h.b16 %v607
        %v1385 = vunpack.c.l.b16 %v608
        %v1386 = vunpack.c.h.b16 %v608
        %v1387 = vunpack.c.l.b16 %v609
        %v1388 = vunpack.c.h.b16 %v609
        %v1389 = vpack.c.b16 %v1199, %v1197
        %v1390 = vpack.c.b16 %v1200, %v1198
        %v1391 = vpack.c.b16 %v1203, %v1201
        %v1392 = vpack.c.b16 %v1204, %v1202
        %v1393 = vpack.c.b16 %v1207, %v1205
        %v1394 = vpack.c.b16 %v1208, %v1206
        %v1395 = vpack.c.b16 %v1211, %v1209
        %v1396 = vpack.c.b16 %v1212, %v1210
        %v1397 = vpack.c.b16 %v1215, %v1213
        %v1398 = vpack.c.b16 %v1216, %v1214
        %v1399 = vpack.c.b16 %v1219, %v1217
        %v1400 = vpack.c.b16 %v1220, %v1218
        %v1401 = vpack.c.b16 %v1223, %v1221
        %v1402 = vpack.c.b16 %v1224, %v1222
        %v1403 = vpack.c.b16 %v1227, %v1225
        %v1404 = vpack.c.b16 %v1228, %v1226
        %v1405 = vpack.c.b16 %v1231, %v1229
        %v1406 = vpack.c.b16 %v1232, %v1230
        %v1407 = vpack.c.b16 %v1235, %v1233
        %v1408 = vpack.c.b16 %v1236, %v1234
        %v1409 = vpack.c.b16 %v1239, %v1237
        %v1410 = vpack.c.b16 %v1240, %v1238
        %v1411 = vpack.c.b16 %v1243, %v1241
        %v1412 = vpack.c.b16 %v1244, %v1242
        %v1413 = vpack.c.b16 %v1247, %v1245
        %v1414 = vpack.c.b16 %v1248, %v1246
        %v1415 = vpack.c.b16 %v1251, %v1249
        %v1416 = vpack.c.b16 %v1252, %v1250
        %v1417 = vpack.c.b16 %v1255, %v1253
        %v1418 = vpack.c.b16 %v1256, %v1254
        %v1419 = vpack.c.b16 %v1259, %v1257
        %v1420 = vpack.c.b16 %v1260, %v1258
        %v1421 = vpack.c.b16 %v1263, %v1261
        %v1422 = vpack.c.b16 %v1264, %v1262
        %v1423 = vpack.c.b16 %v1267, %v1265
        %v1424 = vpack.c.b16 %v1268, %v1266
        %v1425 = vpack.c.b16 %v1271, %v1269
        %v1426 = vpack.c.b16 %v1272, %v1270
        %v1427 = vpack.c.b16 %v1275, %v1273
        %v1428 = vpack.c.b16 %v1276, %v1274
        %v1429 = vpack.c.b16 %v1279, %v1277
        %v1430 = vpack.c.b16 %v1280, %v1278
        %v1431 = vpack.c.b16 %v1283, %v1281
        %v1432 = vpack.c.b16 %v1284, %v1282
        %v1433 = vpack.c.b16 %v1287, %v1285
        %v1434 = vpack.c.b16 %v1288, %v1286
        %v1435 = vpack.c.b16 %v1291, %v1289
        %v1436 = vpack.c.b16 %v1292, %v1290
        %v1437 = vpack.c.b16 %v1295, %v1293
        %v1438 = vpack.c.b16 %v1296, %v1294
        %v1439 = vpack.c.b16 %v1299, %v1297
        %v1440 = vpack.c.b16 %v1300, %v1298
        %v1441 = vpack.c.b16 %v1303, %v1301
        %v1442 = vpack.c.b16 %v1304, %v1302
        %v1443 = vpack.c.b16 %v1307, %v1305
        %v1444 = vpack.c.b16 %v1308, %v1306
        %v1445 = vpack.c.b16 %v1311, %v1309
        %v1446 = vpack.c.b16 %v1312, %v1310
        %v1447 = vpack.c.b16 %v1315, %v1313
        %v1448 = vpack.c.b16 %v1316, %v1314
        %v1449 = vpack.c.b16 %v1319, %v1317
        %v1450 = vpack.c.b16 %v1320, %v1318
        %v1451 = vpack.c.b16 %v1323, %v1321
        %v1452 = vpack.c.b16 %v1324, %v1322
        %v1453 = vpack.c.b16 %v1327, %v1325
        %v1454 = vpack.c.b16 %v1328, %v1326
        %v1455 = vpack.c.b16 %v1331, %v1329
        %v1456 = vpack.c.b16 %v1332, %v1330
        %v1457 = vpack.c.b16 %v1335, %v1333
        %v1458 = vpack.c.b16 %v1336, %v1334
        %v1459 = vpack.c.b16 %v1339, %v1337
        %v1460 = vpack.c.b16 %v1340, %v1338
        %v1461 = vpack.c.b16 %v1343, %v1341
        %v1462 = vpack.c.b16 %v1344, %v1342
        %v1463 = vpack.c.b16 %v1347, %v1345
        %v1464 = vpack.c.b16 %v1348, %v1346
        %v1465 = vpack.c.b16 %v1351, %v1349
        %v1466 = vpack.c.b16 %v1352, %v1350
        %v1467 = vpack.c.b16 %v1355, %v1353
        %v1468 = vpack.c.b16 %v1356, %v1354
        %v1469 = vpack.c.b16 %v1359, %v1357
        %v1470 = vpack.c.b16 %v1360, %v1358
        %v1471 = vpack.c.b16 %v1363, %v1361
        %v1472 = vpack.c.b16 %v1364, %v1362
        %v1473 = vpack.c.b16 %v1367, %v1365
        %v1474 = vpack.c.b16 %v1368, %v1366
        %v1475 = vpack.c.b16 %v1371, %v1369
        %v1476 = vpack.c.b16 %v1372, %v1370
        %v1477 = vpack.c.b16 %v1375, %v1373
        %v1478 = vpack.c.b16 %v1376, %v1374
        %v1479 = vpack.c.b16 %v1379, %v1377
        %v1480 = vpack.c.b16 %v1380, %v1378
        %v1481 = vpack.c.b16 %v1383, %v1381
        %v1482 = vpack.c.b16 %v1384, %v1382
        %v1483 = vpack.c.b16 %v1387, %v1385
        %v1484 = vpack.c.b16 %v1388, %v1386
        %1581 = vmatprep.subr.bf16.mxu0 %v1390
        %1582 = vmatpush1.bf16.msra.mxu0 %v1389
        %1583 = vmatprep.subr.bf16.mxu0 %v1392
        %1584 = vmatpush1.bf16.msra.mxu0 %v1391
        %1585 = vmatprep.subr.bf16.mxu0 %v1394
        %1586 = vmatpush1.bf16.msra.mxu0 %v1393
        %1587 = vmatprep.subr.bf16.mxu0 %v1396
        %1588 = vmatpush1.bf16.msra.mxu0 %v1395
        %1589 = vmatprep.subr.bf16.mxu0 %v1398
        %1590 = vmatpush1.bf16.msra.mxu0 %v1397
        %1591 = vmatprep.subr.bf16.mxu0 %v1400
        %1592 = vmatpush1.bf16.msra.mxu0 %v1399
        %1593 = vmatprep.subr.bf16.mxu0 %v1402
        %1594 = vmatpush1.bf16.msra.mxu0 %v1401
        %1595 = vmatprep.subr.bf16.mxu0 %v1404
        %1596 = vmatpush1.bf16.msra.mxu0 %v1403
        %1597 = vmatprep.subr.bf16.mxu0 %v1406
        %1598 = vmatpush1.bf16.msra.mxu0 %v1405
        %1599 = vmatprep.subr.bf16.mxu0 %v1408
        %1600 = vmatpush1.bf16.msra.mxu0 %v1407
        %1601 = vmatprep.subr.bf16.mxu0 %v1410
        %1602 = vmatpush1.bf16.msra.mxu0 %v1409
        %1603 = vmatprep.subr.bf16.mxu0 %v1412
        %1604 = vmatpush1.bf16.msra.mxu0 %v1411
        %1605 = vmatprep.subr.bf16.mxu0 %v1414
        %1606 = vmatpush1.bf16.msra.mxu0 %v1413
        %1607 = vmatprep.subr.bf16.mxu0 %v1416
        %1608 = vmatpush1.bf16.msra.mxu0 %v1415
        %1609 = vmatprep.subr.bf16.mxu0 %v1418
        %1610 = vmatpush1.bf16.msra.mxu0 %v1417
        %1611 = vmatprep.subr.bf16.mxu0 %v1420
        %1612 = vmatpush1.bf16.msra.mxu0 %v1419
        %1613 = vmatprep.mubr.bf16.mxu0 %v910
        %1614 = vmatmul.mubr.bf16.gmra.mrb[0].mxu0 %v909
        %v1615 = vpop.f32.mrb[0].mxu0
        %v1616 = vadd.f32 %v614, %v1615
        %v1617 = vpop.f32.mrb[0].mxu0
        %v1618 = vadd.f32 %v618, %v1617
        %v1619 = vpop.f32.mrb[0].mxu0
        %v1620 = vadd.f32 %v614, %v1619
        %v1621 = vpop.f32.mrb[0].mxu0
        %v1622 = vadd.f32 %v618, %v1621
        %1623 = vmatprep.mubr.bf16.mxu0 %v916
        %1624 = vmatmul.mubr.bf16.gmra.mrb[0].mxu0 %v915
        %v1625 = vpop.f32.mrb[0].mxu0
        %v1626 = vadd.f32 %v614, %v1625
        %v1627 = vpop.f32.mrb[0].mxu0
        %v1628 = vadd.f32 %v618, %v1627
        %v1629 = vpop.f32.mrb[0].mxu0
        %v1630 = vadd.f32 %v614, %v1629
        %v1631 = vpop.f32.mrb[0].mxu0
        %v1632 = vadd.f32 %v618, %v1631
        %1633 = vmatprep.mubr.bf16.mxu0 %v922
        %1634 = vmatmul.mubr.bf16.gmra.mrb[0].mxu0 %v921
        %v1635 = vpop.f32.mrb[0].mxu0
        %v1636 = vadd.f32 %v614, %v1635
        %v1637 = vpop.f32.mrb[0].mxu0
        %v1638 = vadd.f32 %v618, %v1637
        %v1639 = vpop.f32.mrb[0].mxu0
        %v1640 = vadd.f32 %v614, %v1639
        %v1641 = vpop.f32.mrb[0].mxu0
        %v1642 = vadd.f32 %v618, %v1641
        %1643 = vmatprep.mubr.bf16.mxu0 %v928
        %1644 = vmatmul.mubr.bf16.gmra.mrb[0].mxu0 %v927
        %v1645 = vpop.f32.mrb[0].mxu0
        %v1646 = vadd.f32 %v614, %v1645
        %v1647 = vpop.f32.mrb[0].mxu0
        %v1648 = vadd.f32 %v618, %v1647
        %v1649 = vpop.f32.mrb[0].mxu0
        %v1650 = vadd.f32 %v614, %v1649
        %v1651 = vpop.f32.mrb[0].mxu0
        %v1652 = vadd.f32 %v618, %v1651
        %1653 = vmatprep.mubr.bf16.mxu0 %v934
        %1654 = vmatmul.mubr.bf16.gmra.mrb[0].mxu0 %v933
        %v1655 = vpop.f32.mrb[0].mxu0
        %v1656 = vadd.f32 %v614, %v1655
        %v1657 = vpop.f32.mrb[0].mxu0
        %v1658 = vadd.f32 %v618, %v1657
        %v1659 = vpop.f32.mrb[0].mxu0
        %v1660 = vadd.f32 %v614, %v1659
        %v1661 = vpop.f32.mrb[0].mxu0
        %v1662 = vadd.f32 %v618, %v1661
        %1663 = vmatprep.mubr.bf16.mxu0 %v940
        %1664 = vmatmul.mubr.bf16.gmra.mrb[0].mxu0 %v939
        %v1665 = vpop.f32.mrb[0].mxu0
        %v1666 = vadd.f32 %v614, %v1665
        %v1667 = vpop.f32.mrb[0].mxu0
        %v1668 = vadd.f32 %v618, %v1667
        %v1669 = vpop.f32.mrb[0].mxu0
        %v1670 = vadd.f32 %v614, %v1669
        %v1671 = vpop.f32.mrb[0].mxu0
        %v1672 = vadd.f32 %v618, %v1671
        %1673 = vmatprep.mubr.bf16.mxu0 %v946
        %1674 = vmatmul.mubr.bf16.gmra.mrb[0].mxu0 %v945
        %v1675 = vpop.f32.mrb[0].mxu0
        %v1676 = vadd.f32 %v614, %v1675
        %v1677 = vpop.f32.mrb[0].mxu0
        %v1678 = vadd.f32 %v618, %v1677
        %v1679 = vpop.f32.mrb[0].mxu0
        %v1680 = vadd.f32 %v614, %v1679
        %v1681 = vpop.f32.mrb[0].mxu0
        %v1682 = vadd.f32 %v618, %v1681
        %1683 = vmatprep.mubr.bf16.mxu0 %v952
        %1684 = vmatmul.mubr.bf16.gmra.mrb[0].mxu0 %v951
        %v1685 = vpop.f32.mrb[0].mxu0
        %v1686 = vadd.f32 %v614, %v1685
        %v1687 = vpop.f32.mrb[0].mxu0
        %v1688 = vadd.f32 %v618, %v1687
        %v1689 = vpop.f32.mrb[0].mxu0
        %v1690 = vadd.f32 %v614, %v1689
        %v1691 = vpop.f32.mrb[0].mxu0
        %v1692 = vadd.f32 %v618, %v1691
        %1693 = vmatprep.mubr.bf16.mxu0 %v958
        %1694 = vmatmul.mubr.bf16.gmra.mrb[0].mxu0 %v957
        %v1695 = vpop.f32.mrb[0].mxu0
        %v1696 = vadd.f32 %v614, %v1695
        %v1697 = vpop.f32.mrb[0].mxu0
        %v1698 = vadd.f32 %v618, %v1697
        %v1699 = vpop.f32.mrb[0].mxu0
        %v1700 = vadd.f32 %v614, %v1699
        %v1701 = vpop.f32.mrb[0].mxu0
        %v1702 = vadd.f32 %v618, %v1701
        %1703 = vmatprep.mubr.bf16.mxu0 %v964
        %1704 = vmatmul.mubr.bf16.gmra.mrb[0].mxu0 %v963
        %v1705 = vpop.f32.mrb[0].mxu0
        %v1706 = vadd.f32 %v614, %v1705
        %v1707 = vpop.f32.mrb[0].mxu0
        %v1708 = vadd.f32 %v618, %v1707
        %v1709 = vpop.f32.mrb[0].mxu0
        %v1710 = vadd.f32 %v614, %v1709
        %v1711 = vpop.f32.mrb[0].mxu0
        %v1712 = vadd.f32 %v618, %v1711
        %1713 = vmatprep.mubr.bf16.mxu0 %v970
        %1714 = vmatmul.mubr.bf16.gmra.mrb[0].mxu0 %v969
        %v1715 = vpop.f32.mrb[0].mxu0
        %v1716 = vadd.f32 %v614, %v1715
        %v1717 = vpop.f32.mrb[0].mxu0
        %v1718 = vadd.f32 %v618, %v1717
        %v1719 = vpop.f32.mrb[0].mxu0
        %v1720 = vadd.f32 %v614, %v1719
        %v1721 = vpop.f32.mrb[0].mxu0
        %v1722 = vadd.f32 %v618, %v1721
        %1723 = vmatprep.mubr.bf16.mxu0 %v976
        %1724 = vmatmul.mubr.bf16.gmra.mrb[0].mxu0 %v975
        %v1725 = vpop.f32.mrb[0].mxu0
        %v1726 = vadd.f32 %v614, %v1725
        %v1727 = vpop.f32.mrb[0].mxu0
        %v1728 = vadd.f32 %v618, %v1727
        %v1729 = vpop.f32.mrb[0].mxu0
        %v1730 = vadd.f32 %v614, %v1729
        %v1731 = vpop.f32.mrb[0].mxu0
        %v1732 = vadd.f32 %v618, %v1731
        %1733 = vmatprep.mubr.bf16.mxu0 %v982
        %1734 = vmatmul.mubr.bf16.gmra.mrb[0].mxu0 %v981
        %v1735 = vpop.f32.mrb[0].mxu0
        %v1736 = vadd.f32 %v614, %v1735
        %v1737 = vpop.f32.mrb[0].mxu0
        %v1738 = vadd.f32 %v618, %v1737
        %v1739 = vpop.f32.mrb[0].mxu0
        %v1740 = vadd.f32 %v614, %v1739
        %v1741 = vpop.f32.mrb[0].mxu0
        %v1742 = vadd.f32 %v618, %v1741
        %1743 = vmatprep.mubr.bf16.mxu0 %v988
        %1744 = vmatmul.mubr.bf16.gmra.mrb[0].mxu0 %v987
        %v1745 = vpop.f32.mrb[0].mxu0
        %v1746 = vadd.f32 %v614, %v1745
        %v1747 = vpop.f32.mrb[0].mxu0
        %v1748 = vadd.f32 %v618, %v1747
        %v1749 = vpop.f32.mrb[0].mxu0
        %v1750 = vadd.f32 %v614, %v1749
        %v1751 = vpop.f32.mrb[0].mxu0
        %v1752 = vadd.f32 %v618, %v1751
        %1753 = vmatprep.mubr.bf16.mxu0 %v994
        %1754 = vmatmul.mubr.bf16.gmra.mrb[0].mxu0 %v993
        %v1755 = vpop.f32.mrb[0].mxu0
        %v1756 = vadd.f32 %v614, %v1755
        %v1757 = vpop.f32.mrb[0].mxu0
        %v1758 = vadd.f32 %v618, %v1757
        %v1759 = vpop.f32.mrb[0].mxu0
        %v1760 = vadd.f32 %v614, %v1759
        %v1761 = vpop.f32.mrb[0].mxu0
        %v1762 = vadd.f32 %v618, %v1761
        %1763 = vmatprep.mubr.bf16.mxu0 %v1000
        %1764 = vmatmul.mubr.bf16.gmra.mrb[0].mxu0 %v999
        %v1765 = vpop.f32.mrb[0].mxu0
        %v1766 = vadd.f32 %v614, %v1765
        %v1767 = vpop.f32.mrb[0].mxu0
        %v1768 = vadd.f32 %v618, %v1767
        %v1769 = vpop.f32.mrb[0].mxu0
        %v1770 = vadd.f32 %v614, %v1769
        %v1771 = vpop.f32.mrb[0].mxu0
        %v1772 = vadd.f32 %v618, %v1771
        %1773 = vdwg.mxu0
        %1774 = vmatprep.subr.bf16.mxu0 %v1422
        %1775 = vmatpush1.bf16.msra.mxu0 %v1421
        %1776 = vmatprep.subr.bf16.mxu0 %v1424
        %1777 = vmatpush1.bf16.msra.mxu0 %v1423
        %1778 = vmatprep.subr.bf16.mxu0 %v1426
        %1779 = vmatpush1.bf16.msra.mxu0 %v1425
        %1780 = vmatprep.subr.bf16.mxu0 %v1428
        %1781 = vmatpush1.bf16.msra.mxu0 %v1427
        %1782 = vmatprep.subr.bf16.mxu0 %v1430
        %1783 = vmatpush1.bf16.msra.mxu0 %v1429
        %1784 = vmatprep.subr.bf16.mxu0 %v1432
        %1785 = vmatpush1.bf16.msra.mxu0 %v1431
        %1786 = vmatprep.subr.bf16.mxu0 %v1434
        %1787 = vmatpush1.bf16.msra.mxu0 %v1433
        %1788 = vmatprep.subr.bf16.mxu0 %v1436
        %1789 = vmatpush1.bf16.msra.mxu0 %v1435
        %1790 = vmatprep.subr.bf16.mxu0 %v1438
        %1791 = vmatpush1.bf16.msra.mxu0 %v1437
        %1792 = vmatprep.subr.bf16.mxu0 %v1440
        %1793 = vmatpush1.bf16.msra.mxu0 %v1439
        %1794 = vmatprep.subr.bf16.mxu0 %v1442
        %1795 = vmatpush1.bf16.msra.mxu0 %v1441
        %1796 = vmatprep.subr.bf16.mxu0 %v1444
        %1797 = vmatpush1.bf16.msra.mxu0 %v1443
        %1798 = vmatprep.subr.bf16.mxu0 %v1446
        %1799 = vmatpush1.bf16.msra.mxu0 %v1445
        %1800 = vmatprep.subr.bf16.mxu0 %v1448
        %1801 = vmatpush1.bf16.msra.mxu0 %v1447
        %1802 = vmatprep.subr.bf16.mxu0 %v1450
        %1803 = vmatpush1.bf16.msra.mxu0 %v1449
        %1804 = vmatprep.subr.bf16.mxu0 %v1452
        %1805 = vmatpush1.bf16.msra.mxu0 %v1451
        %1806 = vmatprep.mubr.bf16.mxu0 %v912
        %1807 = vmatmul.mubr.bf16.gmra.mrb[0].mxu0 %v911
        %v1808 = vpop.f32.mrb[0].mxu0
        %v1809 = vadd.f32 %v1616, %v1808
        %v1810 = vpop.f32.mrb[0].mxu0
        %v1811 = vadd.f32 %v1618, %v1810
        %v1812 = vpop.f32.mrb[0].mxu0
        %v1813 = vadd.f32 %v1620, %v1812
        %v1814 = vpop.f32.mrb[0].mxu0
        %v1815 = vadd.f32 %v1622, %v1814
        %1816 = vmatprep.mubr.bf16.mxu0 %v918
        %1817 = vmatmul.mubr.bf16.gmra.mrb[0].mxu0 %v917
        %v1818 = vpop.f32.mrb[0].mxu0
        %v1819 = vadd.f32 %v1626, %v1818
        %v1820 = vpop.f32.mrb[0].mxu0
        %v1821 = vadd.f32 %v1628, %v1820
        %v1822 = vpop.f32.mrb[0].mxu0
        %v1823 = vadd.f32 %v1630, %v1822
        %v1824 = vpop.f32.mrb[0].mxu0
        %v1825 = vadd.f32 %v1632, %v1824
        %1826 = vmatprep.mubr.bf16.mxu0 %v924
        %1827 = vmatmul.mubr.bf16.gmra.mrb[0].mxu0 %v923
        %v1828 = vpop.f32.mrb[0].mxu0
        %v1829 = vadd.f32 %v1636, %v1828
        %v1830 = vpop.f32.mrb[0].mxu0
        %v1831 = vadd.f32 %v1638, %v1830
        %v1832 = vpop.f32.mrb[0].mxu0
        %v1833 = vadd.f32 %v1640, %v1832
        %v1834 = vpop.f32.mrb[0].mxu0
        %v1835 = vadd.f32 %v1642, %v1834
        %1836 = vmatprep.mubr.bf16.mxu0 %v930
        %1837 = vmatmul.mubr.bf16.gmra.mrb[0].mxu0 %v929
        %v1838 = vpop.f32.mrb[0].mxu0
        %v1839 = vadd.f32 %v1646, %v1838
        %v1840 = vpop.f32.mrb[0].mxu0
        %v1841 = vadd.f32 %v1648, %v1840
        %v1842 = vpop.f32.mrb[0].mxu0
        %v1843 = vadd.f32 %v1650, %v1842
        %v1844 = vpop.f32.mrb[0].mxu0
        %v1845 = vadd.f32 %v1652, %v1844
        %1846 = vmatprep.mubr.bf16.mxu0 %v936
        %1847 = vmatmul.mubr.bf16.gmra.mrb[0].mxu0 %v935
        %v1848 = vpop.f32.mrb[0].mxu0
        %v1849 = vadd.f32 %v1656, %v1848
        %v1850 = vpop.f32.mrb[0].mxu0
        %v1851 = vadd.f32 %v1658, %v1850
        %v1852 = vpop.f32.mrb[0].mxu0
        %v1853 = vadd.f32 %v1660, %v1852
        %v1854 = vpop.f32.mrb[0].mxu0
        %v1855 = vadd.f32 %v1662, %v1854
        %1856 = vmatprep.mubr.bf16.mxu0 %v942
        %1857 = vmatmul.mubr.bf16.gmra.mrb[0].mxu0 %v941
        %v1858 = vpop.f32.mrb[0].mxu0
        %v1859 = vadd.f32 %v1666, %v1858
        %v1860 = vpop.f32.mrb[0].mxu0
        %v1861 = vadd.f32 %v1668, %v1860
        %v1862 = vpop.f32.mrb[0].mxu0
        %v1863 = vadd.f32 %v1670, %v1862
        %v1864 = vpop.f32.mrb[0].mxu0
        %v1865 = vadd.f32 %v1672, %v1864
        %1866 = vmatprep.mubr.bf16.mxu0 %v948
        %1867 = vmatmul.mubr.bf16.gmra.mrb[0].mxu0 %v947
        %v1868 = vpop.f32.mrb[0].mxu0
        %v1869 = vadd.f32 %v1676, %v1868
        %v1870 = vpop.f32.mrb[0].mxu0
        %v1871 = vadd.f32 %v1678, %v1870
        %v1872 = vpop.f32.mrb[0].mxu0
        %v1873 = vadd.f32 %v1680, %v1872
        %v1874 = vpop.f32.mrb[0].mxu0
        %v1875 = vadd.f32 %v1682, %v1874
        %1876 = vmatprep.mubr.bf16.mxu0 %v954
        %1877 = vmatmul.mubr.bf16.gmra.mrb[0].mxu0 %v953
        %v1878 = vpop.f32.mrb[0].mxu0
        %v1879 = vadd.f32 %v1686, %v1878
        %v1880 = vpop.f32.mrb[0].mxu0
        %v1881 = vadd.f32 %v1688, %v1880
        %v1882 = vpop.f32.mrb[0].mxu0
        %v1883 = vadd.f32 %v1690, %v1882
        %v1884 = vpop.f32.mrb[0].mxu0
        %v1885 = vadd.f32 %v1692, %v1884
        %1886 = vmatprep.mubr.bf16.mxu0 %v960
        %1887 = vmatmul.mubr.bf16.gmra.mrb[0].mxu0 %v959
        %v1888 = vpop.f32.mrb[0].mxu0
        %v1889 = vadd.f32 %v1696, %v1888
        %v1890 = vpop.f32.mrb[0].mxu0
        %v1891 = vadd.f32 %v1698, %v1890
        %v1892 = vpop.f32.mrb[0].mxu0
        %v1893 = vadd.f32 %v1700, %v1892
        %v1894 = vpop.f32.mrb[0].mxu0
        %v1895 = vadd.f32 %v1702, %v1894
        %1896 = vmatprep.mubr.bf16.mxu0 %v966
        %1897 = vmatmul.mubr.bf16.gmra.mrb[0].mxu0 %v965
        %v1898 = vpop.f32.mrb[0].mxu0
        %v1899 = vadd.f32 %v1706, %v1898
        %v1900 = vpop.f32.mrb[0].mxu0
        %v1901 = vadd.f32 %v1708, %v1900
        %v1902 = vpop.f32.mrb[0].mxu0
        %v1903 = vadd.f32 %v1710, %v1902
        %v1904 = vpop.f32.mrb[0].mxu0
        %v1905 = vadd.f32 %v1712, %v1904
        %1906 = vmatprep.mubr.bf16.mxu0 %v972
        %1907 = vmatmul.mubr.bf16.gmra.mrb[0].mxu0 %v971
        %v1908 = vpop.f32.mrb[0].mxu0
        %v1909 = vadd.f32 %v1716, %v1908
        %v1910 = vpop.f32.mrb[0].mxu0
        %v1911 = vadd.f32 %v1718, %v1910
        %v1912 = vpop.f32.mrb[0].mxu0
        %v1913 = vadd.f32 %v1720, %v1912
        %v1914 = vpop.f32.mrb[0].mxu0
        %v1915 = vadd.f32 %v1722, %v1914
        %1916 = vmatprep.mubr.bf16.mxu0 %v978
        %1917 = vmatmul.mubr.bf16.gmra.mrb[0].mxu0 %v977
        %v1918 = vpop.f32.mrb[0].mxu0
        %v1919 = vadd.f32 %v1726, %v1918
        %v1920 = vpop.f32.mrb[0].mxu0
        %v1921 = vadd.f32 %v1728, %v1920
        %v1922 = vpop.f32.mrb[0].mxu0
        %v1923 = vadd.f32 %v1730, %v1922
        %v1924 = vpop.f32.mrb[0].mxu0
        %v1925 = vadd.f32 %v1732, %v1924
        %1926 = vmatprep.mubr.bf16.mxu0 %v984
        %1927 = vmatmul.mubr.bf16.gmra.mrb[0].mxu0 %v983
        %v1928 = vpop.f32.mrb[0].mxu0
        %v1929 = vadd.f32 %v1736, %v1928
        %v1930 = vpop.f32.mrb[0].mxu0
        %v1931 = vadd.f32 %v1738, %v1930
        %v1932 = vpop.f32.mrb[0].mxu0
        %v1933 = vadd.f32 %v1740, %v1932
        %v1934 = vpop.f32.mrb[0].mxu0
        %v1935 = vadd.f32 %v1742, %v1934
        %1936 = vmatprep.mubr.bf16.mxu0 %v990
        %1937 = vmatmul.mubr.bf16.gmra.mrb[0].mxu0 %v989
        %v1938 = vpop.f32.mrb[0].mxu0
        %v1939 = vadd.f32 %v1746, %v1938
        %v1940 = vpop.f32.mrb[0].mxu0
        %v1941 = vadd.f32 %v1748, %v1940
        %v1942 = vpop.f32.mrb[0].mxu0
        %v1943 = vadd.f32 %v1750, %v1942
        %v1944 = vpop.f32.mrb[0].mxu0
        %v1945 = vadd.f32 %v1752, %v1944
        %1946 = vmatprep.mubr.bf16.mxu0 %v996
        %1947 = vmatmul.mubr.bf16.gmra.mrb[0].mxu0 %v995
        %v1948 = vpop.f32.mrb[0].mxu0
        %v1949 = vadd.f32 %v1756, %v1948
        %v1950 = vpop.f32.mrb[0].mxu0
        %v1951 = vadd.f32 %v1758, %v1950
        %v1952 = vpop.f32.mrb[0].mxu0
        %v1953 = vadd.f32 %v1760, %v1952
        %v1954 = vpop.f32.mrb[0].mxu0
        %v1955 = vadd.f32 %v1762, %v1954
        %1956 = vmatprep.mubr.bf16.mxu0 %v1002
        %1957 = vmatmul.mubr.bf16.gmra.mrb[0].mxu0 %v1001
        %v1958 = vpop.f32.mrb[0].mxu0
        %v1959 = vadd.f32 %v1766, %v1958
        %v1960 = vpop.f32.mrb[0].mxu0
        %v1961 = vadd.f32 %v1768, %v1960
        %v1962 = vpop.f32.mrb[0].mxu0
        %v1963 = vadd.f32 %v1770, %v1962
        %v1964 = vpop.f32.mrb[0].mxu0
        %v1965 = vadd.f32 %v1772, %v1964
        %1966 = vdwg.mxu0
        %1967 = vmatprep.subr.bf16.mxu0 %v1454
        %1968 = vmatpush1.bf16.msra.mxu0 %v1453
        %1969 = vmatprep.subr.bf16.mxu0 %v1456
        %1970 = vmatpush1.bf16.msra.mxu0 %v1455
        %1971 = vmatprep.subr.bf16.mxu0 %v1458
        %1972 = vmatpush1.bf16.msra.mxu0 %v1457
        %1973 = vmatprep.subr.bf16.mxu0 %v1460
        %1974 = vmatpush1.bf16.msra.mxu0 %v1459
        %1975 = vmatprep.subr.bf16.mxu0 %v1462
        %1976 = vmatpush1.bf16.msra.mxu0 %v1461
        %1977 = vmatprep.subr.bf16.mxu0 %v1464
        %1978 = vmatpush1.bf16.msra.mxu0 %v1463
        %1979 = vmatprep.subr.bf16.mxu0 %v1466
        %1980 = vmatpush1.bf16.msra.mxu0 %v1465
        %1981 = vmatprep.subr.bf16.mxu0 %v1468
        %1982 = vmatpush1.bf16.msra.mxu0 %v1467
        %1983 = vmatprep.subr.bf16.mxu0 %v1470
        %1984 = vmatpush1.bf16.msra.mxu0 %v1469
        %1985 = vmatprep.subr.bf16.mxu0 %v1472
        %1986 = vmatpush1.bf16.msra.mxu0 %v1471
        %1987 = vmatprep.subr.bf16.mxu0 %v1474
        %1988 = vmatpush1.bf16.msra.mxu0 %v1473
        %1989 = vmatprep.subr.bf16.mxu0 %v1476
        %1990 = vmatpush1.bf16.msra.mxu0 %v1475
        %1991 = vmatprep.subr.bf16.mxu0 %v1478
        %1992 = vmatpush1.bf16.msra.mxu0 %v1477
        %1993 = vmatprep.subr.bf16.mxu0 %v1480
        %1994 = vmatpush1.bf16.msra.mxu0 %v1479
        %1995 = vmatprep.subr.bf16.mxu0 %v1482
        %1996 = vmatpush1.bf16.msra.mxu0 %v1481
        %1997 = vmatprep.subr.bf16.mxu0 %v1484
        %1998 = vmatpush1.bf16.msra.mxu0 %v1483
        %1999 = vmatprep.mubr.bf16.mxu0 %v914
        %2000 = vmatmul.mubr.bf16.gmra.mrb[0].mxu0 %v913
        %v2001 = vpop.f32.mrb[0].mxu0
        %v2002 = vadd.f32 %v1809, %v2001
        %v2003 = vpop.f32.mrb[0].mxu0
        %v2004 = vadd.f32 %v1811, %v2003
        %v2005 = vpop.f32.mrb[0].mxu0
        %v2006 = vadd.f32 %v1813, %v2005
        %v2007 = vpop.f32.mrb[0].mxu0
        %v2008 = vadd.f32 %v1815, %v2007
        %2009 = vmatprep.mubr.bf16.mxu0 %v920
        %2010 = vmatmul.mubr.bf16.gmra.mrb[0].mxu0 %v919
        %v2011 = vpop.f32.mrb[0].mxu0
        %v2012 = vadd.f32 %v1819, %v2011
        %v2013 = vpop.f32.mrb[0].mxu0
        %v2014 = vadd.f32 %v1821, %v2013
        %v2015 = vpop.f32.mrb[0].mxu0
        %v2016 = vadd.f32 %v1823, %v2015
        %v2017 = vpop.f32.mrb[0].mxu0
        %v2018 = vadd.f32 %v1825, %v2017
        %2019 = vmatprep.mubr.bf16.mxu0 %v926
        %2020 = vmatmul.mubr.bf16.gmra.mrb[0].mxu0 %v925
        %v2021 = vpop.f32.mrb[0].mxu0
        %v2022 = vadd.f32 %v1829, %v2021
        %v2023 = vpop.f32.mrb[0].mxu0
        %v2024 = vadd.f32 %v1831, %v2023
        %v2025 = vpop.f32.mrb[0].mxu0
        %v2026 = vadd.f32 %v1833, %v2025
        %v2027 = vpop.f32.mrb[0].mxu0
        %v2028 = vadd.f32 %v1835, %v2027
        %2029 = vmatprep.mubr.bf16.mxu0 %v932
        %2030 = vmatmul.mubr.bf16.gmra.mrb[0].mxu0 %v931
        %v2031 = vpop.f32.mrb[0].mxu0
        %v2032 = vadd.f32 %v1839, %v2031
        %v2033 = vpop.f32.mrb[0].mxu0
        %v2034 = vadd.f32 %v1841, %v2033
        %v2035 = vpop.f32.mrb[0].mxu0
        %v2036 = vadd.f32 %v1843, %v2035
        %v2037 = vpop.f32.mrb[0].mxu0
        %v2038 = vadd.f32 %v1845, %v2037
        %2039 = vmatprep.mubr.bf16.mxu0 %v938
        %2040 = vmatmul.mubr.bf16.gmra.mrb[0].mxu0 %v937
        %v2041 = vpop.f32.mrb[0].mxu0
        %v2042 = vadd.f32 %v1849, %v2041
        %v2043 = vpop.f32.mrb[0].mxu0
        %v2044 = vadd.f32 %v1851, %v2043
        %v2045 = vpop.f32.mrb[0].mxu0
        %v2046 = vadd.f32 %v1853, %v2045
        %v2047 = vpop.f32.mrb[0].mxu0
        %v2048 = vadd.f32 %v1855, %v2047
        %2049 = vmatprep.mubr.bf16.mxu0 %v944
        %2050 = vmatmul.mubr.bf16.gmra.mrb[0].mxu0 %v943
        %v2051 = vpop.f32.mrb[0].mxu0
        %v2052 = vadd.f32 %v1859, %v2051
        %v2053 = vpop.f32.mrb[0].mxu0
        %v2054 = vadd.f32 %v1861, %v2053
        %v2055 = vpop.f32.mrb[0].mxu0
        %v2056 = vadd.f32 %v1863, %v2055
        %v2057 = vpop.f32.mrb[0].mxu0
        %v2058 = vadd.f32 %v1865, %v2057
        %2059 = vmatprep.mubr.bf16.mxu0 %v950
        %2060 = vmatmul.mubr.bf16.gmra.mrb[0].mxu0 %v949
        %v2061 = vpop.f32.mrb[0].mxu0
        %v2062 = vadd.f32 %v1869, %v2061
        %v2063 = vpop.f32.mrb[0].mxu0
        %v2064 = vadd.f32 %v1871, %v2063
        %v2065 = vpop.f32.mrb[0].mxu0
        %v2066 = vadd.f32 %v1873, %v2065
        %v2067 = vpop.f32.mrb[0].mxu0
        %v2068 = vadd.f32 %v1875, %v2067
        %2069 = vmatprep.mubr.bf16.mxu0 %v956
        %2070 = vmatmul.mubr.bf16.gmra.mrb[0].mxu0 %v955
        %v2071 = vpop.f32.mrb[0].mxu0
        %v2072 = vadd.f32 %v1879, %v2071
        %v2073 = vpop.f32.mrb[0].mxu0
        %v2074 = vadd.f32 %v1881, %v2073
        %v2075 = vpop.f32.mrb[0].mxu0
        %v2076 = vadd.f32 %v1883, %v2075
        %v2077 = vpop.f32.mrb[0].mxu0
        %v2078 = vadd.f32 %v1885, %v2077
        %2079 = vmatprep.mubr.bf16.mxu0 %v962
        %2080 = vmatmul.mubr.bf16.gmra.mrb[0].mxu0 %v961
        %v2081 = vpop.f32.mrb[0].mxu0
        %v2082 = vadd.f32 %v1889, %v2081
        %v2083 = vpop.f32.mrb[0].mxu0
        %v2084 = vadd.f32 %v1891, %v2083
        %v2085 = vpop.f32.mrb[0].mxu0
        %v2086 = vadd.f32 %v1893, %v2085
        %v2087 = vpop.f32.mrb[0].mxu0
        %v2088 = vadd.f32 %v1895, %v2087
        %2089 = vmatprep.mubr.bf16.mxu0 %v968
        %2090 = vmatmul.mubr.bf16.gmra.mrb[0].mxu0 %v967
        %v2091 = vpop.f32.mrb[0].mxu0
        %v2092 = vadd.f32 %v1899, %v2091
        %v2093 = vpop.f32.mrb[0].mxu0
        %v2094 = vadd.f32 %v1901, %v2093
        %v2095 = vpop.f32.mrb[0].mxu0
        %v2096 = vadd.f32 %v1903, %v2095
        %v2097 = vpop.f32.mrb[0].mxu0
        %v2098 = vadd.f32 %v1905, %v2097
        %2099 = vmatprep.mubr.bf16.mxu0 %v974
        %2100 = vmatmul.mubr.bf16.gmra.mrb[0].mxu0 %v973
        %v2101 = vpop.f32.mrb[0].mxu0
        %v2102 = vadd.f32 %v1909, %v2101
        %v2103 = vpop.f32.mrb[0].mxu0
        %v2104 = vadd.f32 %v1911, %v2103
        %v2105 = vpop.f32.mrb[0].mxu0
        %v2106 = vadd.f32 %v1913, %v2105
        %v2107 = vpop.f32.mrb[0].mxu0
        %v2108 = vadd.f32 %v1915, %v2107
        %2109 = vmatprep.mubr.bf16.mxu0 %v980
        %2110 = vmatmul.mubr.bf16.gmra.mrb[0].mxu0 %v979
        %v2111 = vpop.f32.mrb[0].mxu0
        %v2112 = vadd.f32 %v1919, %v2111
        %v2113 = vpop.f32.mrb[0].mxu0
        %v2114 = vadd.f32 %v1921, %v2113
        %v2115 = vpop.f32.mrb[0].mxu0
        %v2116 = vadd.f32 %v1923, %v2115
        %v2117 = vpop.f32.mrb[0].mxu0
        %v2118 = vadd.f32 %v1925, %v2117
        %2119 = vmatprep.mubr.bf16.mxu0 %v986
        %2120 = vmatmul.mubr.bf16.gmra.mrb[0].mxu0 %v985
        %v2121 = vpop.f32.mrb[0].mxu0
        %v2122 = vadd.f32 %v1929, %v2121
        %v2123 = vpop.f32.mrb[0].mxu0
        %v2124 = vadd.f32 %v1931, %v2123
        %v2125 = vpop.f32.mrb[0].mxu0
        %v2126 = vadd.f32 %v1933, %v2125
        %v2127 = vpop.f32.mrb[0].mxu0
        %v2128 = vadd.f32 %v1935, %v2127
        %2129 = vmatprep.mubr.bf16.mxu0 %v992
        %2130 = vmatmul.mubr.bf16.gmra.mrb[0].mxu0 %v991
        %v2131 = vpop.f32.mrb[0].mxu0
        %v2132 = vadd.f32 %v1939, %v2131
        %v2133 = vpop.f32.mrb[0].mxu0
        %v2134 = vadd.f32 %v1941, %v2133
        %v2135 = vpop.f32.mrb[0].mxu0
        %v2136 = vadd.f32 %v1943, %v2135
        %v2137 = vpop.f32.mrb[0].mxu0
        %v2138 = vadd.f32 %v1945, %v2137
        %2139 = vmatprep.mubr.bf16.mxu0 %v998
        %2140 = vmatmul.mubr.bf16.gmra.mrb[0].mxu0 %v997
        %v2141 = vpop.f32.mrb[0].mxu0
        %v2142 = vadd.f32 %v1949, %v2141
        %v2143 = vpop.f32.mrb[0].mxu0
        %v2144 = vadd.f32 %v1951, %v2143
        %v2145 = vpop.f32.mrb[0].mxu0
        %v2146 = vadd.f32 %v1953, %v2145
        %v2147 = vpop.f32.mrb[0].mxu0
        %v2148 = vadd.f32 %v1955, %v2147
        %2149 = vmatprep.mubr.bf16.mxu0 %v1004
        %2150 = vmatmul.mubr.bf16.gmra.mrb[0].mxu0 %v1003
        %v2151 = vpop.f32.mrb[0].mxu0
        %v2152 = vadd.f32 %v1959, %v2151
        %v2153 = vpop.f32.mrb[0].mxu0
        %v2154 = vadd.f32 %v1961, %v2153
        %v2155 = vpop.f32.mrb[0].mxu0
        %v2156 = vadd.f32 %v1963, %v2155
        %v2157 = vpop.f32.mrb[0].mxu0
        %v2158 = vadd.f32 %v1965, %v2157
        %2159 = vdwg.mxu0
        %v2160 = vmax.f32 %v2002, 0.0
        %v2161 = vmax.f32 %v2004, 0.0
        %v2162 = vmax.f32 %v2006, 0.0
        %v2163 = vmax.f32 %v2008, 0.0
        %v2164 = vmax.f32 %v2012, 0.0
        %v2165 = vmax.f32 %v2014, 0.0
        %v2166 = vmax.f32 %v2016, 0.0
        %v2167 = vmax.f32 %v2018, 0.0
        %v2168 = vmax.f32 %v2022, 0.0
        %v2169 = vmax.f32 %v2024, 0.0
        %v2170 = vmax.f32 %v2026, 0.0
        %v2171 = vmax.f32 %v2028, 0.0
        %v2172 = vmax.f32 %v2032, 0.0
        %v2173 = vmax.f32 %v2034, 0.0
        %v2174 = vmax.f32 %v2036, 0.0
        %v2175 = vmax.f32 %v2038, 0.0
        %v2176 = vmax.f32 %v2042, 0.0
        %v2177 = vmax.f32 %v2044, 0.0
        %v2178 = vmax.f32 %v2046, 0.0
        %v2179 = vmax.f32 %v2048, 0.0
        %v2180 = vmax.f32 %v2052, 0.0
        %v2181 = vmax.f32 %v2054, 0.0
        %v2182 = vmax.f32 %v2056, 0.0
        %v2183 = vmax.f32 %v2058, 0.0
        %v2184 = vmax.f32 %v2062, 0.0
        %v2185 = vmax.f32 %v2064, 0.0
        %v2186 = vmax.f32 %v2066, 0.0
        %v2187 = vmax.f32 %v2068, 0.0
        %v2188 = vmax.f32 %v2072, 0.0
        %v2189 = vmax.f32 %v2074, 0.0
        %v2190 = vmax.f32 %v2076, 0.0
        %v2191 = vmax.f32 %v2078, 0.0
        %v2192 = vmax.f32 %v2082, 0.0
        %v2193 = vmax.f32 %v2084, 0.0
        %v2194 = vmax.f32 %v2086, 0.0
        %v2195 = vmax.f32 %v2088, 0.0
        %v2196 = vmax.f32 %v2092, 0.0
        %v2197 = vmax.f32 %v2094, 0.0
        %v2198 = vmax.f32 %v2096, 0.0
        %v2199 = vmax.f32 %v2098, 0.0
        %v2200 = vmax.f32 %v2102, 0.0
        %v2201 = vmax.f32 %v2104, 0.0
        %v2202 = vmax.f32 %v2106, 0.0
        %v2203 = vmax.f32 %v2108, 0.0
        %v2204 = vmax.f32 %v2112, 0.0
        %v2205 = vmax.f32 %v2114, 0.0
        %v2206 = vmax.f32 %v2116, 0.0
        %v2207 = vmax.f32 %v2118, 0.0
        %v2208 = vmax.f32 %v2122, 0.0
        %v2209 = vmax.f32 %v2124, 0.0
        %v2210 = vmax.f32 %v2126, 0.0
        %v2211 = vmax.f32 %v2128, 0.0
        %v2212 = vmax.f32 %v2132, 0.0
        %v2213 = vmax.f32 %v2134, 0.0
        %v2214 = vmax.f32 %v2136, 0.0
        %v2215 = vmax.f32 %v2138, 0.0
        %v2216 = vmax.f32 %v2142, 0.0
        %v2217 = vmax.f32 %v2144, 0.0
        %v2218 = vmax.f32 %v2146, 0.0
        %v2219 = vmax.f32 %v2148, 0.0
        %v2220 = vmax.f32 %v2152, 0.0
        %v2221 = vmax.f32 %v2154, 0.0
        %v2222 = vmax.f32 %v2156, 0.0
        %v2223 = vmax.f32 %v2158, 0.0
        %v2224 = vpack.c.bf16 %v2162, %v2160
        %v2225 = vpack.c.bf16 %v2163, %v2161
        %v2226 = vpack.c.bf16 %v2166, %v2164
        %v2227 = vpack.c.bf16 %v2167, %v2165
        %v2228 = vpack.c.bf16 %v2170, %v2168
        %v2229 = vpack.c.bf16 %v2171, %v2169
        %v2230 = vpack.c.bf16 %v2174, %v2172
        %v2231 = vpack.c.bf16 %v2175, %v2173
        %v2232 = vpack.c.bf16 %v2178, %v2176
        %v2233 = vpack.c.bf16 %v2179, %v2177
        %v2234 = vpack.c.bf16 %v2182, %v2180
        %v2235 = vpack.c.bf16 %v2183, %v2181
        %v2236 = vpack.c.bf16 %v2186, %v2184
        %v2237 = vpack.c.bf16 %v2187, %v2185
        %v2238 = vpack.c.bf16 %v2190, %v2188
        %v2239 = vpack.c.bf16 %v2191, %v2189
        %v2240 = vpack.c.bf16 %v2194, %v2192
        %v2241 = vpack.c.bf16 %v2195, %v2193
        %v2242 = vpack.c.bf16 %v2198, %v2196
        %v2243 = vpack.c.bf16 %v2199, %v2197
        %v2244 = vpack.c.bf16 %v2202, %v2200
        %v2245 = vpack.c.bf16 %v2203, %v2201
        %v2246 = vpack.c.bf16 %v2206, %v2204
        %v2247 = vpack.c.bf16 %v2207, %v2205
        %v2248 = vpack.c.bf16 %v2210, %v2208
        %v2249 = vpack.c.bf16 %v2211, %v2209
        %v2250 = vpack.c.bf16 %v2214, %v2212
        %v2251 = vpack.c.bf16 %v2215, %v2213
        %v2252 = vpack.c.bf16 %v2218, %v2216
        %v2253 = vpack.c.bf16 %v2219, %v2217
        %v2254 = vpack.c.bf16 %v2222, %v2220
        %v2255 = vpack.c.bf16 %v2223, %v2221
        %v2256 = vld [vmem:[#allocation4] sm:$0xf]
        %v2257 = vld [vmem:[#allocation4 + $0x4] sm:$0xf]
        %v2258 = vld [vmem:[#allocation4 + $0x8] sm:$0xf]
        %v2259 = vld [vmem:[#allocation4 + $0xc] sm:$0xf]
        %v2260 = vld [vmem:[#allocation4 + $0x10] sm:$0xf]
        %v2261 = vld [vmem:[#allocation4 + $0x14] sm:$0xf]
        %v2262 = vld [vmem:[#allocation4 + $0x18] sm:$0xf]
        %v2263 = vld [vmem:[#allocation4 + $0x1c] sm:$0xf]
        %v2264 = vld [vmem:[#allocation4 + $0x20] sm:$0xf]
        %v2265 = vld [vmem:[#allocation4 + $0x24] sm:$0xf]
        %v2266 = vld [vmem:[#allocation4 + $0x28] sm:$0xf]
        %v2267 = vld [vmem:[#allocation4 + $0x2c] sm:$0xf]
        %v2268 = vld [vmem:[#allocation4 + $0x30] sm:$0xf]
        %v2269 = vld [vmem:[#allocation4 + $0x34] sm:$0xf]
        %v2270 = vld [vmem:[#allocation4 + $0x38] sm:$0xf]
        %v2271 = vld [vmem:[#allocation4 + $0x3c] sm:$0xf]
        %v2272 = vld [vmem:[#allocation4 + $0x40] sm:$0xf]
        %v2273 = vld [vmem:[#allocation4 + $0x44] sm:$0xf]
        %v2274 = vld [vmem:[#allocation4 + $0x48] sm:$0xf]
        %v2275 = vld [vmem:[#allocation4 + $0x4c] sm:$0xf]
        %v2276 = vld [vmem:[#allocation4 + $0x50] sm:$0xf]
        %v2277 = vld [vmem:[#allocation4 + $0x54] sm:$0xf]
        %v2278 = vld [vmem:[#allocation4 + $0x58] sm:$0xf]
        %v2279 = vld [vmem:[#allocation4 + $0x5c] sm:$0xf]
        %v2280 = vld [vmem:[#allocation4 + $0x60] sm:$0xf]
        %v2281 = vld [vmem:[#allocation4 + $0x64] sm:$0xf]
        %v2282 = vld [vmem:[#allocation4 + $0x68] sm:$0xf]
        %v2283 = vld [vmem:[#allocation4 + $0x6c] sm:$0xf]
        %v2284 = vld [vmem:[#allocation4 + $0x70] sm:$0xf]
        %v2285 = vld [vmem:[#allocation4 + $0x74] sm:$0xf]
        %v2286 = vld [vmem:[#allocation4 + $0x78] sm:$0xf]
        %v2287 = vld [vmem:[#allocation4 + $0x7c] sm:$0xf]
        %v2288 = vlaneseq
        %v2289 = vshrl.u32 %v2288, 7
        %v2290 = vsub.s32 0, %v2289
        %v2291 = vrot.slane %v415, %v2290
        %v2324 = vunpack.c.l.b16 %v2256
        %v2325 = vunpack.c.l.b16 %v2257
        %v2326 = vunpack.c.l.b16 %v2258
        %v2327 = vunpack.c.l.b16 %v2259
        %v2328 = vunpack.c.l.b16 %v2260
        %v2329 = vunpack.c.l.b16 %v2261
        %v2330 = vunpack.c.l.b16 %v2262
        %v2331 = vunpack.c.l.b16 %v2263
        %v2332 = vunpack.c.l.b16 %v2264
        %v2333 = vunpack.c.l.b16 %v2265
        %v2334 = vunpack.c.l.b16 %v2266
        %v2335 = vunpack.c.l.b16 %v2267
        %v2336 = vunpack.c.l.b16 %v2268
        %v2337 = vunpack.c.l.b16 %v2269
        %v2338 = vunpack.c.l.b16 %v2270
        %v2339 = vunpack.c.l.b16 %v2271
        %v2340 = vunpack.c.l.b16 %v2272
        %v2341 = vunpack.c.l.b16 %v2273
        %v2342 = vunpack.c.l.b16 %v2274
        %v2343 = vunpack.c.l.b16 %v2275
        %v2344 = vunpack.c.l.b16 %v2276
        %v2345 = vunpack.c.l.b16 %v2277
        %v2346 = vunpack.c.l.b16 %v2278
        %v2347 = vunpack.c.l.b16 %v2279
        %v2348 = vunpack.c.l.b16 %v2280
        %v2349 = vunpack.c.l.b16 %v2281
        %v2350 = vunpack.c.l.b16 %v2282
        %v2351 = vunpack.c.l.b16 %v2283
        %v2352 = vunpack.c.l.b16 %v2284
        %v2353 = vunpack.c.l.b16 %v2285
        %v2354 = vunpack.c.l.b16 %v2286
        %v2355 = vunpack.c.l.b16 %v2287
        %v2356 = vpack.c.b16 %v2325, %v2324
        %v2357 = vpack.c.b16 %v2327, %v2326
        %v2358 = vpack.c.b16 %v2329, %v2328
        %v2359 = vpack.c.b16 %v2331, %v2330
        %v2360 = vpack.c.b16 %v2333, %v2332
        %v2361 = vpack.c.b16 %v2335, %v2334
        %v2362 = vpack.c.b16 %v2337, %v2336
        %v2363 = vpack.c.b16 %v2339, %v2338
        %v2364 = vpack.c.b16 %v2341, %v2340
        %v2365 = vpack.c.b16 %v2343, %v2342
        %v2366 = vpack.c.b16 %v2345, %v2344
        %v2367 = vpack.c.b16 %v2347, %v2346
        %v2368 = vpack.c.b16 %v2349, %v2348
        %v2369 = vpack.c.b16 %v2351, %v2350
        %v2370 = vpack.c.b16 %v2353, %v2352
        %v2371 = vpack.c.b16 %v2355, %v2354
        %2388 = vmatprep.subr.bf16.mxu0 0
        %2389 = vmatpush1.bf16.msra.mxu0 %v2356
        %2390 = vmatprep.subr.bf16.mxu0 0
        %2391 = vmatpush1.bf16.msra.mxu0 %v2357
        %2392 = vmatprep.subr.bf16.mxu0 0
        %2393 = vmatpush1.bf16.msra.mxu0 %v2358
        %2394 = vmatprep.subr.bf16.mxu0 0
        %2395 = vmatpush1.bf16.msra.mxu0 %v2359
        %2396 = vmatprep.subr.bf16.mxu0 0
        %2397 = vmatpush1.bf16.msra.mxu0 %v2360
        %2398 = vmatprep.subr.bf16.mxu0 0
        %2399 = vmatpush1.bf16.msra.mxu0 %v2361
        %2400 = vmatprep.subr.bf16.mxu0 0
        %2401 = vmatpush1.bf16.msra.mxu0 %v2362
        %2402 = vmatprep.subr.bf16.mxu0 0
        %2403 = vmatpush1.bf16.msra.mxu0 %v2363
        %2404 = vmatprep.subr.bf16.mxu0 0
        %2405 = vmatpush1.bf16.msra.mxu0 %v2364
        %2406 = vmatprep.subr.bf16.mxu0 0
        %2407 = vmatpush1.bf16.msra.mxu0 %v2365
        %2408 = vmatprep.subr.bf16.mxu0 0
        %2409 = vmatpush1.bf16.msra.mxu0 %v2366
        %2410 = vmatprep.subr.bf16.mxu0 0
        %2411 = vmatpush1.bf16.msra.mxu0 %v2367
        %2412 = vmatprep.subr.bf16.mxu0 0
        %2413 = vmatpush1.bf16.msra.mxu0 %v2368
        %2414 = vmatprep.subr.bf16.mxu0 0
        %2415 = vmatpush1.bf16.msra.mxu0 %v2369
        %2416 = vmatprep.subr.bf16.mxu0 0
        %2417 = vmatpush1.bf16.msra.mxu0 %v2370
        %2418 = vmatprep.subr.bf16.mxu0 0
        %2419 = vmatpush1.bf16.msra.mxu0 %v2371
        %2420 = vmatprep.mubr.bf16.mxu0 %v2225
        %2421 = vmatmul.mubr.bf16.gmra.mrb[0].mxu0 %v2224
        %v2422 = vpop.f32.mrb[0].mxu0
        %v2423 = vadd.f32 %v2291, %v2422
        %v2424 = vpop.f32.mrb[0].mxu0
        %v2425 = vpop.f32.mrb[0].mxu0
        %v2426 = vadd.f32 %v2291, %v2425
        %v2427 = vpop.f32.mrb[0].mxu0
        %2428 = vmatprep.mubr.bf16.mxu0 %v2227
        %2429 = vmatmul.mubr.bf16.gmra.mrb[0].mxu0 %v2226
        %v2430 = vpop.f32.mrb[0].mxu0
        %v2431 = vadd.f32 %v2291, %v2430
        %v2432 = vpop.f32.mrb[0].mxu0
        %v2433 = vpop.f32.mrb[0].mxu0
        %v2434 = vadd.f32 %v2291, %v2433
        %v2435 = vpop.f32.mrb[0].mxu0
        %2436 = vmatprep.mubr.bf16.mxu0 %v2229
        %2437 = vmatmul.mubr.bf16.gmra.mrb[0].mxu0 %v2228
        %v2438 = vpop.f32.mrb[0].mxu0
        %v2439 = vadd.f32 %v2291, %v2438
        %v2440 = vpop.f32.mrb[0].mxu0
        %v2441 = vpop.f32.mrb[0].mxu0
        %v2442 = vadd.f32 %v2291, %v2441
        %v2443 = vpop.f32.mrb[0].mxu0
        %2444 = vmatprep.mubr.bf16.mxu0 %v2231
        %2445 = vmatmul.mubr.bf16.gmra.mrb[0].mxu0 %v2230
        %v2446 = vpop.f32.mrb[0].mxu0
        %v2447 = vadd.f32 %v2291, %v2446
        %v2448 = vpop.f32.mrb[0].mxu0
        %v2449 = vpop.f32.mrb[0].mxu0
        %v2450 = vadd.f32 %v2291, %v2449
        %v2451 = vpop.f32.mrb[0].mxu0
        %2452 = vmatprep.mubr.bf16.mxu0 %v2233
        %2453 = vmatmul.mubr.bf16.gmra.mrb[0].mxu0 %v2232
        %v2454 = vpop.f32.mrb[0].mxu0
        %v2455 = vadd.f32 %v2291, %v2454
        %v2456 = vpop.f32.mrb[0].mxu0
        %v2457 = vpop.f32.mrb[0].mxu0
        %v2458 = vadd.f32 %v2291, %v2457
        %v2459 = vpop.f32.mrb[0].mxu0
        %2460 = vmatprep.mubr.bf16.mxu0 %v2235
        %2461 = vmatmul.mubr.bf16.gmra.mrb[0].mxu0 %v2234
        %v2462 = vpop.f32.mrb[0].mxu0
        %v2463 = vadd.f32 %v2291, %v2462
        %v2464 = vpop.f32.mrb[0].mxu0
        %v2465 = vpop.f32.mrb[0].mxu0
        %v2466 = vadd.f32 %v2291, %v2465
        %v2467 = vpop.f32.mrb[0].mxu0
        %2468 = vmatprep.mubr.bf16.mxu0 %v2237
        %2469 = vmatmul.mubr.bf16.gmra.mrb[0].mxu0 %v2236
        %v2470 = vpop.f32.mrb[0].mxu0
        %v2471 = vadd.f32 %v2291, %v2470
        %v2472 = vpop.f32.mrb[0].mxu0
        %v2473 = vpop.f32.mrb[0].mxu0
        %v2474 = vadd.f32 %v2291, %v2473
        %v2475 = vpop.f32.mrb[0].mxu0
        %2476 = vmatprep.mubr.bf16.mxu0 %v2239
        %2477 = vmatmul.mubr.bf16.gmra.mrb[0].mxu0 %v2238
        %v2478 = vpop.f32.mrb[0].mxu0
        %v2479 = vadd.f32 %v2291, %v2478
        %v2480 = vpop.f32.mrb[0].mxu0
        %v2481 = vpop.f32.mrb[0].mxu0
        %v2482 = vadd.f32 %v2291, %v2481
        %v2483 = vpop.f32.mrb[0].mxu0
        %2484 = vmatprep.mubr.bf16.mxu0 %v2241
        %2485 = vmatmul.mubr.bf16.gmra.mrb[0].mxu0 %v2240
        %v2486 = vpop.f32.mrb[0].mxu0
        %v2487 = vadd.f32 %v2291, %v2486
        %v2488 = vpop.f32.mrb[0].mxu0
        %v2489 = vpop.f32.mrb[0].mxu0
        %v2490 = vadd.f32 %v2291, %v2489
        %v2491 = vpop.f32.mrb[0].mxu0
        %2492 = vmatprep.mubr.bf16.mxu0 %v2243
        %2493 = vmatmul.mubr.bf16.gmra.mrb[0].mxu0 %v2242
        %v2494 = vpop.f32.mrb[0].mxu0
        %v2495 = vadd.f32 %v2291, %v2494
        %v2496 = vpop.f32.mrb[0].mxu0
        %v2497 = vpop.f32.mrb[0].mxu0
        %v2498 = vadd.f32 %v2291, %v2497
        %v2499 = vpop.f32.mrb[0].mxu0
        %2500 = vmatprep.mubr.bf16.mxu0 %v2245
        %2501 = vmatmul.mubr.bf16.gmra.mrb[0].mxu0 %v2244
        %v2502 = vpop.f32.mrb[0].mxu0
        %v2503 = vadd.f32 %v2291, %v2502
        %v2504 = vpop.f32.mrb[0].mxu0
        %v2505 = vpop.f32.mrb[0].mxu0
        %v2506 = vadd.f32 %v2291, %v2505
        %v2507 = vpop.f32.mrb[0].mxu0
        %2508 = vmatprep.mubr.bf16.mxu0 %v2247
        %2509 = vmatmul.mubr.bf16.gmra.mrb[0].mxu0 %v2246
        %v2510 = vpop.f32.mrb[0].mxu0
        %v2511 = vadd.f32 %v2291, %v2510
        %v2512 = vpop.f32.mrb[0].mxu0
        %v2513 = vpop.f32.mrb[0].mxu0
        %v2514 = vadd.f32 %v2291, %v2513
        %v2515 = vpop.f32.mrb[0].mxu0
        %2516 = vmatprep.mubr.bf16.mxu0 %v2249
        %2517 = vmatmul.mubr.bf16.gmra.mrb[0].mxu0 %v2248
        %v2518 = vpop.f32.mrb[0].mxu0
        %v2519 = vadd.f32 %v2291, %v2518
        %v2520 = vpop.f32.mrb[0].mxu0
        %v2521 = vpop.f32.mrb[0].mxu0
        %v2522 = vadd.f32 %v2291, %v2521
        %v2523 = vpop.f32.mrb[0].mxu0
        %2524 = vmatprep.mubr.bf16.mxu0 %v2251
        %2525 = vmatmul.mubr.bf16.gmra.mrb[0].mxu0 %v2250
        %v2526 = vpop.f32.mrb[0].mxu0
        %v2527 = vadd.f32 %v2291, %v2526
        %v2528 = vpop.f32.mrb[0].mxu0
        %v2529 = vpop.f32.mrb[0].mxu0
        %v2530 = vadd.f32 %v2291, %v2529
        %v2531 = vpop.f32.mrb[0].mxu0
        %2532 = vmatprep.mubr.bf16.mxu0 %v2253
        %2533 = vmatmul.mubr.bf16.gmra.mrb[0].mxu0 %v2252
        %v2534 = vpop.f32.mrb[0].mxu0
        %v2535 = vadd.f32 %v2291, %v2534
        %v2536 = vpop.f32.mrb[0].mxu0
        %v2537 = vpop.f32.mrb[0].mxu0
        %v2538 = vadd.f32 %v2291, %v2537
        %v2539 = vpop.f32.mrb[0].mxu0
        %2540 = vmatprep.mubr.bf16.mxu0 %v2255
        %2541 = vmatmul.mubr.bf16.gmra.mrb[0].mxu0 %v2254
        %v2542 = vpop.f32.mrb[0].mxu0
        %v2543 = vadd.f32 %v2291, %v2542
        %v2544 = vpop.f32.mrb[0].mxu0
        %v2545 = vpop.f32.mrb[0].mxu0
        %v2546 = vadd.f32 %v2291, %v2545
        %v2547 = vpop.f32.mrb[0].mxu0
        %2548 = vdwg.mxu0
        %v2549 = vmax.f32 %v2423, 0.0
        %v2550 = vmax.f32 %v2426, 0.0
        %v2551 = vmax.f32 %v2431, 0.0
        %v2552 = vmax.f32 %v2434, 0.0
        %v2553 = vmax.f32 %v2439, 0.0
        %v2554 = vmax.f32 %v2442, 0.0
        %v2555 = vmax.f32 %v2447, 0.0
        %v2556 = vmax.f32 %v2450, 0.0
        %v2557 = vmax.f32 %v2455, 0.0
        %v2558 = vmax.f32 %v2458, 0.0
        %v2559 = vmax.f32 %v2463, 0.0
        %v2560 = vmax.f32 %v2466, 0.0
        %v2561 = vmax.f32 %v2471, 0.0
        %v2562 = vmax.f32 %v2474, 0.0
        %v2563 = vmax.f32 %v2479, 0.0
        %v2564 = vmax.f32 %v2482, 0.0
        %v2565 = vmax.f32 %v2487, 0.0
        %v2566 = vmax.f32 %v2490, 0.0
        %v2567 = vmax.f32 %v2495, 0.0
        %v2568 = vmax.f32 %v2498, 0.0
        %v2569 = vmax.f32 %v2503, 0.0
        %v2570 = vmax.f32 %v2506, 0.0
        %v2571 = vmax.f32 %v2511, 0.0
        %v2572 = vmax.f32 %v2514, 0.0
        %v2573 = vmax.f32 %v2519, 0.0
        %v2574 = vmax.f32 %v2522, 0.0
        %v2575 = vmax.f32 %v2527, 0.0
        %v2576 = vmax.f32 %v2530, 0.0
        %v2577 = vmax.f32 %v2535, 0.0
        %v2578 = vmax.f32 %v2538, 0.0
        %v2579 = vmax.f32 %v2543, 0.0
        %v2580 = vmax.f32 %v2546, 0.0
        %v2581 = vpack.c.bf16 %v2550, %v2549
        %v2582 = vpack.c.bf16 %v2552, %v2551
        %v2583 = vpack.c.bf16 %v2554, %v2553
        %v2584 = vpack.c.bf16 %v2556, %v2555
        %v2585 = vpack.c.bf16 %v2558, %v2557
        %v2586 = vpack.c.bf16 %v2560, %v2559
        %v2587 = vpack.c.bf16 %v2562, %v2561
        %v2588 = vpack.c.bf16 %v2564, %v2563
        %v2589 = vpack.c.bf16 %v2566, %v2565
        %v2590 = vpack.c.bf16 %v2568, %v2567
        %v2591 = vpack.c.bf16 %v2570, %v2569
        %v2592 = vpack.c.bf16 %v2572, %v2571
        %v2593 = vpack.c.bf16 %v2574, %v2573
        %v2594 = vpack.c.bf16 %v2576, %v2575
        %v2595 = vpack.c.bf16 %v2578, %v2577
        %v2596 = vpack.c.bf16 %v2580, %v2579
        %v2597 = vld [vmem:[%s3] sm:$0xf]
        %v2598 = vld [vmem:[%s3 + $0x4] sm:$0xf]
        %v2599 = vld [vmem:[%s3 + $0x8] sm:$0xf]
        %v2600 = vld [vmem:[%s3 + $0xc] sm:$0xf]
        %v2601 = vld [vmem:[%s3 + $0x10] sm:$0xf]
        %v2602 = vld [vmem:[%s3 + $0x14] sm:$0xf]
        %v2603 = vld [vmem:[%s3 + $0x18] sm:$0xf]
        %v2604 = vld [vmem:[%s3 + $0x1c] sm:$0xf]
        %v2605 = vld [vmem:[%s3 + $0x20] sm:$0xf]
        %v2606 = vld [vmem:[%s3 + $0x24] sm:$0xf]
        %v2607 = vld [vmem:[%s3 + $0x28] sm:$0xf]
        %v2608 = vld [vmem:[%s3 + $0x2c] sm:$0xf]
        %v2609 = vld [vmem:[%s3 + $0x30] sm:$0xf]
        %v2610 = vld [vmem:[%s3 + $0x34] sm:$0xf]
        %v2611 = vld [vmem:[%s3 + $0x38] sm:$0xf]
        %v2612 = vld [vmem:[%s3 + $0x3c] sm:$0xf]
        %v2613 = vlaneseq
        %v2614 = vshrl.u32 %v2613, 7
        %v2615 = vsub.s32 0, %v2614
        %v2616 = vrot.slane %v416, %v2615
        %v2633 = vunpack.c.l.b16 %v2597
        %v2634 = vunpack.c.l.b16 %v2598
        %v2635 = vunpack.c.l.b16 %v2599
        %v2636 = vunpack.c.l.b16 %v2600
        %v2637 = vunpack.c.l.b16 %v2601
        %v2638 = vunpack.c.l.b16 %v2602
        %v2639 = vunpack.c.l.b16 %v2603
        %v2640 = vunpack.c.l.b16 %v2604
        %v2641 = vunpack.c.l.b16 %v2605
        %v2642 = vunpack.c.l.b16 %v2606
        %v2643 = vunpack.c.l.b16 %v2607
        %v2644 = vunpack.c.l.b16 %v2608
        %v2645 = vunpack.c.l.b16 %v2609
        %v2646 = vunpack.c.l.b16 %v2610
        %v2647 = vunpack.c.l.b16 %v2611
        %v2648 = vunpack.c.l.b16 %v2612
        %v2649 = vpack.c.b16 %v2634, %v2633
        %v2650 = vpack.c.b16 %v2636, %v2635
        %v2651 = vpack.c.b16 %v2638, %v2637
        %v2652 = vpack.c.b16 %v2640, %v2639
        %v2653 = vpack.c.b16 %v2642, %v2641
        %v2654 = vpack.c.b16 %v2644, %v2643
        %v2655 = vpack.c.b16 %v2646, %v2645
        %v2656 = vpack.c.b16 %v2648, %v2647
        %2665 = vmatprep.subr.bf16.mxu0 0
        %2666 = vmatpush1.bf16.msra.mxu0 %v2649
        %2667 = vmatprep.subr.bf16.mxu0 0
        %2668 = vmatpush1.bf16.msra.mxu0 %v2650
        %2669 = vmatprep.subr.bf16.mxu0 0
        %2670 = vmatpush1.bf16.msra.mxu0 %v2651
        %2671 = vmatprep.subr.bf16.mxu0 0
        %2672 = vmatpush1.bf16.msra.mxu0 %v2652
        %2673 = vmatprep.subr.bf16.mxu0 0
        %2674 = vmatpush1.bf16.msra.mxu0 %v2653
        %2675 = vmatprep.subr.bf16.mxu0 0
        %2676 = vmatpush1.bf16.msra.mxu0 %v2654
        %2677 = vmatprep.subr.bf16.mxu0 0
        %2678 = vmatpush1.bf16.msra.mxu0 %v2655
        %2679 = vmatprep.subr.bf16.mxu0 0
        %2680 = vmatpush1.bf16.msra.mxu0 %v2656
        %2681 = vmatprep.subr.bf16.mxu0 0
        %2682 = vmatpush1.bf16.msra.mxu0 0
        %2683 = vmatprep.subr.bf16.mxu0 0
        %2684 = vmatpush1.bf16.msra.mxu0 0
        %2685 = vmatprep.subr.bf16.mxu0 0
        %2686 = vmatpush1.bf16.msra.mxu0 0
        %2687 = vmatprep.subr.bf16.mxu0 0
        %2688 = vmatpush1.bf16.msra.mxu0 0
        %2689 = vmatprep.subr.bf16.mxu0 0
        %2690 = vmatpush1.bf16.msra.mxu0 0
        %2691 = vmatprep.subr.bf16.mxu0 0
        %2692 = vmatpush1.bf16.msra.mxu0 0
        %2693 = vmatprep.subr.bf16.mxu0 0
        %2694 = vmatpush1.bf16.msra.mxu0 0
        %2695 = vmatprep.subr.bf16.mxu0 0
        %2696 = vmatpush1.bf16.msra.mxu0 0
        %2697 = vmatprep.mubr.bf16.mxu0 0
        %2698 = vmatmul.mubr.bf16.gmra.mrb[0].mxu0 %v2581
        %v2699 = vpop.f32.mrb[0].mxu0
        %v2700 = vadd.f32 %v2616, %v2699
        %v2701 = vpop.f32.mrb[0].mxu0
        %v2702 = vpop.f32.mrb[0].mxu0
        %v2703 = vadd.f32 %v2616, %v2702
        %v2704 = vpop.f32.mrb[0].mxu0
        %2705 = vmatprep.mubr.bf16.mxu0 0
        %2706 = vmatmul.mubr.bf16.gmra.mrb[0].mxu0 %v2582
        %v2707 = vpop.f32.mrb[0].mxu0
        %v2708 = vadd.f32 %v2616, %v2707
        %v2709 = vpop.f32.mrb[0].mxu0
        %v2710 = vpop.f32.mrb[0].mxu0
        %v2711 = vadd.f32 %v2616, %v2710
        %v2712 = vpop.f32.mrb[0].mxu0
        %2713 = vmatprep.mubr.bf16.mxu0 0
        %2714 = vmatmul.mubr.bf16.gmra.mrb[0].mxu0 %v2583
        %v2715 = vpop.f32.mrb[0].mxu0
        %v2716 = vadd.f32 %v2616, %v2715
        %v2717 = vpop.f32.mrb[0].mxu0
        %v2718 = vpop.f32.mrb[0].mxu0
        %v2719 = vadd.f32 %v2616, %v2718
        %v2720 = vpop.f32.mrb[0].mxu0
        %2721 = vmatprep.mubr.bf16.mxu0 0
        %2722 = vmatmul.mubr.bf16.gmra.mrb[0].mxu0 %v2584
        %v2723 = vpop.f32.mrb[0].mxu0
        %v2724 = vadd.f32 %v2616, %v2723
        %v2725 = vpop.f32.mrb[0].mxu0
        %v2726 = vpop.f32.mrb[0].mxu0
        %v2727 = vadd.f32 %v2616, %v2726
        %v2728 = vpop.f32.mrb[0].mxu0
        %2729 = vmatprep.mubr.bf16.mxu0 0
        %2730 = vmatmul.mubr.bf16.gmra.mrb[0].mxu0 %v2585
        %v2731 = vpop.f32.mrb[0].mxu0
        %v2732 = vadd.f32 %v2616, %v2731
        %v2733 = vpop.f32.mrb[0].mxu0
        %v2734 = vpop.f32.mrb[0].mxu0
        %v2735 = vadd.f32 %v2616, %v2734
        %v2736 = vpop.f32.mrb[0].mxu0
        %2737 = vmatprep.mubr.bf16.mxu0 0
        %2738 = vmatmul.mubr.bf16.gmra.mrb[0].mxu0 %v2586
        %v2739 = vpop.f32.mrb[0].mxu0
        %v2740 = vadd.f32 %v2616, %v2739
        %v2741 = vpop.f32.mrb[0].mxu0
        %v2742 = vpop.f32.mrb[0].mxu0
        %v2743 = vadd.f32 %v2616, %v2742
        %v2744 = vpop.f32.mrb[0].mxu0
        %2745 = vmatprep.mubr.bf16.mxu0 0
        %2746 = vmatmul.mubr.bf16.gmra.mrb[0].mxu0 %v2587
        %v2747 = vpop.f32.mrb[0].mxu0
        %v2748 = vadd.f32 %v2616, %v2747
        %v2749 = vpop.f32.mrb[0].mxu0
        %v2750 = vpop.f32.mrb[0].mxu0
        %v2751 = vadd.f32 %v2616, %v2750
        %v2752 = vpop.f32.mrb[0].mxu0
        %2753 = vmatprep.mubr.bf16.mxu0 0
        %2754 = vmatmul.mubr.bf16.gmra.mrb[0].mxu0 %v2588
        %v2755 = vpop.f32.mrb[0].mxu0
        %v2756 = vadd.f32 %v2616, %v2755
        %v2757 = vpop.f32.mrb[0].mxu0
        %v2758 = vpop.f32.mrb[0].mxu0
        %v2759 = vadd.f32 %v2616, %v2758
        %v2760 = vpop.f32.mrb[0].mxu0
        %2761 = vmatprep.mubr.bf16.mxu0 0
        %2762 = vmatmul.mubr.bf16.gmra.mrb[0].mxu0 %v2589
        %v2763 = vpop.f32.mrb[0].mxu0
        %v2764 = vadd.f32 %v2616, %v2763
        %v2765 = vpop.f32.mrb[0].mxu0
        %v2766 = vpop.f32.mrb[0].mxu0
        %v2767 = vadd.f32 %v2616, %v2766
        %v2768 = vpop.f32.mrb[0].mxu0
        %2769 = vmatprep.mubr.bf16.mxu0 0
        %2770 = vmatmul.mubr.bf16.gmra.mrb[0].mxu0 %v2590
        %v2771 = vpop.f32.mrb[0].mxu0
        %v2772 = vadd.f32 %v2616, %v2771
        %v2773 = vpop.f32.mrb[0].mxu0
        %v2774 = vpop.f32.mrb[0].mxu0
        %v2775 = vadd.f32 %v2616, %v2774
        %v2776 = vpop.f32.mrb[0].mxu0
        %2777 = vmatprep.mubr.bf16.mxu0 0
        %2778 = vmatmul.mubr.bf16.gmra.mrb[0].mxu0 %v2591
        %v2779 = vpop.f32.mrb[0].mxu0
        %v2780 = vadd.f32 %v2616, %v2779
        %v2781 = vpop.f32.mrb[0].mxu0
        %v2782 = vpop.f32.mrb[0].mxu0
        %v2783 = vadd.f32 %v2616, %v2782
        %v2784 = vpop.f32.mrb[0].mxu0
        %2785 = vmatprep.mubr.bf16.mxu0 0
        %2786 = vmatmul.mubr.bf16.gmra.mrb[0].mxu0 %v2592
        %v2787 = vpop.f32.mrb[0].mxu0
        %v2788 = vadd.f32 %v2616, %v2787
        %v2789 = vpop.f32.mrb[0].mxu0
        %v2790 = vpop.f32.mrb[0].mxu0
        %v2791 = vadd.f32 %v2616, %v2790
        %v2792 = vpop.f32.mrb[0].mxu0
        %2793 = vmatprep.mubr.bf16.mxu0 0
        %2794 = vmatmul.mubr.bf16.gmra.mrb[0].mxu0 %v2593
        %v2795 = vpop.f32.mrb[0].mxu0
        %v2796 = vadd.f32 %v2616, %v2795
        %v2797 = vpop.f32.mrb[0].mxu0
        %v2798 = vpop.f32.mrb[0].mxu0
        %v2799 = vadd.f32 %v2616, %v2798
        %v2800 = vpop.f32.mrb[0].mxu0
        %2801 = vmatprep.mubr.bf16.mxu0 0
        %2802 = vmatmul.mubr.bf16.gmra.mrb[0].mxu0 %v2594
        %v2803 = vpop.f32.mrb[0].mxu0
        %v2804 = vadd.f32 %v2616, %v2803
        %v2805 = vpop.f32.mrb[0].mxu0
        %v2806 = vpop.f32.mrb[0].mxu0
        %v2807 = vadd.f32 %v2616, %v2806
        %v2808 = vpop.f32.mrb[0].mxu0
        %2809 = vmatprep.mubr.bf16.mxu0 0
        %2810 = vmatmul.mubr.bf16.gmra.mrb[0].mxu0 %v2595
        %v2811 = vpop.f32.mrb[0].mxu0
        %v2812 = vadd.f32 %v2616, %v2811
        %v2813 = vpop.f32.mrb[0].mxu0
        %v2814 = vpop.f32.mrb[0].mxu0
        %v2815 = vadd.f32 %v2616, %v2814
        %v2816 = vpop.f32.mrb[0].mxu0
        %2817 = vmatprep.mubr.bf16.mxu0 0
        %2818 = vmatmul.mubr.bf16.gmra.mrb[0].mxu0 %v2596
        %v2819 = vpop.f32.mrb[0].mxu0
        %v2820 = vadd.f32 %v2616, %v2819
        %v2821 = vpop.f32.mrb[0].mxu0
        %v2822 = vpop.f32.mrb[0].mxu0
        %v2823 = vadd.f32 %v2616, %v2822
        %v2824 = vpop.f32.mrb[0].mxu0
        %2825 = vdwg.mxu0
        %v2826 = vmax.f32 %v2700, 0.0
        %v2827 = vmax.f32 %v2703, 0.0
        %v2828 = vmax.f32 %v2708, 0.0
        %v2829 = vmax.f32 %v2711, 0.0
        %v2830 = vmax.f32 %v2716, 0.0
        %v2831 = vmax.f32 %v2719, 0.0
        %v2832 = vmax.f32 %v2724, 0.0
        %v2833 = vmax.f32 %v2727, 0.0
        %v2834 = vmax.f32 %v2732, 0.0
        %v2835 = vmax.f32 %v2735, 0.0
        %v2836 = vmax.f32 %v2740, 0.0
        %v2837 = vmax.f32 %v2743, 0.0
        %v2838 = vmax.f32 %v2748, 0.0
        %v2839 = vmax.f32 %v2751, 0.0
        %v2840 = vmax.f32 %v2756, 0.0
        %v2841 = vmax.f32 %v2759, 0.0
        %v2842 = vmax.f32 %v2764, 0.0
        %v2843 = vmax.f32 %v2767, 0.0
        %v2844 = vmax.f32 %v2772, 0.0
        %v2845 = vmax.f32 %v2775, 0.0
        %v2846 = vmax.f32 %v2780, 0.0
        %v2847 = vmax.f32 %v2783, 0.0
        %v2848 = vmax.f32 %v2788, 0.0
        %v2849 = vmax.f32 %v2791, 0.0
        %v2850 = vmax.f32 %v2796, 0.0
        %v2851 = vmax.f32 %v2799, 0.0
        %v2852 = vmax.f32 %v2804, 0.0
        %v2853 = vmax.f32 %v2807, 0.0
        %v2854 = vmax.f32 %v2812, 0.0
        %v2855 = vmax.f32 %v2815, 0.0
        %v2856 = vmax.f32 %v2820, 0.0
        %v2857 = vmax.f32 %v2823, 0.0
        %v2858 = vpack.c.bf16 %v2827, %v2826
        %v2859 = vpack.c.bf16 %v2829, %v2828
        %v2860 = vpack.c.bf16 %v2831, %v2830
        %v2861 = vpack.c.bf16 %v2833, %v2832
        %v2862 = vpack.c.bf16 %v2835, %v2834
        %v2863 = vpack.c.bf16 %v2837, %v2836
        %v2864 = vpack.c.bf16 %v2839, %v2838
        %v2865 = vpack.c.bf16 %v2841, %v2840
        %v2866 = vpack.c.bf16 %v2843, %v2842
        %v2867 = vpack.c.bf16 %v2845, %v2844
        %v2868 = vpack.c.bf16 %v2847, %v2846
        %v2869 = vpack.c.bf16 %v2849, %v2848
        %v2870 = vpack.c.bf16 %v2851, %v2850
        %v2871 = vpack.c.bf16 %v2853, %v2852
        %v2872 = vpack.c.bf16 %v2855, %v2854
        %v2873 = vpack.c.bf16 %v2857, %v2856
        %v2874 = vld [vmem:[%s4] sm:$0xf]
        %v2875 = vld [vmem:[%s4 + $0x4] sm:$0xf]
        %v2876 = vld [vmem:[%s4 + $0x8] sm:$0xf]
        %v2877 = vld [vmem:[%s4 + $0xc] sm:$0xf]
        %v2878 = vld [vmem:[%s4 + $0x10] sm:$0xf]
        %v2879 = vld [vmem:[%s4 + $0x14] sm:$0xf]
        %v2880 = vld [vmem:[%s4 + $0x18] sm:$0xf]
        %v2881 = vld [vmem:[%s4 + $0x1c] sm:$0xf]
        %v2882 = vlaneseq
        %v2883 = vshrl.u32 %v2882, 7
        %v2884 = vsub.s32 0, %v2883
        %v2885 = vrot.slane %v417, %v2884
        %v2894 = vunpack.c.l.b16 %v2874
        %v2895 = vunpack.c.l.b16 %v2875
        %v2896 = vunpack.c.l.b16 %v2876
        %v2897 = vunpack.c.l.b16 %v2877
        %v2898 = vunpack.c.l.b16 %v2878
        %v2899 = vunpack.c.l.b16 %v2879
        %v2900 = vunpack.c.l.b16 %v2880
        %v2901 = vunpack.c.l.b16 %v2881
        %v2902 = vpack.c.b16 %v2895, %v2894
        %v2903 = vpack.c.b16 %v2897, %v2896
        %v2904 = vpack.c.b16 %v2899, %v2898
        %v2905 = vpack.c.b16 %v2901, %v2900
        %vm2910 = vcmask 523264
        %v2912 = vsel %vm2910, %v2858, 0
        %v2915 = vsel %vm2910, %v2859, 0
        %v2918 = vsel %vm2910, %v2860, 0
        %v2921 = vsel %vm2910, %v2861, 0
        %v2924 = vsel %vm2910, %v2862, 0
        %v2927 = vsel %vm2910, %v2863, 0
        %v2930 = vsel %vm2910, %v2864, 0
        %v2933 = vsel %vm2910, %v2865, 0
        %v2936 = vsel %vm2910, %v2866, 0
        %v2939 = vsel %vm2910, %v2867, 0
        %v2942 = vsel %vm2910, %v2868, 0
        %v2945 = vsel %vm2910, %v2869, 0
        %v2948 = vsel %vm2910, %v2870, 0
        %v2951 = vsel %vm2910, %v2871, 0
        %v2954 = vsel %vm2910, %v2872, 0
        %v2957 = vsel %vm2910, %v2873, 0
        %2959 = vmatprep.subr.bf16.mxu0 0
        %2960 = vmatpush1.bf16.msra.mxu0 %v2902
        %2961 = vmatprep.subr.bf16.mxu0 0
        %2962 = vmatpush1.bf16.msra.mxu0 %v2903
        %2963 = vmatprep.subr.bf16.mxu0 0
        %2964 = vmatpush1.bf16.msra.mxu0 %v2904
        %2965 = vmatprep.subr.bf16.mxu0 0
        %2966 = vmatpush1.bf16.msra.mxu0 %v2905
        %2967 = vmatprep.subr.bf16.mxu0 0
        %2968 = vmatpush1.bf16.msra.mxu0 0
        %2969 = vmatprep.subr.bf16.mxu0 0
        %2970 = vmatpush1.bf16.msra.mxu0 0
        %2971 = vmatprep.subr.bf16.mxu0 0
        %2972 = vmatpush1.bf16.msra.mxu0 0
        %2973 = vmatprep.subr.bf16.mxu0 0
        %2974 = vmatpush1.bf16.msra.mxu0 0
        %2975 = vmatprep.subr.bf16.mxu0 0
        %2976 = vmatpush1.bf16.msra.mxu0 0
        %2977 = vmatprep.subr.bf16.mxu0 0
        %2978 = vmatpush1.bf16.msra.mxu0 0
        %2979 = vmatprep.subr.bf16.mxu0 0
        %2980 = vmatpush1.bf16.msra.mxu0 0
        %2981 = vmatprep.subr.bf16.mxu0 0
        %2982 = vmatpush1.bf16.msra.mxu0 0
        %2983 = vmatprep.subr.bf16.mxu0 0
        %2984 = vmatpush1.bf16.msra.mxu0 0
        %2985 = vmatprep.subr.bf16.mxu0 0
        %2986 = vmatpush1.bf16.msra.mxu0 0
        %2987 = vmatprep.subr.bf16.mxu0 0
        %2988 = vmatpush1.bf16.msra.mxu0 0
        %2989 = vmatprep.subr.bf16.mxu0 0
        %2990 = vmatpush1.bf16.msra.mxu0 0
        %2991 = vmatprep.mubr.bf16.mxu0 0
        %2992 = vmatmul.mubr.bf16.gmra.mrb[0].mxu0 %v2912
        %v2993 = vpop.f32.mrb[0].mxu0
        %v2994 = vadd.f32 %v2885, %v2993
        %v2995 = vpop.f32.mrb[0].mxu0
        %v2996 = vpop.f32.mrb[0].mxu0
        %v2997 = vadd.f32 %v2885, %v2996
        %v2998 = vpop.f32.mrb[0].mxu0
        %2999 = vmatprep.mubr.bf16.mxu0 0
        %3000 = vmatmul.mubr.bf16.gmra.mrb[0].mxu0 %v2915
        %v3001 = vpop.f32.mrb[0].mxu0
        %v3002 = vadd.f32 %v2885, %v3001
        %v3003 = vpop.f32.mrb[0].mxu0
        %v3004 = vpop.f32.mrb[0].mxu0
        %v3005 = vadd.f32 %v2885, %v3004
        %v3006 = vpop.f32.mrb[0].mxu0
        %3007 = vmatprep.mubr.bf16.mxu0 0
        %3008 = vmatmul.mubr.bf16.gmra.mrb[0].mxu0 %v2918
        %v3009 = vpop.f32.mrb[0].mxu0
        %v3010 = vadd.f32 %v2885, %v3009
        %v3011 = vpop.f32.mrb[0].mxu0
        %v3012 = vpop.f32.mrb[0].mxu0
        %v3013 = vadd.f32 %v2885, %v3012
        %v3014 = vpop.f32.mrb[0].mxu0
        %3015 = vmatprep.mubr.bf16.mxu0 0
        %3016 = vmatmul.mubr.bf16.gmra.mrb[0].mxu0 %v2921
        %v3017 = vpop.f32.mrb[0].mxu0
        %v3018 = vadd.f32 %v2885, %v3017
        %v3019 = vpop.f32.mrb[0].mxu0
        %v3020 = vpop.f32.mrb[0].mxu0
        %v3021 = vadd.f32 %v2885, %v3020
        %v3022 = vpop.f32.mrb[0].mxu0
        %3023 = vmatprep.mubr.bf16.mxu0 0
        %3024 = vmatmul.mubr.bf16.gmra.mrb[0].mxu0 %v2924
        %v3025 = vpop.f32.mrb[0].mxu0
        %v3026 = vadd.f32 %v2885, %v3025
        %v3027 = vpop.f32.mrb[0].mxu0
        %v3028 = vpop.f32.mrb[0].mxu0
        %v3029 = vadd.f32 %v2885, %v3028
        %v3030 = vpop.f32.mrb[0].mxu0
        %3031 = vmatprep.mubr.bf16.mxu0 0
        %3032 = vmatmul.mubr.bf16.gmra.mrb[0].mxu0 %v2927
        %v3033 = vpop.f32.mrb[0].mxu0
        %v3034 = vadd.f32 %v2885, %v3033
        %v3035 = vpop.f32.mrb[0].mxu0
        %v3036 = vpop.f32.mrb[0].mxu0
        %v3037 = vadd.f32 %v2885, %v3036
        %v3038 = vpop.f32.mrb[0].mxu0
        %3039 = vmatprep.mubr.bf16.mxu0 0
        %3040 = vmatmul.mubr.bf16.gmra.mrb[0].mxu0 %v2930
        %v3041 = vpop.f32.mrb[0].mxu0
        %v3042 = vadd.f32 %v2885, %v3041
        %v3043 = vpop.f32.mrb[0].mxu0
        %v3044 = vpop.f32.mrb[0].mxu0
        %v3045 = vadd.f32 %v2885, %v3044
        %v3046 = vpop.f32.mrb[0].mxu0
        %3047 = vmatprep.mubr.bf16.mxu0 0
        %3048 = vmatmul.mubr.bf16.gmra.mrb[0].mxu0 %v2933
        %v3049 = vpop.f32.mrb[0].mxu0
        %v3050 = vadd.f32 %v2885, %v3049
        %v3051 = vpop.f32.mrb[0].mxu0
        %v3052 = vpop.f32.mrb[0].mxu0
        %v3053 = vadd.f32 %v2885, %v3052
        %v3054 = vpop.f32.mrb[0].mxu0
        %3055 = vmatprep.mubr.bf16.mxu0 0
        %3056 = vmatmul.mubr.bf16.gmra.mrb[0].mxu0 %v2936
        %v3057 = vpop.f32.mrb[0].mxu0
        %v3058 = vadd.f32 %v2885, %v3057
        %v3059 = vpop.f32.mrb[0].mxu0
        %v3060 = vpop.f32.mrb[0].mxu0
        %v3061 = vadd.f32 %v2885, %v3060
        %v3062 = vpop.f32.mrb[0].mxu0
        %3063 = vmatprep.mubr.bf16.mxu0 0
        %3064 = vmatmul.mubr.bf16.gmra.mrb[0].mxu0 %v2939
        %v3065 = vpop.f32.mrb[0].mxu0
        %v3066 = vadd.f32 %v2885, %v3065
        %v3067 = vpop.f32.mrb[0].mxu0
        %v3068 = vpop.f32.mrb[0].mxu0
        %v3069 = vadd.f32 %v2885, %v3068
        %v3070 = vpop.f32.mrb[0].mxu0
        %3071 = vmatprep.mubr.bf16.mxu0 0
        %3072 = vmatmul.mubr.bf16.gmra.mrb[0].mxu0 %v2942
        %v3073 = vpop.f32.mrb[0].mxu0
        %v3074 = vadd.f32 %v2885, %v3073
        %v3075 = vpop.f32.mrb[0].mxu0
        %v3076 = vpop.f32.mrb[0].mxu0
        %v3077 = vadd.f32 %v2885, %v3076
        %v3078 = vpop.f32.mrb[0].mxu0
        %3079 = vmatprep.mubr.bf16.mxu0 0
        %3080 = vmatmul.mubr.bf16.gmra.mrb[0].mxu0 %v2945
        %v3081 = vpop.f32.mrb[0].mxu0
        %v3082 = vadd.f32 %v2885, %v3081
        %v3083 = vpop.f32.mrb[0].mxu0
        %v3084 = vpop.f32.mrb[0].mxu0
        %v3085 = vadd.f32 %v2885, %v3084
        %v3086 = vpop.f32.mrb[0].mxu0
        %3087 = vmatprep.mubr.bf16.mxu0 0
        %3088 = vmatmul.mubr.bf16.gmra.mrb[0].mxu0 %v2948
        %v3089 = vpop.f32.mrb[0].mxu0
        %v3090 = vadd.f32 %v2885, %v3089
        %v3091 = vpop.f32.mrb[0].mxu0
        %v3092 = vpop.f32.mrb[0].mxu0
        %v3093 = vadd.f32 %v2885, %v3092
        %v3094 = vpop.f32.mrb[0].mxu0
        %3095 = vmatprep.mubr.bf16.mxu0 0
        %3096 = vmatmul.mubr.bf16.gmra.mrb[0].mxu0 %v2951
        %v3097 = vpop.f32.mrb[0].mxu0
        %v3098 = vadd.f32 %v2885, %v3097
        %v3099 = vpop.f32.mrb[0].mxu0
        %v3100 = vpop.f32.mrb[0].mxu0
        %v3101 = vadd.f32 %v2885, %v3100
        %v3102 = vpop.f32.mrb[0].mxu0
        %3103 = vmatprep.mubr.bf16.mxu0 0
        %3104 = vmatmul.mubr.bf16.gmra.mrb[0].mxu0 %v2954
        %v3105 = vpop.f32.mrb[0].mxu0
        %v3106 = vadd.f32 %v2885, %v3105
        %v3107 = vpop.f32.mrb[0].mxu0
        %v3108 = vpop.f32.mrb[0].mxu0
        %v3109 = vadd.f32 %v2885, %v3108
        %v3110 = vpop.f32.mrb[0].mxu0
        %3111 = vmatprep.mubr.bf16.mxu0 0
        %3112 = vmatmul.mubr.bf16.gmra.mrb[0].mxu0 %v2957
        %v3113 = vpop.f32.mrb[0].mxu0
        %v3114 = vadd.f32 %v2885, %v3113
        %v3115 = vpop.f32.mrb[0].mxu0
        %v3116 = vpop.f32.mrb[0].mxu0
        %v3117 = vadd.f32 %v2885, %v3116
        %v3118 = vpop.f32.mrb[0].mxu0
        %3119 = vdwg.mxu0
        %v3120 = vld [vmem:[%s399] sm:$0xff]
        %v3121 = vld [vmem:[%s399 + $0x8] sm:$0xff]
        %v3122 = vld [vmem:[%s399 + $0x10] sm:$0xff]
        %v3123 = vld [vmem:[%s399 + $0x18] sm:$0xff]
        %v3124 = vld [vmem:[%s399 + $0x20] sm:$0xff]
        %v3125 = vld [vmem:[%s399 + $0x28] sm:$0xff]
        %v3126 = vld [vmem:[%s399 + $0x30] sm:$0xff]
        %v3127 = vld [vmem:[%s399 + $0x38] sm:$0xff]
        %v3128 = vld [vmem:[%s399 + $0x40] sm:$0xff]
        %v3129 = vld [vmem:[%s399 + $0x48] sm:$0xff]
        %v3130 = vld [vmem:[%s399 + $0x50] sm:$0xff]
        %v3131 = vld [vmem:[%s399 + $0x58] sm:$0xff]
        %v3132 = vld [vmem:[%s399 + $0x60] sm:$0xff]
        %v3133 = vld [vmem:[%s399 + $0x68] sm:$0xff]
        %v3134 = vld [vmem:[%s399 + $0x70] sm:$0xff]
        %v3135 = vld [vmem:[%s399 + $0x78] sm:$0xff]
        %v3136 = vld [vmem:[%s399 + $0x80] sm:$0xff]
        %v3137 = vld [vmem:[%s399 + $0x88] sm:$0xff]
        %v3138 = vld [vmem:[%s399 + $0x90] sm:$0xff]
        %v3139 = vld [vmem:[%s399 + $0x98] sm:$0xff]
        %v3140 = vld [vmem:[%s399 + $0xa0] sm:$0xff]
        %v3141 = vld [vmem:[%s399 + $0xa8] sm:$0xff]
        %v3142 = vld [vmem:[%s399 + $0xb0] sm:$0xff]
        %v3143 = vld [vmem:[%s399 + $0xb8] sm:$0xff]
        %v3144 = vld [vmem:[%s399 + $0xc0] sm:$0xff]
        %v3145 = vld [vmem:[%s399 + $0xc8] sm:$0xff]
        %v3146 = vld [vmem:[%s399 + $0xd0] sm:$0xff]
        %v3147 = vld [vmem:[%s399 + $0xd8] sm:$0xff]
        %v3148 = vld [vmem:[%s399 + $0xe0] sm:$0xff]
        %v3149 = vld [vmem:[%s399 + $0xe8] sm:$0xff]
        %v3150 = vld [vmem:[%s399 + $0xf0] sm:$0xff]
        %v3151 = vld [vmem:[%s399 + $0xf8] sm:$0xff]
        %v3152 = vmul.f32 %v3120, %v2994
        %v3153 = vmul.f32 %v3121, %v2997
        %v3154 = vmul.f32 %v3122, %v3002
        %v3155 = vmul.f32 %v3123, %v3005
        %v3156 = vmul.f32 %v3124, %v3010
        %v3157 = vmul.f32 %v3125, %v3013
        %v3158 = vmul.f32 %v3126, %v3018
        %v3159 = vmul.f32 %v3127, %v3021
        %v3160 = vmul.f32 %v3128, %v3026
        %v3161 = vmul.f32 %v3129, %v3029
        %v3162 = vmul.f32 %v3130, %v3034
        %v3163 = vmul.f32 %v3131, %v3037
        %v3164 = vmul.f32 %v3132, %v3042
        %v3165 = vmul.f32 %v3133, %v3045
        %v3166 = vmul.f32 %v3134, %v3050
        %v3167 = vmul.f32 %v3135, %v3053
        %v3168 = vmul.f32 %v3136, %v3058
        %v3169 = vmul.f32 %v3137, %v3061
        %v3170 = vmul.f32 %v3138, %v3066
        %v3171 = vmul.f32 %v3139, %v3069
        %v3172 = vmul.f32 %v3140, %v3074
        %v3173 = vmul.f32 %v3141, %v3077
        %v3174 = vmul.f32 %v3142, %v3082
        %v3175 = vmul.f32 %v3143, %v3085
        %v3176 = vmul.f32 %v3144, %v3090
        %v3177 = vmul.f32 %v3145, %v3093
        %v3178 = vmul.f32 %v3146, %v3098
        %v3179 = vmul.f32 %v3147, %v3101
        %v3180 = vmul.f32 %v3148, %v3106
        %v3181 = vmul.f32 %v3149, %v3109
        %v3182 = vmul.f32 %v3150, %v3114
        %v3183 = vmul.f32 %v3151, %v3117
        %v3184 = vpack.c.bf16 %v3153, %v3152
        %v3185 = vpack.c.bf16 %v3155, %v3154
        %v3186 = vpack.c.bf16 %v3157, %v3156
        %v3187 = vpack.c.bf16 %v3159, %v3158
        %v3188 = vpack.c.bf16 %v3161, %v3160
        %v3189 = vpack.c.bf16 %v3163, %v3162
        %v3190 = vpack.c.bf16 %v3165, %v3164
        %v3191 = vpack.c.bf16 %v3167, %v3166
        %v3192 = vpack.c.bf16 %v3169, %v3168
        %v3193 = vpack.c.bf16 %v3171, %v3170
        %v3194 = vpack.c.bf16 %v3173, %v3172
        %v3195 = vpack.c.bf16 %v3175, %v3174
        %v3196 = vpack.c.bf16 %v3177, %v3176
        %v3197 = vpack.c.bf16 %v3179, %v3178
        %v3198 = vpack.c.bf16 %v3181, %v3180
        %v3199 = vpack.c.bf16 %v3183, %v3182
        %v3200 = vld [vmem:[%s7] sm:$0xf]
        %v3201 = vld [vmem:[%s7 + $0x4] sm:$0xf]
        %v3202 = vld [vmem:[%s7 + $0x8] sm:$0xf]
        %v3203 = vld [vmem:[%s7 + $0xc] sm:$0xf]
        %v3204 = vld [vmem:[%s7 + $0x10] sm:$0xf]
        %v3205 = vld [vmem:[%s7 + $0x14] sm:$0xf]
        %v3206 = vld [vmem:[%s7 + $0x18] sm:$0xf]
        %v3207 = vld [vmem:[%s7 + $0x1c] sm:$0xf]
        %v3216 = vunpack.c.l.b16 %v3200
        %v3217 = vunpack.c.l.b16 %v3201
        %v3218 = vunpack.c.l.b16 %v3202
        %v3219 = vunpack.c.l.b16 %v3203
        %v3220 = vunpack.c.l.b16 %v3204
        %v3221 = vunpack.c.l.b16 %v3205
        %v3222 = vunpack.c.l.b16 %v3206
        %v3223 = vunpack.c.l.b16 %v3207
        %v3224 = vpack.c.b16 %v3217, %v3216
        %v3225 = vpack.c.b16 %v3219, %v3218
        %v3226 = vpack.c.b16 %v3221, %v3220
        %v3227 = vpack.c.b16 %v3223, %v3222
        %v3233 = vsel %vm2910, %v3184, 0
        %v3236 = vsel %vm2910, %v3185, 0
        %v3239 = vsel %vm2910, %v3186, 0
        %v3242 = vsel %vm2910, %v3187, 0
        %v3245 = vsel %vm2910, %v3188, 0
        %v3248 = vsel %vm2910, %v3189, 0
        %v3251 = vsel %vm2910, %v3190, 0
        %v3254 = vsel %vm2910, %v3191, 0
        %v3257 = vsel %vm2910, %v3192, 0
        %v3260 = vsel %vm2910, %v3193, 0
        %v3263 = vsel %vm2910, %v3194, 0
        %v3266 = vsel %vm2910, %v3195, 0
        %v3269 = vsel %vm2910, %v3196, 0
        %v3272 = vsel %vm2910, %v3197, 0
        %v3275 = vsel %vm2910, %v3198, 0
        %v3278 = vsel %vm2910, %v3199, 0
        %3280 = vmatprep.subr.bf16.mxu0 0
        %3281 = vmatpush1.bf16.msra.mxu0 %v3224
        %3282 = vmatprep.subr.bf16.mxu0 0
        %3283 = vmatpush1.bf16.msra.mxu0 %v3225
        %3284 = vmatprep.subr.bf16.mxu0 0
        %3285 = vmatpush1.bf16.msra.mxu0 %v3226
        %3286 = vmatprep.subr.bf16.mxu0 0
        %3287 = vmatpush1.bf16.msra.mxu0 %v3227
        %3288 = vmatprep.subr.bf16.mxu0 0
        %3289 = vmatpush1.bf16.msra.mxu0 0
        %3290 = vmatprep.subr.bf16.mxu0 0
        %3291 = vmatpush1.bf16.msra.mxu0 0
        %3292 = vmatprep.subr.bf16.mxu0 0
        %3293 = vmatpush1.bf16.msra.mxu0 0
        %3294 = vmatprep.subr.bf16.mxu0 0
        %3295 = vmatpush1.bf16.msra.mxu0 0
        %3296 = vmatprep.subr.bf16.mxu0 0
        %3297 = vmatpush1.bf16.msra.mxu0 0
        %3298 = vmatprep.subr.bf16.mxu0 0
        %3299 = vmatpush1.bf16.msra.mxu0 0
        %3300 = vmatprep.subr.bf16.mxu0 0
        %3301 = vmatpush1.bf16.msra.mxu0 0
        %3302 = vmatprep.subr.bf16.mxu0 0
        %3303 = vmatpush1.bf16.msra.mxu0 0
        %3304 = vmatprep.subr.bf16.mxu0 0
        %3305 = vmatpush1.bf16.msra.mxu0 0
        %3306 = vmatprep.subr.bf16.mxu0 0
        %3307 = vmatpush1.bf16.msra.mxu0 0
        %3308 = vmatprep.subr.bf16.mxu0 0
        %3309 = vmatpush1.bf16.msra.mxu0 0
        %3310 = vmatprep.subr.bf16.mxu0 0
        %3311 = vmatpush1.bf16.msra.mxu0 0
        %3312 = vmatprep.mubr.bf16.mxu0 0
        %3313 = vmatmul.mubr.bf16.gmra.mrb[0].mxu0 %v3233
        %v3314 = vpop.f32.mrb[0].mxu0
        %v3315 = vadd.f32 0.0, %v3314
        %v3316 = vpop.f32.mrb[0].mxu0
        %v3317 = vpop.f32.mrb[0].mxu0
        %v3318 = vadd.f32 0.0, %v3317
        %v3319 = vpop.f32.mrb[0].mxu0
        %3320 = vmatprep.mubr.bf16.mxu0 0
        %3321 = vmatmul.mubr.bf16.gmra.mrb[0].mxu0 %v3236
        %v3322 = vpop.f32.mrb[0].mxu0
        %v3323 = vadd.f32 0.0, %v3322
        %v3324 = vpop.f32.mrb[0].mxu0
        %v3325 = vpop.f32.mrb[0].mxu0
        %v3326 = vadd.f32 0.0, %v3325
        %v3327 = vpop.f32.mrb[0].mxu0
        %3328 = vmatprep.mubr.bf16.mxu0 0
        %3329 = vmatmul.mubr.bf16.gmra.mrb[0].mxu0 %v3239
        %v3330 = vpop.f32.mrb[0].mxu0
        %v3331 = vadd.f32 0.0, %v3330
        %v3332 = vpop.f32.mrb[0].mxu0
        %v3333 = vpop.f32.mrb[0].mxu0
        %v3334 = vadd.f32 0.0, %v3333
        %v3335 = vpop.f32.mrb[0].mxu0
        %3336 = vmatprep.mubr.bf16.mxu0 0
        %3337 = vmatmul.mubr.bf16.gmra.mrb[0].mxu0 %v3242
        %v3338 = vpop.f32.mrb[0].mxu0
        %v3339 = vadd.f32 0.0, %v3338
        %v3340 = vpop.f32.mrb[0].mxu0
        %v3341 = vpop.f32.mrb[0].mxu0
        %v3342 = vadd.f32 0.0, %v3341
        %v3343 = vpop.f32.mrb[0].mxu0
        %3344 = vmatprep.mubr.bf16.mxu0 0
        %3345 = vmatmul.mubr.bf16.gmra.mrb[0].mxu0 %v3245
        %v3346 = vpop.f32.mrb[0].mxu0
        %v3347 = vadd.f32 0.0, %v3346
        %v3348 = vpop.f32.mrb[0].mxu0
        %v3349 = vpop.f32.mrb[0].mxu0
        %v3350 = vadd.f32 0.0, %v3349
        %v3351 = vpop.f32.mrb[0].mxu0
        %3352 = vmatprep.mubr.bf16.mxu0 0
        %3353 = vmatmul.mubr.bf16.gmra.mrb[0].mxu0 %v3248
        %v3354 = vpop.f32.mrb[0].mxu0
        %v3355 = vadd.f32 0.0, %v3354
        %v3356 = vpop.f32.mrb[0].mxu0
        %v3357 = vpop.f32.mrb[0].mxu0
        %v3358 = vadd.f32 0.0, %v3357
        %v3359 = vpop.f32.mrb[0].mxu0
        %3360 = vmatprep.mubr.bf16.mxu0 0
        %3361 = vmatmul.mubr.bf16.gmra.mrb[0].mxu0 %v3251
        %v3362 = vpop.f32.mrb[0].mxu0
        %v3363 = vadd.f32 0.0, %v3362
        %v3364 = vpop.f32.mrb[0].mxu0
        %v3365 = vpop.f32.mrb[0].mxu0
        %v3366 = vadd.f32 0.0, %v3365
        %v3367 = vpop.f32.mrb[0].mxu0
        %3368 = vmatprep.mubr.bf16.mxu0 0
        %3369 = vmatmul.mubr.bf16.gmra.mrb[0].mxu0 %v3254
        %v3370 = vpop.f32.mrb[0].mxu0
        %v3371 = vadd.f32 0.0, %v3370
        %v3372 = vpop.f32.mrb[0].mxu0
        %v3373 = vpop.f32.mrb[0].mxu0
        %v3374 = vadd.f32 0.0, %v3373
        %v3375 = vpop.f32.mrb[0].mxu0
        %3376 = vmatprep.mubr.bf16.mxu0 0
        %3377 = vmatmul.mubr.bf16.gmra.mrb[0].mxu0 %v3257
        %v3378 = vpop.f32.mrb[0].mxu0
        %v3379 = vadd.f32 0.0, %v3378
        %v3380 = vpop.f32.mrb[0].mxu0
        %v3381 = vpop.f32.mrb[0].mxu0
        %v3382 = vadd.f32 0.0, %v3381
        %v3383 = vpop.f32.mrb[0].mxu0
        %3384 = vmatprep.mubr.bf16.mxu0 0
        %3385 = vmatmul.mubr.bf16.gmra.mrb[0].mxu0 %v3260
        %v3386 = vpop.f32.mrb[0].mxu0
        %v3387 = vadd.f32 0.0, %v3386
        %v3388 = vpop.f32.mrb[0].mxu0
        %v3389 = vpop.f32.mrb[0].mxu0
        %v3390 = vadd.f32 0.0, %v3389
        %v3391 = vpop.f32.mrb[0].mxu0
        %3392 = vmatprep.mubr.bf16.mxu0 0
        %3393 = vmatmul.mubr.bf16.gmra.mrb[0].mxu0 %v3263
        %v3394 = vpop.f32.mrb[0].mxu0
        %v3395 = vadd.f32 0.0, %v3394
        %v3396 = vpop.f32.mrb[0].mxu0
        %v3397 = vpop.f32.mrb[0].mxu0
        %v3398 = vadd.f32 0.0, %v3397
        %v3399 = vpop.f32.mrb[0].mxu0
        %3400 = vmatprep.mubr.bf16.mxu0 0
        %3401 = vmatmul.mubr.bf16.gmra.mrb[0].mxu0 %v3266
        %v3402 = vpop.f32.mrb[0].mxu0
        %v3403 = vadd.f32 0.0, %v3402
        %v3404 = vpop.f32.mrb[0].mxu0
        %v3405 = vpop.f32.mrb[0].mxu0
        %v3406 = vadd.f32 0.0, %v3405
        %v3407 = vpop.f32.mrb[0].mxu0
        %3408 = vmatprep.mubr.bf16.mxu0 0
        %3409 = vmatmul.mubr.bf16.gmra.mrb[0].mxu0 %v3269
        %v3410 = vpop.f32.mrb[0].mxu0
        %v3411 = vadd.f32 0.0, %v3410
        %v3412 = vpop.f32.mrb[0].mxu0
        %v3413 = vpop.f32.mrb[0].mxu0
        %v3414 = vadd.f32 0.0, %v3413
        %v3415 = vpop.f32.mrb[0].mxu0
        %3416 = vmatprep.mubr.bf16.mxu0 0
        %3417 = vmatmul.mubr.bf16.gmra.mrb[0].mxu0 %v3272
        %v3418 = vpop.f32.mrb[0].mxu0
        %v3419 = vadd.f32 0.0, %v3418
        %v3420 = vpop.f32.mrb[0].mxu0
        %v3421 = vpop.f32.mrb[0].mxu0
        %v3422 = vadd.f32 0.0, %v3421
        %v3423 = vpop.f32.mrb[0].mxu0
        %3424 = vmatprep.mubr.bf16.mxu0 0
        %3425 = vmatmul.mubr.bf16.gmra.mrb[0].mxu0 %v3275
        %v3426 = vpop.f32.mrb[0].mxu0
        %v3427 = vadd.f32 0.0, %v3426
        %v3428 = vpop.f32.mrb[0].mxu0
        %v3429 = vpop.f32.mrb[0].mxu0
        %v3430 = vadd.f32 0.0, %v3429
        %v3431 = vpop.f32.mrb[0].mxu0
        %3432 = vmatprep.mubr.bf16.mxu0 0
        %3433 = vmatmul.mubr.bf16.gmra.mrb[0].mxu0 %v3278
        %v3434 = vpop.f32.mrb[0].mxu0
        %v3435 = vadd.f32 0.0, %v3434
        %v3436 = vpop.f32.mrb[0].mxu0
        %v3437 = vpop.f32.mrb[0].mxu0
        %v3438 = vadd.f32 0.0, %v3437
        %v3439 = vpop.f32.mrb[0].mxu0
        %3440 = vdwg.mxu0
        %3441 = vmax.xlane.f32.xlu0 %v3315
        %v3442 = vpop.xlane.xlu0 %3441
        %3443 = vmax.xlane.f32.xlu0 %v3318
        %v3444 = vpop.xlane.xlu0 %3443
        %3445 = vmax.xlane.f32.xlu0 %v3323
        %v3446 = vpop.xlane.xlu0 %3445
        %3447 = vmax.xlane.f32.xlu0 %v3326
        %v3448 = vpop.xlane.xlu0 %3447
        %3449 = vmax.xlane.f32.xlu0 %v3331
        %v3450 = vpop.xlane.xlu0 %3449
        %3451 = vmax.xlane.f32.xlu0 %v3334
        %v3452 = vpop.xlane.xlu0 %3451
        %3453 = vmax.xlane.f32.xlu0 %v3339
        %v3454 = vpop.xlane.xlu0 %3453
        %3455 = vmax.xlane.f32.xlu0 %v3342
        %v3456 = vpop.xlane.xlu0 %3455
        %3457 = vmax.xlane.f32.xlu0 %v3347
        %v3458 = vpop.xlane.xlu0 %3457
        %3459 = vmax.xlane.f32.xlu0 %v3350
        %v3460 = vpop.xlane.xlu0 %3459
        %3461 = vmax.xlane.f32.xlu0 %v3355
        %v3462 = vpop.xlane.xlu0 %3461
        %3463 = vmax.xlane.f32.xlu0 %v3358
        %v3464 = vpop.xlane.xlu0 %3463
        %3465 = vmax.xlane.f32.xlu0 %v3363
        %v3466 = vpop.xlane.xlu0 %3465
        %3467 = vmax.xlane.f32.xlu0 %v3366
        %v3468 = vpop.xlane.xlu0 %3467
        %3469 = vmax.xlane.f32.xlu0 %v3371
        %v3470 = vpop.xlane.xlu0 %3469
        %3471 = vmax.xlane.f32.xlu0 %v3374
        %v3472 = vpop.xlane.xlu0 %3471
        %3473 = vmax.xlane.f32.xlu0 %v3379
        %v3474 = vpop.xlane.xlu0 %3473
        %3475 = vmax.xlane.f32.xlu0 %v3382
        %v3476 = vpop.xlane.xlu0 %3475
        %3477 = vmax.xlane.f32.xlu0 %v3387
        %v3478 = vpop.xlane.xlu0 %3477
        %3479 = vmax.xlane.f32.xlu0 %v3390
        %v3480 = vpop.xlane.xlu0 %3479
        %3481 = vmax.xlane.f32.xlu0 %v3395
        %v3482 = vpop.xlane.xlu0 %3481
        %3483 = vmax.xlane.f32.xlu0 %v3398
        %v3484 = vpop.xlane.xlu0 %3483
        %3485 = vmax.xlane.f32.xlu0 %v3403
        %v3486 = vpop.xlane.xlu0 %3485
        %3487 = vmax.xlane.f32.xlu0 %v3406
        %v3488 = vpop.xlane.xlu0 %3487
        %3489 = vmax.xlane.f32.xlu0 %v3411
        %v3490 = vpop.xlane.xlu0 %3489
        %3491 = vmax.xlane.f32.xlu0 %v3414
        %v3492 = vpop.xlane.xlu0 %3491
        %3493 = vmax.xlane.f32.xlu0 %v3419
        %v3494 = vpop.xlane.xlu0 %3493
        %3495 = vmax.xlane.f32.xlu0 %v3422
        %v3496 = vpop.xlane.xlu0 %3495
        %3497 = vmax.xlane.f32.xlu0 %v3427
        %v3498 = vpop.xlane.xlu0 %3497
        %3499 = vmax.xlane.f32.xlu0 %v3430
        %v3500 = vpop.xlane.xlu0 %3499
        %3501 = vmax.xlane.f32.xlu0 %v3435
        %v3502 = vpop.xlane.xlu0 %3501
        %3503 = vmax.xlane.f32.xlu0 %v3438
        %v3504 = vpop.xlane.xlu0 %3503
        %v3505 = vsub.f32 %v3315, %v3442
        %v3506 = vsub.f32 %v3318, %v3444
        %v3507 = vsub.f32 %v3323, %v3446
        %v3508 = vsub.f32 %v3326, %v3448
        %v3509 = vsub.f32 %v3331, %v3450
        %v3510 = vsub.f32 %v3334, %v3452
        %v3511 = vsub.f32 %v3339, %v3454
        %v3512 = vsub.f32 %v3342, %v3456
        %v3513 = vsub.f32 %v3347, %v3458
        %v3514 = vsub.f32 %v3350, %v3460
        %v3515 = vsub.f32 %v3355, %v3462
        %v3516 = vsub.f32 %v3358, %v3464
        %v3517 = vsub.f32 %v3363, %v3466
        %v3518 = vsub.f32 %v3366, %v3468
        %v3519 = vsub.f32 %v3371, %v3470
        %v3520 = vsub.f32 %v3374, %v3472
        %v3521 = vsub.f32 %v3379, %v3474
        %v3522 = vsub.f32 %v3382, %v3476
        %v3523 = vsub.f32 %v3387, %v3478
        %v3524 = vsub.f32 %v3390, %v3480
        %v3525 = vsub.f32 %v3395, %v3482
        %v3526 = vsub.f32 %v3398, %v3484
        %v3527 = vsub.f32 %v3403, %v3486
        %v3528 = vsub.f32 %v3406, %v3488
        %v3529 = vsub.f32 %v3411, %v3490
        %v3530 = vsub.f32 %v3414, %v3492
        %v3531 = vsub.f32 %v3419, %v3494
        %v3532 = vsub.f32 %v3422, %v3496
        %v3533 = vsub.f32 %v3427, %v3498
        %v3534 = vsub.f32 %v3430, %v3500
        %v3535 = vsub.f32 %v3435, %v3502
        %v3536 = vsub.f32 %v3438, %v3504
        %v3537 = vmul.f32 %v3505, 1.442695
        %v3538 = vpow.pop %v3537
        %v3539 = vmul.f32 %v3506, 1.442695
        %v3540 = vpow.pop %v3539
        %v3541 = vmul.f32 %v3507, 1.442695
        %v3542 = vpow.pop %v3541
        %v3543 = vmul.f32 %v3508, 1.442695
        %v3544 = vpow.pop %v3543
        %v3545 = vmul.f32 %v3509, 1.442695
        %v3546 = vpow.pop %v3545
        %v3547 = vmul.f32 %v3510, 1.442695
        %v3548 = vpow.pop %v3547
        %v3549 = vmul.f32 %v3511, 1.442695
        %v3550 = vpow.pop %v3549
        %v3551 = vmul.f32 %v3512, 1.442695
        %v3552 = vpow.pop %v3551
        %v3553 = vmul.f32 %v3513, 1.442695
        %v3554 = vpow.pop %v3553
        %v3555 = vmul.f32 %v3514, 1.442695
        %v3556 = vpow.pop %v3555
        %v3557 = vmul.f32 %v3515, 1.442695
        %v3558 = vpow.pop %v3557
        %v3559 = vmul.f32 %v3516, 1.442695
        %v3560 = vpow.pop %v3559
        %v3561 = vmul.f32 %v3517, 1.442695
        %v3562 = vpow.pop %v3561
        %v3563 = vmul.f32 %v3518, 1.442695
        %v3564 = vpow.pop %v3563
        %v3565 = vmul.f32 %v3519, 1.442695
        %v3566 = vpow.pop %v3565
        %v3567 = vmul.f32 %v3520, 1.442695
        %v3568 = vpow.pop %v3567
        %v3569 = vmul.f32 %v3521, 1.442695
        %v3570 = vpow.pop %v3569
        %v3571 = vmul.f32 %v3522, 1.442695
        %v3572 = vpow.pop %v3571
        %v3573 = vmul.f32 %v3523, 1.442695
        %v3574 = vpow.pop %v3573
        %v3575 = vmul.f32 %v3524, 1.442695
        %v3576 = vpow.pop %v3575
        %v3577 = vmul.f32 %v3525, 1.442695
        %v3578 = vpow.pop %v3577
        %v3579 = vmul.f32 %v3526, 1.442695
        %v3580 = vpow.pop %v3579
        %v3581 = vmul.f32 %v3527, 1.442695
        %v3582 = vpow.pop %v3581
        %v3583 = vmul.f32 %v3528, 1.442695
        %v3584 = vpow.pop %v3583
        %v3585 = vmul.f32 %v3529, 1.442695
        %v3586 = vpow.pop %v3585
        %v3587 = vmul.f32 %v3530, 1.442695
        %v3588 = vpow.pop %v3587
        %v3589 = vmul.f32 %v3531, 1.442695
        %v3590 = vpow.pop %v3589
        %v3591 = vmul.f32 %v3532, 1.442695
        %v3592 = vpow.pop %v3591
        %v3593 = vmul.f32 %v3533, 1.442695
        %v3594 = vpow.pop %v3593
        %v3595 = vmul.f32 %v3534, 1.442695
        %v3596 = vpow.pop %v3595
        %v3597 = vmul.f32 %v3535, 1.442695
        %v3598 = vpow.pop %v3597
        %v3599 = vmul.f32 %v3536, 1.442695
        %v3600 = vpow.pop %v3599
        %3601 = vadd.xlane.f32.xlu0 %v3538
        %v3602 = vpop.xlane.xlu0 %3601
        %3603 = vadd.xlane.f32.xlu0 %v3540
        %v3604 = vpop.xlane.xlu0 %3603
        %3605 = vadd.xlane.f32.xlu0 %v3542
        %v3606 = vpop.xlane.xlu0 %3605
        %3607 = vadd.xlane.f32.xlu0 %v3544
        %v3608 = vpop.xlane.xlu0 %3607
        %3609 = vadd.xlane.f32.xlu0 %v3546
        %v3610 = vpop.xlane.xlu0 %3609
        %3611 = vadd.xlane.f32.xlu0 %v3548
        %v3612 = vpop.xlane.xlu0 %3611
        %3613 = vadd.xlane.f32.xlu0 %v3550
        %v3614 = vpop.xlane.xlu0 %3613
        %3615 = vadd.xlane.f32.xlu0 %v3552
        %v3616 = vpop.xlane.xlu0 %3615
        %3617 = vadd.xlane.f32.xlu0 %v3554
        %v3618 = vpop.xlane.xlu0 %3617
        %3619 = vadd.xlane.f32.xlu0 %v3556
        %v3620 = vpop.xlane.xlu0 %3619
        %3621 = vadd.xlane.f32.xlu0 %v3558
        %v3622 = vpop.xlane.xlu0 %3621
        %3623 = vadd.xlane.f32.xlu0 %v3560
        %v3624 = vpop.xlane.xlu0 %3623
        %3625 = vadd.xlane.f32.xlu0 %v3562
        %v3626 = vpop.xlane.xlu0 %3625
        %3627 = vadd.xlane.f32.xlu0 %v3564
        %v3628 = vpop.xlane.xlu0 %3627
        %3629 = vadd.xlane.f32.xlu0 %v3566
        %v3630 = vpop.xlane.xlu0 %3629
        %3631 = vadd.xlane.f32.xlu0 %v3568
        %v3632 = vpop.xlane.xlu0 %3631
        %3633 = vadd.xlane.f32.xlu0 %v3570
        %v3634 = vpop.xlane.xlu0 %3633
        %3635 = vadd.xlane.f32.xlu0 %v3572
        %v3636 = vpop.xlane.xlu0 %3635
        %3637 = vadd.xlane.f32.xlu0 %v3574
        %v3638 = vpop.xlane.xlu0 %3637
        %3639 = vadd.xlane.f32.xlu0 %v3576
        %v3640 = vpop.xlane.xlu0 %3639
        %3641 = vadd.xlane.f32.xlu0 %v3578
        %v3642 = vpop.xlane.xlu0 %3641
        %3643 = vadd.xlane.f32.xlu0 %v3580
        %v3644 = vpop.xlane.xlu0 %3643
        %3645 = vadd.xlane.f32.xlu0 %v3582
        %v3646 = vpop.xlane.xlu0 %3645
        %3647 = vadd.xlane.f32.xlu0 %v3584
        %v3648 = vpop.xlane.xlu0 %3647
        %3649 = vadd.xlane.f32.xlu0 %v3586
        %v3650 = vpop.xlane.xlu0 %3649
        %3651 = vadd.xlane.f32.xlu0 %v3588
        %v3652 = vpop.xlane.xlu0 %3651
        %3653 = vadd.xlane.f32.xlu0 %v3590
        %v3654 = vpop.xlane.xlu0 %3653
        %3655 = vadd.xlane.f32.xlu0 %v3592
        %v3656 = vpop.xlane.xlu0 %3655
        %3657 = vadd.xlane.f32.xlu0 %v3594
        %v3658 = vpop.xlane.xlu0 %3657
        %3659 = vadd.xlane.f32.xlu0 %v3596
        %v3660 = vpop.xlane.xlu0 %3659
        %3661 = vadd.xlane.f32.xlu0 %v3598
        %v3662 = vpop.xlane.xlu0 %3661
        %3663 = vadd.xlane.f32.xlu0 %v3600
        %v3664 = vpop.xlane.xlu0 %3663
        %v3665 = vlog2.pop %v3602
        %v3666 = vmul.f32 %v3665, 0.6931472
        %v3667 = vlog2.pop %v3604
        %v3668 = vmul.f32 %v3667, 0.6931472
        %v3669 = vlog2.pop %v3606
        %v3670 = vmul.f32 %v3669, 0.6931472
        %v3671 = vlog2.pop %v3608
        %v3672 = vmul.f32 %v3671, 0.6931472
        %v3673 = vlog2.pop %v3610
        %v3674 = vmul.f32 %v3673, 0.6931472
        %v3675 = vlog2.pop %v3612
        %v3676 = vmul.f32 %v3675, 0.6931472
        %v3677 = vlog2.pop %v3614
        %v3678 = vmul.f32 %v3677, 0.6931472
        %v3679 = vlog2.pop %v3616
        %v3680 = vmul.f32 %v3679, 0.6931472
        %v3681 = vlog2.pop %v3618
        %v3682 = vmul.f32 %v3681, 0.6931472
        %v3683 = vlog2.pop %v3620
        %v3684 = vmul.f32 %v3683, 0.6931472
        %v3685 = vlog2.pop %v3622
        %v3686 = vmul.f32 %v3685, 0.6931472
        %v3687 = vlog2.pop %v3624
        %v3688 = vmul.f32 %v3687, 0.6931472
        %v3689 = vlog2.pop %v3626
        %v3690 = vmul.f32 %v3689, 0.6931472
        %v3691 = vlog2.pop %v3628
        %v3692 = vmul.f32 %v3691, 0.6931472
        %v3693 = vlog2.pop %v3630
        %v3694 = vmul.f32 %v3693, 0.6931472
        %v3695 = vlog2.pop %v3632
        %v3696 = vmul.f32 %v3695, 0.6931472
        %v3697 = vlog2.pop %v3634
        %v3698 = vmul.f32 %v3697, 0.6931472
        %v3699 = vlog2.pop %v3636
        %v3700 = vmul.f32 %v3699, 0.6931472
        %v3701 = vlog2.pop %v3638
        %v3702 = vmul.f32 %v3701, 0.6931472
        %v3703 = vlog2.pop %v3640
        %v3704 = vmul.f32 %v3703, 0.6931472
        %v3705 = vlog2.pop %v3642
        %v3706 = vmul.f32 %v3705, 0.6931472
        %v3707 = vlog2.pop %v3644
        %v3708 = vmul.f32 %v3707, 0.6931472
        %v3709 = vlog2.pop %v3646
        %v3710 = vmul.f32 %v3709, 0.6931472
        %v3711 = vlog2.pop %v3648
        %v3712 = vmul.f32 %v3711, 0.6931472
        %v3713 = vlog2.pop %v3650
        %v3714 = vmul.f32 %v3713, 0.6931472
        %v3715 = vlog2.pop %v3652
        %v3716 = vmul.f32 %v3715, 0.6931472
        %v3717 = vlog2.pop %v3654
        %v3718 = vmul.f32 %v3717, 0.6931472
        %v3719 = vlog2.pop %v3656
        %v3720 = vmul.f32 %v3719, 0.6931472
        %v3721 = vlog2.pop %v3658
        %v3722 = vmul.f32 %v3721, 0.6931472
        %v3723 = vlog2.pop %v3660
        %v3724 = vmul.f32 %v3723, 0.6931472
        %v3725 = vlog2.pop %v3662
        %v3726 = vmul.f32 %v3725, 0.6931472
        %v3727 = vlog2.pop %v3664
        %v3728 = vmul.f32 %v3727, 0.6931472
        %v3729 = vld [vmem:[%s405] sm:$0xff]
        %v3730 = vld [vmem:[%s405 + $0x8] sm:$0xff]
        %v3731 = vld [vmem:[%s405 + $0x10] sm:$0xff]
        %v3732 = vld [vmem:[%s405 + $0x18] sm:$0xff]
        %v3733 = vld [vmem:[%s405 + $0x20] sm:$0xff]
        %v3734 = vld [vmem:[%s405 + $0x28] sm:$0xff]
        %v3735 = vld [vmem:[%s405 + $0x30] sm:$0xff]
        %v3736 = vld [vmem:[%s405 + $0x38] sm:$0xff]
        %v3737 = vld [vmem:[%s405 + $0x40] sm:$0xff]
        %v3738 = vld [vmem:[%s405 + $0x48] sm:$0xff]
        %v3739 = vld [vmem:[%s405 + $0x50] sm:$0xff]
        %v3740 = vld [vmem:[%s405 + $0x58] sm:$0xff]
        %v3741 = vld [vmem:[%s405 + $0x60] sm:$0xff]
        %v3742 = vld [vmem:[%s405 + $0x68] sm:$0xff]
        %v3743 = vld [vmem:[%s405 + $0x70] sm:$0xff]
        %v3744 = vld [vmem:[%s405 + $0x78] sm:$0xff]
        %v3745 = vld [vmem:[%s405 + $0x80] sm:$0xff]
        %v3746 = vld [vmem:[%s405 + $0x88] sm:$0xff]
        %v3747 = vld [vmem:[%s405 + $0x90] sm:$0xff]
        %v3748 = vld [vmem:[%s405 + $0x98] sm:$0xff]
        %v3749 = vld [vmem:[%s405 + $0xa0] sm:$0xff]
        %v3750 = vld [vmem:[%s405 + $0xa8] sm:$0xff]
        %v3751 = vld [vmem:[%s405 + $0xb0] sm:$0xff]
        %v3752 = vld [vmem:[%s405 + $0xb8] sm:$0xff]
        %v3753 = vld [vmem:[%s405 + $0xc0] sm:$0xff]
        %v3754 = vld [vmem:[%s405 + $0xc8] sm:$0xff]
        %v3755 = vld [vmem:[%s405 + $0xd0] sm:$0xff]
        %v3756 = vld [vmem:[%s405 + $0xd8] sm:$0xff]
        %v3757 = vld [vmem:[%s405 + $0xe0] sm:$0xff]
        %v3758 = vld [vmem:[%s405 + $0xe8] sm:$0xff]
        %v3759 = vld [vmem:[%s405 + $0xf0] sm:$0xff]
        %v3760 = vld [vmem:[%s405 + $0xf8] sm:$0xff]
        %v3761 = vmul.f32 %v3729, 0.47368422
        %v3762 = vmul.f32 %v3730, 0.47368422
        %v3763 = vmul.f32 %v3731, 0.47368422
        %v3764 = vmul.f32 %v3732, 0.47368422
        %v3765 = vmul.f32 %v3733, 0.47368422
        %v3766 = vmul.f32 %v3734, 0.47368422
        %v3767 = vmul.f32 %v3735, 0.47368422
        %v3768 = vmul.f32 %v3736, 0.47368422
        %v3769 = vmul.f32 %v3737, 0.47368422
        %v3770 = vmul.f32 %v3738, 0.47368422
        %v3771 = vmul.f32 %v3739, 0.47368422
        %v3772 = vmul.f32 %v3740, 0.47368422
        %v3773 = vmul.f32 %v3741, 0.47368422
        %v3774 = vmul.f32 %v3742, 0.47368422
        %v3775 = vmul.f32 %v3743, 0.47368422
        %v3776 = vmul.f32 %v3744, 0.47368422
        %v3777 = vmul.f32 %v3745, 0.47368422
        %v3778 = vmul.f32 %v3746, 0.47368422
        %v3779 = vmul.f32 %v3747, 0.47368422
        %v3780 = vmul.f32 %v3748, 0.47368422
        %v3781 = vmul.f32 %v3749, 0.47368422
        %v3782 = vmul.f32 %v3750, 0.47368422
        %v3783 = vmul.f32 %v3751, 0.47368422
        %v3784 = vmul.f32 %v3752, 0.47368422
        %v3785 = vmul.f32 %v3753, 0.47368422
        %v3786 = vmul.f32 %v3754, 0.47368422
        %v3787 = vmul.f32 %v3755, 0.47368422
        %v3788 = vmul.f32 %v3756, 0.47368422
        %v3789 = vmul.f32 %v3757, 0.47368422
        %v3790 = vmul.f32 %v3758, 0.47368422
        %v3791 = vmul.f32 %v3759, 0.47368422
        %v3792 = vmul.f32 %v3760, 0.47368422
        %v3793 = vadd.f32 %v3761, 0.0041118423
        %v3794 = vadd.f32 %v3762, 0.0041118423
        %v3795 = vadd.f32 %v3763, 0.0041118423
        %v3796 = vadd.f32 %v3764, 0.0041118423
        %v3797 = vadd.f32 %v3765, 0.0041118423
        %v3798 = vadd.f32 %v3766, 0.0041118423
        %v3799 = vadd.f32 %v3767, 0.0041118423
        %v3800 = vadd.f32 %v3768, 0.0041118423
        %v3801 = vadd.f32 %v3769, 0.0041118423
        %v3802 = vadd.f32 %v3770, 0.0041118423
        %v3803 = vadd.f32 %v3771, 0.0041118423
        %v3804 = vadd.f32 %v3772, 0.0041118423
        %v3805 = vadd.f32 %v3773, 0.0041118423
        %v3806 = vadd.f32 %v3774, 0.0041118423
        %v3807 = vadd.f32 %v3775, 0.0041118423
        %v3808 = vadd.f32 %v3776, 0.0041118423
        %v3809 = vadd.f32 %v3777, 0.0041118423
        %v3810 = vadd.f32 %v3778, 0.0041118423
        %v3811 = vadd.f32 %v3779, 0.0041118423
        %v3812 = vadd.f32 %v3780, 0.0041118423
        %v3813 = vadd.f32 %v3781, 0.0041118423
        %v3814 = vadd.f32 %v3782, 0.0041118423
        %v3815 = vadd.f32 %v3783, 0.0041118423
        %v3816 = vadd.f32 %v3784, 0.0041118423
        %v3817 = vadd.f32 %v3785, 0.0041118423
        %v3818 = vadd.f32 %v3786, 0.0041118423
        %v3819 = vadd.f32 %v3787, 0.0041118423
        %v3820 = vadd.f32 %v3788, 0.0041118423
        %v3821 = vadd.f32 %v3789, 0.0041118423
        %v3822 = vadd.f32 %v3790, 0.0041118423
        %v3823 = vadd.f32 %v3791, 0.0041118423
        %v3824 = vadd.f32 %v3792, 0.0041118423
        %v3825 = vmul.f32 %v3793, %v3505
        %v3826 = vmul.f32 %v3794, %v3506
        %v3827 = vmul.f32 %v3795, %v3507
        %v3828 = vmul.f32 %v3796, %v3508
        %v3829 = vmul.f32 %v3797, %v3509
        %v3830 = vmul.f32 %v3798, %v3510
        %v3831 = vmul.f32 %v3799, %v3511
        %v3832 = vmul.f32 %v3800, %v3512
        %v3833 = vmul.f32 %v3801, %v3513
        %v3834 = vmul.f32 %v3802, %v3514
        %v3835 = vmul.f32 %v3803, %v3515
        %v3836 = vmul.f32 %v3804, %v3516
        %v3837 = vmul.f32 %v3805, %v3517
        %v3838 = vmul.f32 %v3806, %v3518
        %v3839 = vmul.f32 %v3807, %v3519
        %v3840 = vmul.f32 %v3808, %v3520
        %v3841 = vmul.f32 %v3809, %v3521
        %v3842 = vmul.f32 %v3810, %v3522
        %v3843 = vmul.f32 %v3811, %v3523
        %v3844 = vmul.f32 %v3812, %v3524
        %v3845 = vmul.f32 %v3813, %v3525
        %v3846 = vmul.f32 %v3814, %v3526
        %v3847 = vmul.f32 %v3815, %v3527
        %v3848 = vmul.f32 %v3816, %v3528
        %v3849 = vmul.f32 %v3817, %v3529
        %v3850 = vmul.f32 %v3818, %v3530
        %v3851 = vmul.f32 %v3819, %v3531
        %v3852 = vmul.f32 %v3820, %v3532
        %v3853 = vmul.f32 %v3821, %v3533
        %v3854 = vmul.f32 %v3822, %v3534
        %v3855 = vmul.f32 %v3823, %v3535
        %v3856 = vmul.f32 %v3824, %v3536
        %3857 = vadd.xlane.f32.xlu0 %v3825
        %v3858 = vpop.xlane.xlu0 %3857
        %3859 = vadd.xlane.f32.xlu0 %v3826
        %v3860 = vpop.xlane.xlu0 %3859
        %3861 = vadd.xlane.f32.xlu0 %v3827
        %v3862 = vpop.xlane.xlu0 %3861
        %3863 = vadd.xlane.f32.xlu0 %v3828
        %v3864 = vpop.xlane.xlu0 %3863
        %3865 = vadd.xlane.f32.xlu0 %v3829
        %v3866 = vpop.xlane.xlu0 %3865
        %3867 = vadd.xlane.f32.xlu0 %v3830
        %v3868 = vpop.xlane.xlu0 %3867
        %3869 = vadd.xlane.f32.xlu0 %v3831
        %v3870 = vpop.xlane.xlu0 %3869
        %3871 = vadd.xlane.f32.xlu0 %v3832
        %v3872 = vpop.xlane.xlu0 %3871
        %3873 = vadd.xlane.f32.xlu0 %v3833
        %v3874 = vpop.xlane.xlu0 %3873
        %3875 = vadd.xlane.f32.xlu0 %v3834
        %v3876 = vpop.xlane.xlu0 %3875
        %3877 = vadd.xlane.f32.xlu0 %v3835
        %v3878 = vpop.xlane.xlu0 %3877
        %3879 = vadd.xlane.f32.xlu0 %v3836
        %v3880 = vpop.xlane.xlu0 %3879
        %3881 = vadd.xlane.f32.xlu0 %v3837
        %v3882 = vpop.xlane.xlu0 %3881
        %3883 = vadd.xlane.f32.xlu0 %v3838
        %v3884 = vpop.xlane.xlu0 %3883
        %3885 = vadd.xlane.f32.xlu0 %v3839
        %v3886 = vpop.xlane.xlu0 %3885
        %3887 = vadd.xlane.f32.xlu0 %v3840
        %v3888 = vpop.xlane.xlu0 %3887
        %3889 = vadd.xlane.f32.xlu0 %v3841
        %v3890 = vpop.xlane.xlu0 %3889
        %3891 = vadd.xlane.f32.xlu0 %v3842
        %v3892 = vpop.xlane.xlu0 %3891
        %3893 = vadd.xlane.f32.xlu0 %v3843
        %v3894 = vpop.xlane.xlu0 %3893
        %3895 = vadd.xlane.f32.xlu0 %v3844
        %v3896 = vpop.xlane.xlu0 %3895
        %3897 = vadd.xlane.f32.xlu0 %v3845
        %v3898 = vpop.xlane.xlu0 %3897
        %3899 = vadd.xlane.f32.xlu0 %v3846
        %v3900 = vpop.xlane.xlu0 %3899
        %3901 = vadd.xlane.f32.xlu0 %v3847
        %v3902 = vpop.xlane.xlu0 %3901
        %3903 = vadd.xlane.f32.xlu0 %v3848
        %v3904 = vpop.xlane.xlu0 %3903
        %3905 = vadd.xlane.f32.xlu0 %v3849
        %v3906 = vpop.xlane.xlu0 %3905
        %3907 = vadd.xlane.f32.xlu0 %v3850
        %v3908 = vpop.xlane.xlu0 %3907
        %3909 = vadd.xlane.f32.xlu0 %v3851
        %v3910 = vpop.xlane.xlu0 %3909
        %3911 = vadd.xlane.f32.xlu0 %v3852
        %v3912 = vpop.xlane.xlu0 %3911
        %3913 = vadd.xlane.f32.xlu0 %v3853
        %v3914 = vpop.xlane.xlu0 %3913
        %3915 = vadd.xlane.f32.xlu0 %v3854
        %v3916 = vpop.xlane.xlu0 %3915
        %3917 = vadd.xlane.f32.xlu0 %v3855
        %v3918 = vpop.xlane.xlu0 %3917
        %3919 = vadd.xlane.f32.xlu0 %v3856
        %v3920 = vpop.xlane.xlu0 %3919
        %v3921 = vsub.f32 %v3666, %v3858
        %v3922 = vsub.f32 %v3668, %v3860
        %v3923 = vsub.f32 %v3670, %v3862
        %v3924 = vsub.f32 %v3672, %v3864
        %v3925 = vsub.f32 %v3674, %v3866
        %v3926 = vsub.f32 %v3676, %v3868
        %v3927 = vsub.f32 %v3678, %v3870
        %v3928 = vsub.f32 %v3680, %v3872
        %v3929 = vsub.f32 %v3682, %v3874
        %v3930 = vsub.f32 %v3684, %v3876
        %v3931 = vsub.f32 %v3686, %v3878
        %v3932 = vsub.f32 %v3688, %v3880
        %v3933 = vsub.f32 %v3690, %v3882
        %v3934 = vsub.f32 %v3692, %v3884
        %v3935 = vsub.f32 %v3694, %v3886
        %v3936 = vsub.f32 %v3696, %v3888
        %v3937 = vsub.f32 %v3698, %v3890
        %v3938 = vsub.f32 %v3700, %v3892
        %v3939 = vsub.f32 %v3702, %v3894
        %v3940 = vsub.f32 %v3704, %v3896
        %v3941 = vsub.f32 %v3706, %v3898
        %v3942 = vsub.f32 %v3708, %v3900
        %v3943 = vsub.f32 %v3710, %v3902
        %v3944 = vsub.f32 %v3712, %v3904
        %v3945 = vsub.f32 %v3714, %v3906
        %v3946 = vsub.f32 %v3716, %v3908
        %v3947 = vsub.f32 %v3718, %v3910
        %v3948 = vsub.f32 %v3720, %v3912
        %v3949 = vsub.f32 %v3722, %v3914
        %v3950 = vsub.f32 %v3724, %v3916
        %v3951 = vsub.f32 %v3726, %v3918
        %v3952 = vsub.f32 %v3728, %v3920
        %vm3953 = vcmask 7168
        %3954 = vst.msk [vmem:[%s411] sm:$0xff] %vm3953, %v3921
        %3955 = vst.msk [vmem:[%s411 + $0x8] sm:$0xff] %vm3953, %v3922
        %3956 = vst.msk [vmem:[%s411 + $0x10] sm:$0xff] %vm3953, %v3923
        %3957 = vst.msk [vmem:[%s411 + $0x18] sm:$0xff] %vm3953, %v3924
        %3958 = vst.msk [vmem:[%s411 + $0x20] sm:$0xff] %vm3953, %v3925
        %3959 = vst.msk [vmem:[%s411 + $0x28] sm:$0xff] %vm3953, %v3926
        %3960 = vst.msk [vmem:[%s411 + $0x30] sm:$0xff] %vm3953, %v3927
        %3961 = vst.msk [vmem:[%s411 + $0x38] sm:$0xff] %vm3953, %v3928
        %3962 = vst.msk [vmem:[%s411 + $0x40] sm:$0xff] %vm3953, %v3929
        %3963 = vst.msk [vmem:[%s411 + $0x48] sm:$0xff] %vm3953, %v3930
        %3964 = vst.msk [vmem:[%s411 + $0x50] sm:$0xff] %vm3953, %v3931
        %3965 = vst.msk [vmem:[%s411 + $0x58] sm:$0xff] %vm3953, %v3932
        %3966 = vst.msk [vmem:[%s411 + $0x60] sm:$0xff] %vm3953, %v3933
        %3967 = vst.msk [vmem:[%s411 + $0x68] sm:$0xff] %vm3953, %v3934
        %3968 = vst.msk [vmem:[%s411 + $0x70] sm:$0xff] %vm3953, %v3935
        %3969 = vst.msk [vmem:[%s411 + $0x78] sm:$0xff] %vm3953, %v3936
        %3970 = vst.msk [vmem:[%s411 + $0x80] sm:$0xff] %vm3953, %v3937
        %3971 = vst.msk [vmem:[%s411 + $0x88] sm:$0xff] %vm3953, %v3938
        %3972 = vst.msk [vmem:[%s411 + $0x90] sm:$0xff] %vm3953, %v3939
        %3973 = vst.msk [vmem:[%s411 + $0x98] sm:$0xff] %vm3953, %v3940
        %3974 = vst.msk [vmem:[%s411 + $0xa0] sm:$0xff] %vm3953, %v3941
        %3975 = vst.msk [vmem:[%s411 + $0xa8] sm:$0xff] %vm3953, %v3942
        %3976 = vst.msk [vmem:[%s411 + $0xb0] sm:$0xff] %vm3953, %v3943
        %3977 = vst.msk [vmem:[%s411 + $0xb8] sm:$0xff] %vm3953, %v3944
        %3978 = vst.msk [vmem:[%s411 + $0xc0] sm:$0xff] %vm3953, %v3945
        %3979 = vst.msk [vmem:[%s411 + $0xc8] sm:$0xff] %vm3953, %v3946
        %3980 = vst.msk [vmem:[%s411 + $0xd0] sm:$0xff] %vm3953, %v3947
        %3981 = vst.msk [vmem:[%s411 + $0xd8] sm:$0xff] %vm3953, %v3948
        %3982 = vst.msk [vmem:[%s411 + $0xe0] sm:$0xff] %vm3953, %v3949
        %3983 = vst.msk [vmem:[%s411 + $0xe8] sm:$0xff] %vm3953, %v3950
        %3984 = vst.msk [vmem:[%s411 + $0xf0] sm:$0xff] %vm3953, %v3951
        %3985 = vst.msk [vmem:[%s411 + $0xf8] sm:$0xff] %vm3953, %v3952
        %s3986 = smul.u32 32, %s22
        %p3987 = scmp.lt.s32.totalorder %s3986, 63
        %s3988 = scalar_select %p3987, %s3986, 63
        %s3989 = smul.addr %s3988, 8
        %s3990 = scalar_lea.vmem %s9, %s3989
        // Predicated region
        $region65: #{kgqa_forward.1} parent=55 // pred_check
          %p3991 = pneg %p244
        $region66: #{kgqa_forward.1} parent=55 // pred_check_branch
          %3993 = sbr.rel (%p3991) target = $region68
        $region67: #{kgqa_forward.1} parent=55 // pred_region
          %s3994 = smul.u32 32, %s22
        $region68: #{kgqa_forward.1} parent=55 // pred_fallthru
          _
      $region56: #{kgqa_forward.1} parent=5 // pred_fallthru
        _
      %p3995 = scmp.le.s32.totalorder 2, %s17
      // Predicated region
      $region69: #{kgqa_forward.1} parent=5 // pred_check
        %p3996 = pneg %p3995
      $region70: #{kgqa_forward.1} parent=5 // pred_check_branch
        %3998 = sbr.rel (%p3996) target = $region72
      $region71: #{kgqa_forward.1} parent=5 // pred_region
        %s3999 = ssub.s32 %s17, 2
        // Predicated region
        $region73: #{kgqa_forward.1} parent=71 // pred_check
          %p4000 = pneg %p250
        $region74: #{kgqa_forward.1} parent=71 // pred_check_branch
          %4002 = sbr.rel (%p4000) target = $region76
        $region75: #{kgqa_forward.1} parent=71 // pred_region
          %s4003 = smul.u32 32, %s23
          %p4004 = scmp.lt.s32.totalorder %s4003, 63
          %s4005 = scalar_select %p4004, %s4003, 63
          %s4006 = smul.addr %s4005, 8
          %s4007 = scalar_lea.vmem %s9, %s4006
        $region76: #{kgqa_forward.1} parent=71 // pred_fallthru
          _
      $region72: #{kgqa_forward.1} parent=5 // pred_fallthru
        _
    $region6: #{kgqa_forward.1} parent=1 // loop_footer
      %s21 = sadd.s32 1, %s17
    $region7: #{kgqa_forward.1} parent=1 // loop_footer_branch
      %16 = sbr.rel target = $region3
    $region8: #{kgqa_forward.1} parent=1 // loop_exit
      _
    %4008 = vsyncpa [#allocation3], 1
    %s4009 = scalar_lea.sflag [#allocation3], 1
    %4010 = vsyncpa %s4009, 1
    %4011 = vsyncpa [#allocation5], 1

</llo_original>
